<compile_context>
chip_gen: v6e
topology: v6e:2x2x1
jax: 0.10.0
libtpu: 0.0.40
codegen_flags: <defaults>
</compile_context>

<pallas_src>
import math
import functools

import jax
import jax.numpy as jnp
from jax.experimental import pallas as pl
from jax.experimental.pallas import tpu as pltpu


VMEM_LIMIT = 32 * 1024 * 1024  # safe on v5e/v6e/v7x


# ----------------------------- in-kernel helpers -----------------------------

def _gelu(x):
    c = jnp.float32(math.sqrt(2.0 / math.pi))
    return 0.5 * x * (1.0 + jnp.tanh(c * (x + 0.044715 * x * x * x)))


def _layernorm(x, g, b, eps=1e-5):
    mu = jnp.mean(x, axis=-1, keepdims=True)
    xc = x - mu
    var = jnp.mean(xc * xc, axis=-1, keepdims=True)
    return xc * jax.lax.rsqrt(var + eps) * g + b


def _choose_tile(n, target=512):
    """Largest row tile <= target that is a multiple of 8 and divides n (or n itself)."""
    if n <= target:
        return n
    t = (target // 8) * 8
    while t >= 8:
        if n % t == 0:
            return t
        t -= 8
    return n


# --------------------------------- kernels -----------------------------------

def make_mha_kernel(n_head, d_head):
    scale = 1.0 / math.sqrt(d_head)

    def mha_kernel(e_ref, km_ref, m_ref, wqkv_ref, bqkv_ref, wo_ref, bo_ref, o_ref):
        x = e_ref[0]                                    # (L, D)
        L, Dm = x.shape

        # fused QKV projection; fold the softmax scale into q
        qkv = jnp.dot(x, wqkv_ref[...], preferred_element_type=jnp.float32) + bqkv_ref[...]
        q = qkv[:, :Dm] * jnp.float32(scale)
        k = qkv[:, Dm:2 * Dm]
        v = qkv[:, 2 * Dm:]

        # batched per-head contraction (no python head loop, no concatenate)
        qh = jnp.transpose(q.reshape(L, n_head, d_head), (1, 0, 2))   # (H, L, dh)
        kh = jnp.transpose(k.reshape(L, n_head, d_head), (1, 0, 2))
        vh = jnp.transpose(v.reshape(L, n_head, d_head), (1, 0, 2))

        s = jnp.einsum('hqd,hkd->hqk', qh, kh, preferred_element_type=jnp.float32)

        row = jax.lax.broadcasted_iota(jnp.int32, (L, L), 0)
        col = jax.lax.broadcasted_iota(jnp.int32, (L, L), 1)
        valid = jnp.logical_and(col <= row, km_ref[0] > 0.5)          # causal + key pad
        s = jnp.where(valid[None], s, jnp.float32(-1e9))

        s = s - jnp.max(s, axis=-1, keepdims=True)
        p = jnp.exp(s)
        p = p * pl.reciprocal(jnp.sum(p, axis=-1, keepdims=True), approx=True)

        ctx = jnp.einsum('hqk,hkd->hqd', p, vh, preferred_element_type=jnp.float32)
        ctx = jnp.transpose(ctx, (1, 0, 2)).reshape(L, Dm)

        out = jnp.dot(ctx, wo_ref[...], preferred_element_type=jnp.float32) + bo_ref[...]
        o_ref[0] = (out + x) * m_ref[0]                 # residual + pad-mask

    return mha_kernel


def post_sa_kernel(x_ref, m_ref, w1_ref, b1_ref, w2_ref, b2_ref,
                   lw_ref, g_ref, be_ref, o_ref):
    """o = LayerNorm(x + FFN(x) + x@dloraW) * mask   (v=0 post-attention block)."""
    x = x_ref[0]                                        # (TM, D)
    h = _gelu(jnp.dot(x, w1_ref[...], preferred_element_type=jnp.float32) + b1_ref[...])
    ffn = jnp.dot(h, w2_ref[...], preferred_element_type=jnp.float32) + b2_ref[...]
    lo = jnp.dot(x, lw_ref[0], preferred_element_type=jnp.float32)
    o_ref[0] = _layernorm(x + ffn + lo, g_ref[0], be_ref[0]) * m_ref[0]


def combine_kernel(hx_ref, ha_ref, hb_ref, mga_ref, mgb_ref,
                   pw1_ref, pb1_ref, pw2_ref, pb2_ref,
                   ilw_ref, lng_ref, lnb_ref, o_ref):
    """Fused v=0 tail:
       p_i   = proj_i(hx)
       h_i2a = LN((hx + p_i + hx@ilora_a) * mga)   h_a2a = LN((ha + proj_a(ha)) * mga)
       h_i2b = LN((hx + p_i + hx@ilora_b) * mgb)   h_b2b = LN((hb + proj_b(hb)) * mgb)
       o     = (h_i2a + h_a2a) * mga + (h_i2b + h_b2b) * mgb
    """
    hx = hx_ref[...]
    ha = ha_ref[...]
    hb = hb_ref[...]
    mga = mga_ref[...]
    mgb = mgb_ref[...]

    def ffn(x, idx):
        h = _gelu(jnp.dot(x, pw1_ref[idx], preferred_element_type=jnp.float32) + pb1_ref[idx])
        return jnp.dot(h, pw2_ref[idx], preferred_element_type=jnp.float32) + pb2_ref[idx]

    p_i = ffn(hx, 0)
    pa = ffn(ha, 1)
    pb = ffn(hb, 2)

    il_a = jnp.dot(hx, ilw_ref[0], preferred_element_type=jnp.float32)
    il_b = jnp.dot(hx, ilw_ref[1], preferred_element_type=jnp.float32)

    h_i2a = _layernorm((hx + p_i + il_a) * mga, lng_ref[0], lnb_ref[0])
    h_a2a = _layernorm((ha + pa) * mga,         lng_ref[1], lnb_ref[1])
    h_i2b = _layernorm((hx + p_i + il_b) * mgb, lng_ref[2], lnb_ref[2])
    h_b2b = _layernorm((hb + pb) * mgb,         lng_ref[3], lnb_ref[3])

    o_ref[...] = (h_i2a + h_a2a) * mga + (h_i2b + h_b2b) * mgb


# -------------------------------- wrappers ------------------------------------

def mha_forward_batched(e_all, km_all, m_all, mha_params, n_head):
    """Shared MHA over a grid of sequences (3 domains x B batch), weights resident."""
    G, L, D = e_all.shape
    d_head = D // n_head
    wqkv, bqkv, wo, bo = mha_params
    seqmap = lambda i: (i, 0, 0)
    wmap = lambda i: (0, 0)
    return pl.pallas_call(
        make_mha_kernel(n_head, d_head),
        out_shape=jax.ShapeDtypeStruct((G, L, D), jnp.float32),
        grid=(G,),
        in_specs=[
            pl.BlockSpec((1, L, D), seqmap),
            pl.BlockSpec((1, 1, L), seqmap),
            pl.BlockSpec((1, L, 1), seqmap),
            pl.BlockSpec((D, 3 * D), wmap), pl.BlockSpec((1, 3 * D), wmap),
            pl.BlockSpec((D, D), wmap), pl.BlockSpec((1, D), wmap),
        ],
        out_specs=pl.BlockSpec((1, L, D), seqmap),
        compiler_params=pltpu.CompilerParams(
            dimension_semantics=("parallel",),
            vmem_limit_bytes=VMEM_LIMIT),
    )(e_all, km_all, m_all, wqkv, bqkv, wo, bo)


def post_sa_batched(h_all, m_all, ffn_p, dlw, g_all, be_all):
    """Domain-batched, row-tiled post-attention block. h_all: (3, N, D)."""
    _, N, D = h_all.shape
    TM = _choose_tile(N)
    NT = N // TM
    w1, b1, w2, b2 = ffn_p
    dom_row = lambda d, i: (d, i, 0)
    dom_only = lambda d, i: (d, 0, 0)
    const2 = lambda d, i: (0, 0)
    return pl.pallas_call(
        post_sa_kernel,
        out_shape=jax.ShapeDtypeStruct((3, N, D), jnp.float32),
        grid=(3, NT),
        in_specs=[
            pl.BlockSpec((1, TM, D), dom_row),
            pl.BlockSpec((1, TM, 1), dom_row),
            pl.BlockSpec((D, D), const2), pl.BlockSpec((1, D), const2),
            pl.BlockSpec((D, D), const2), pl.BlockSpec((1, D), const2),
            pl.BlockSpec((1, D, D), dom_only),
            pl.BlockSpec((1, 1, D), dom_only),
            pl.BlockSpec((1, 1, D), dom_only),
        ],
        out_specs=pl.BlockSpec((1, TM, D), dom_row),
        compiler_params=pltpu.CompilerParams(
            dimension_semantics=("parallel", "parallel"),
            vmem_limit_bytes=VMEM_LIMIT),
    )(h_all, m_all, w1, b1, w2, b2, dlw, g_all, be_all)


def combine_fused(hx, ha, hb, mga, mgb, pw1, pb1, pw2, pb2, ilw, lng, lnb):
    """Fused proj_i / i2x / x2x / mask-combine tail, row-tiled."""
    N, D = hx.shape
    TM = _choose_tile(N)
    NT = N // TM
    row = lambda i: (i, 0)
    c3 = lambda i: (0, 0, 0)
    return pl.pallas_call(
        combine_kernel,
        out_shape=jax.ShapeDtypeStruct((N, D), jnp.float32),
        grid=(NT,),
        in_specs=[
            pl.BlockSpec((TM, D), row), pl.BlockSpec((TM, D), row), pl.BlockSpec((TM, D), row),
            pl.BlockSpec((TM, 1), row), pl.BlockSpec((TM, 1), row),
            pl.BlockSpec((3, D, D), c3), pl.BlockSpec((3, 1, D), c3),
            pl.BlockSpec((3, D, D), c3), pl.BlockSpec((3, 1, D), c3),
            pl.BlockSpec((2, D, D), c3),
            pl.BlockSpec((4, 1, D), c3), pl.BlockSpec((4, 1, D), c3),
        ],
        out_specs=pl.BlockSpec((TM, D), row),
        compiler_params=pltpu.CompilerParams(
            dimension_semantics=("parallel",),
            vmem_limit_bytes=VMEM_LIMIT),
    )(hx, ha, hb, mga, mgb, pw1, pb1, pw2, pb2, ilw, lng, lnb)


# ------------------------------ parameter init --------------------------------

def init_params(key, n_item, len_trim, d_embed, rd, ri):
    keys = iter(jax.random.split(key, 64))

    def nrm(shape, s=0.02):
        return jax.random.normal(next(keys), shape, jnp.float32) * s

    def ffn_p():
        return (nrm((d_embed, d_embed)), jnp.zeros((1, d_embed), jnp.float32),
                nrm((d_embed, d_embed)), jnp.zeros((1, d_embed), jnp.float32))

    def lora_p(r):
        return (nrm((d_embed, r)), nrm((r, d_embed)))

    def ln_p():
        return (jnp.ones((1, d_embed), jnp.float32), jnp.zeros((1, d_embed), jnp.float32))

    return dict(
        ei=nrm((n_item + 1, d_embed)).at[0].set(0.0),      # padding_idx=0
        ep=nrm((len_trim + 1, d_embed)).at[0].set(0.0),    # padding_idx=0
        # fused QKV projection + output projection
        mha=(nrm((d_embed, 3 * d_embed)), jnp.zeros((1, 3 * d_embed), jnp.float32),
             nrm((d_embed, d_embed)), jnp.zeros((1, d_embed), jnp.float32)),
        ffn=ffn_p(),
        dlora_x=lora_p(rd), dlora_a=lora_p(rd), dlora_b=lora_p(rd),
        ilora_a=lora_p(ri), ilora_b=lora_p(ri),
        proj_i=ffn_p(), proj_a=ffn_p(), proj_b=ffn_p(),
        norm_sa_x=ln_p(), norm_sa_a=ln_p(), norm_sa_b=ln_p(),
        norm_i2a=ln_p(), norm_i2b=ln_p(), norm_a2a=ln_p(), norm_b2b=ln_p(),
    )


# --------------------------------- forward ------------------------------------

@functools.partial(jax.jit, static_argnames=("n_head",))
def abxi_forward(params, seq_x, seq_a, seq_b, pos_x, pos_a, pos_b,
                 mask_x, mask_a, mask_b, mask_gt_a, mask_gt_b, n_head=2):
    B, L = seq_x.shape
    D = params["ei"].shape[1]
    N = B * L

    # embedding gathers kept in plain JAX glue; dropout == identity (p=0)
    def embed(seq, pos, mask):
        e = jnp.take(params["ei"], seq, axis=0) + jnp.take(params["ep"], pos, axis=0)
        return e * mask

    e_x = embed(seq_x, pos_x, mask_x)
    e_a = embed(seq_a, pos_a, mask_a)
    e_b = embed(seq_b, pos_b, mask_b)

    # ------- shared MHA, all three domains in one call (weights resident) -------
    e_all = jnp.stack([e_x, e_a, e_b]).reshape(3 * B, L, D)
    m_seq = jnp.stack([mask_x, mask_a, mask_b]).reshape(3 * B, L, 1)
    km_all = m_seq.reshape(3 * B, 1, L)                  # key-padding mask (lane over keys)

    h_sa = mha_forward_batched(e_all, km_all, m_seq, params["mha"], n_head)  # (3B,L,D)

    # ------- post-attention block, domain-batched (v=0 branch) -------
    h_all = h_sa.reshape(3, N, D)
    m_all = m_seq.reshape(3, N, 1)
    # collapse rank-4 LoRA into dense (D,D) so the kernel does one full-width matmul
    dlw = jnp.stack([
        params["dlora_x"][0] @ params["dlora_x"][1],
        params["dlora_a"][0] @ params["dlora_a"][1],
        params["dlora_b"][0] @ params["dlora_b"][1],
    ])
    g_all = jnp.stack([params["norm_sa_x"][0], params["norm_sa_a"][0], params["norm_sa_b"][0]])
    be_all = jnp.stack([params["norm_sa_x"][1], params["norm_sa_a"][1], params["norm_sa_b"][1]])

    h_post = post_sa_batched(h_all, m_all, params["ffn"], dlw, g_all, be_all)  # (3,N,D)
    h_sa_x = h_post[0].reshape(B, L, D)
    h_sa_a = h_post[1].reshape(B, L, D)
    h_sa_b = h_post[2].reshape(B, L, D)

    # ------- fused cross-domain tail (proj_i + i2a/a2a/i2b/b2b + combine) -------
    mga = mask_gt_a.reshape(N, 1)                         # training-mode unsqueeze(-1)
    mgb = mask_gt_b.reshape(N, 1)
    pw1 = jnp.stack([params["proj_i"][0], params["proj_a"][0], params["proj_b"][0]])
    pb1 = jnp.stack([params["proj_i"][1], params["proj_a"][1], params["proj_b"][1]])
    pw2 = jnp.stack([params["proj_i"][2], params["proj_a"][2], params["proj_b"][2]])
    pb2 = jnp.stack([params["proj_i"][3], params["proj_a"][3], params["proj_b"][3]])
    ilw = jnp.stack([params["ilora_a"][0] @ params["ilora_a"][1],
                     params["ilora_b"][0] @ params["ilora_b"][1]])
    lng = jnp.stack([params["norm_i2a"][0], params["norm_a2a"][0],
                     params["norm_i2b"][0], params["norm_b2b"][0]])
    lnb = jnp.stack([params["norm_i2a"][1], params["norm_a2a"][1],
                     params["norm_i2b"][1], params["norm_b2b"][1]])

    h = combine_fused(h_post[0], h_post[1], h_post[2], mga, mgb,
                      pw1, pb1, pw2, pb2, ilw, lng, lnb).reshape(B, L, D)

    return h, h_sa_x, h_sa_a, h_sa_b


# ----------------------------------- main --------------------------------------

if __name__ == "__main__":
    B, L, D, H = 2, 8, 128, 2        # bs, len_trim, d_embed (lane-dense), n_head
    rd, ri = 4, 4
    n_item = 50

    key = jax.random.PRNGKey(0)
    kp, ks = jax.random.split(key)
    params = init_params(kp, n_item, L, D, rd, ri)

    k1, k2, k3, k4 = jax.random.split(ks, 4)
    seq_x = jax.random.randint(k1, (B, L), 1, n_item + 1)
    seq_a = jax.random.randint(k2, (B, L), 1, n_item + 1)
    seq_b = jax.random.randint(k3, (B, L), 1, n_item + 1)
    # introduce some padding to exercise the masks
    seq_x = seq_x.at[0, :2].set(0)
    seq_a = seq_a.at[0, :2].set(0)
    seq_b = seq_b.at[0, :2].set(0)

    pos = jnp.broadcast_to(jnp.arange(1, L + 1, dtype=jnp.int32), (B, L))
    pos_x = jnp.where(seq_x > 0, pos, 0)
    pos_a = jnp.where(seq_a > 0, pos, 0)
    pos_b = jnp.where(seq_b > 0, pos, 0)

    mask_x = (seq_x > 0).astype(jnp.float32)[..., None]
    mask_a = (seq_a > 0).astype(jnp.float32)[..., None]
    mask_b = (seq_b > 0).astype(jnp.float32)[..., None]
    mask_gt_a = jax.random.bernoulli(k4, 0.5, (B, L)).astype(jnp.float32)
    mask_gt_b = 1.0 - mask_gt_a

    out = abxi_forward(params, seq_x, seq_a, seq_b, pos_x, pos_a, pos_b,
                       mask_x, mask_a, mask_b, mask_gt_a, mask_gt_b, n_head=H)
    jax.block_until_ready(out)
    assert out[0].shape == (B, L, D)
    assert all(o.shape == (B, L, D) for o in out)
    print("KERNEL_OK")
</pallas_src>

<mosaic_0001>
module attributes {stable_mosaic.version = 11 : i64} {
  func.func @post_sa_kernel(%arg0: i32, %arg1: i32, %arg2: memref<1x16x128xf32, #tpu.memory_space<vmem>>, %arg3: memref<1x16x1xf32, #tpu.memory_space<vmem>>, %arg4: memref<128x128xf32, #tpu.memory_space<vmem>>, %arg5: memref<1x128xf32, #tpu.memory_space<vmem>>, %arg6: memref<128x128xf32, #tpu.memory_space<vmem>>, %arg7: memref<1x128xf32, #tpu.memory_space<vmem>>, %arg8: memref<1x128x128xf32, #tpu.memory_space<vmem>>, %arg9: memref<1x1x128xf32, #tpu.memory_space<vmem>>, %arg10: memref<1x1x128xf32, #tpu.memory_space<vmem>>, %arg11: memref<1x16x128xf32, #tpu.memory_space<vmem>>) attributes {dimension_semantics = [#tpu.dimension_semantics<parallel>, #tpu.dimension_semantics<parallel>], iteration_bounds = array<i64: 3, 1>, scalar_prefetch = 0 : i64, scratch_operands = 0 : i64, tpu.core_type = #tpu.core_type<tc>, window_params = [{transform_indices = @transform_0, window_bounds = array<i64: 1, 16, 128>}, {transform_indices = @transform_1, window_bounds = array<i64: 1, 16, 1>}, {pipeline_mode = #tpu.pipeline_mode<synchronous>, transform_indices = @transform_2, window_bounds = array<i64: 128, 128>}, {pipeline_mode = #tpu.pipeline_mode<synchronous>, transform_indices = @transform_3, window_bounds = array<i64: 1, 128>}, {pipeline_mode = #tpu.pipeline_mode<synchronous>, transform_indices = @transform_4, window_bounds = array<i64: 128, 128>}, {pipeline_mode = #tpu.pipeline_mode<synchronous>, transform_indices = @transform_5, window_bounds = array<i64: 1, 128>}, {transform_indices = @transform_6, window_bounds = array<i64: 1, 128, 128>}, {transform_indices = @transform_7, window_bounds = array<i64: 1, 1, 128>}, {transform_indices = @transform_8, window_bounds = array<i64: 1, 1, 128>}, {transform_indices = @transform_9, window_bounds = array<i64: 1, 16, 128>}]} {
    %c0 = arith.constant 0 : index
    %c0_0 = arith.constant 0 : index
    %c0_1 = arith.constant 0 : index
    %0 = vector.load %arg2[%c0, %c0_0, %c0_1] : memref<1x16x128xf32, #tpu.memory_space<vmem>>, vector<1x16x128xf32>
    %1 = vector.shape_cast %0 : vector<1x16x128xf32> to vector<16x128xf32>
    %c0_2 = arith.constant 0 : index
    %c0_3 = arith.constant 0 : index
    %2 = vector.load %arg4[%c0_2, %c0_3] : memref<128x128xf32, #tpu.memory_space<vmem>>, vector<128x128xf32>
    %cst = arith.constant dense<0.000000e+00> : vector<16x128xf32>
    %3 = tpu.matmul %1, %2, %cst {dimension_numbers = #tpu.dot_dimension_numbers<[1], [0], [0], [1], [0, 0, 1, 1], [], []>} : vector<16x128xf32>, vector<128x128xf32>, vector<16x128xf32> -> vector<16x128xf32>
    %c0_4 = arith.constant 0 : index
    %c0_5 = arith.constant 0 : index
    %4 = vector.load %arg5[%c0_4, %c0_5] : memref<1x128xf32, #tpu.memory_space<vmem>>, vector<1x128xf32>
    %5 = vector.broadcast %4 : vector<1x128xf32> to vector<16x128xf32>
    %6 = arith.addf %3, %5 : vector<16x128xf32>
    %cst_6 = arith.constant 5.000000e-01 : f32
    %7 = vector.broadcast %cst_6 : f32 to vector<16x128xf32>
    %8 = arith.mulf %7, %6 : vector<16x128xf32>
    %cst_7 = arith.constant 4.471500e-02 : f32
    %9 = vector.broadcast %cst_7 : f32 to vector<16x128xf32>
    %10 = arith.mulf %9, %6 : vector<16x128xf32>
    %11 = arith.mulf %10, %6 : vector<16x128xf32>
    %12 = arith.mulf %11, %6 : vector<16x128xf32>
    %13 = arith.addf %6, %12 : vector<16x128xf32>
    %cst_8 = arith.constant 0.797884583 : f32
    %14 = vector.broadcast %cst_8 : f32 to vector<16x128xf32>
    %15 = arith.mulf %14, %13 : vector<16x128xf32>
    %16 = math.tanh %15 : vector<16x128xf32>
    %cst_9 = arith.constant 1.000000e+00 : f32
    %17 = vector.broadcast %cst_9 : f32 to vector<16x128xf32>
    %18 = arith.addf %17, %16 : vector<16x128xf32>
    %19 = arith.mulf %8, %18 : vector<16x128xf32>
    %c0_10 = arith.constant 0 : index
    %c0_11 = arith.constant 0 : index
    %20 = vector.load %arg6[%c0_10, %c0_11] : memref<128x128xf32, #tpu.memory_space<vmem>>, vector<128x128xf32>
    %cst_12 = arith.constant dense<0.000000e+00> : vector<16x128xf32>
    %21 = tpu.matmul %19, %20, %cst_12 {dimension_numbers = #tpu.dot_dimension_numbers<[1], [0], [0], [1], [0, 0, 1, 1], [], []>} : vector<16x128xf32>, vector<128x128xf32>, vector<16x128xf32> -> vector<16x128xf32>
    %c0_13 = arith.constant 0 : index
    %c0_14 = arith.constant 0 : index
    %22 = vector.load %arg7[%c0_13, %c0_14] : memref<1x128xf32, #tpu.memory_space<vmem>>, vector<1x128xf32>
    %23 = vector.broadcast %22 : vector<1x128xf32> to vector<16x128xf32>
    %24 = arith.addf %21, %23 : vector<16x128xf32>
    %c0_15 = arith.constant 0 : index
    %c0_16 = arith.constant 0 : index
    %c0_17 = arith.constant 0 : index
    %25 = vector.load %arg8[%c0_15, %c0_16, %c0_17] : memref<1x128x128xf32, #tpu.memory_space<vmem>>, vector<1x128x128xf32>
    %26 = vector.shape_cast %25 : vector<1x128x128xf32> to vector<128x128xf32>
    %cst_18 = arith.constant dense<0.000000e+00> : vector<16x128xf32>
    %27 = tpu.matmul %1, %26, %cst_18 {dimension_numbers = #tpu.dot_dimension_numbers<[1], [0], [0], [1], [0, 0, 1, 1], [], []>} : vector<16x128xf32>, vector<128x128xf32>, vector<16x128xf32> -> vector<16x128xf32>
    %28 = arith.addf %1, %24 : vector<16x128xf32>
    %29 = arith.addf %28, %27 : vector<16x128xf32>
    %c0_19 = arith.constant 0 : index
    %c0_20 = arith.constant 0 : index
    %c0_21 = arith.constant 0 : index
    %30 = vector.load %arg9[%c0_19, %c0_20, %c0_21] : memref<1x1x128xf32, #tpu.memory_space<vmem>>, vector<1x1x128xf32>
    %31 = vector.shape_cast %30 : vector<1x1x128xf32> to vector<1x128xf32>
    %c0_22 = arith.constant 0 : index
    %c0_23 = arith.constant 0 : index
    %c0_24 = arith.constant 0 : index
    %32 = vector.load %arg10[%c0_22, %c0_23, %c0_24] : memref<1x1x128xf32, #tpu.memory_space<vmem>>, vector<1x1x128xf32>
    %33 = vector.shape_cast %32 : vector<1x1x128xf32> to vector<1x128xf32>
    %cst_25 = arith.constant dense<0.000000e+00> : vector<16xf32>
    %34 = vector.multi_reduction <add>, %29, %cst_25 [1] : vector<16x128xf32> to vector<16xf32>
    %35 = vector.shape_cast %34 : vector<16xf32> to vector<16x1xf32>
    %cst_26 = arith.constant 1.280000e+02 : f32
    %36 = vector.broadcast %cst_26 : f32 to vector<16x1xf32>
    %37 = arith.divf %35, %36 : vector<16x1xf32>
    %38 = vector.broadcast %37 : vector<16x1xf32> to vector<16x128xf32>
    %39 = arith.subf %29, %38 : vector<16x128xf32>
    %40 = arith.mulf %39, %39 : vector<16x128xf32>
    %cst_27 = arith.constant dense<0.000000e+00> : vector<16xf32>
    %41 = vector.multi_reduction <add>, %40, %cst_27 [1] : vector<16x128xf32> to vector<16xf32>
    %42 = vector.shape_cast %41 : vector<16xf32> to vector<16x1xf32>
    %cst_28 = arith.constant 1.280000e+02 : f32
    %43 = vector.broadcast %cst_28 : f32 to vector<16x1xf32>
    %44 = arith.divf %42, %43 : vector<16x1xf32>
    %cst_29 = arith.constant 9.99999974E-6 : f32
    %45 = vector.broadcast %cst_29 : f32 to vector<16x1xf32>
    %46 = arith.addf %44, %45 : vector<16x1xf32>
    %47 = math.rsqrt %46 : vector<16x1xf32>
    %48 = vector.broadcast %47 : vector<16x1xf32> to vector<16x128xf32>
    %49 = arith.mulf %39, %48 : vector<16x128xf32>
    %50 = vector.broadcast %31 : vector<1x128xf32> to vector<16x128xf32>
    %51 = arith.mulf %49, %50 : vector<16x128xf32>
    %52 = vector.broadcast %33 : vector<1x128xf32> to vector<16x128xf32>
    %53 = arith.addf %51, %52 : vector<16x128xf32>
    %c0_30 = arith.constant 0 : index
    %c0_31 = arith.constant 0 : index
    %c0_32 = arith.constant 0 : index
    %54 = vector.load %arg3[%c0_30, %c0_31, %c0_32] : memref<1x16x1xf32, #tpu.memory_space<vmem>>, vector<1x16x1xf32>
    %55 = vector.shape_cast %54 : vector<1x16x1xf32> to vector<16x1xf32>
    %56 = vector.broadcast %55 : vector<16x1xf32> to vector<16x128xf32>
    %57 = arith.mulf %53, %56 : vector<16x128xf32>
    %c0_33 = arith.constant 0 : index
    %c0_34 = arith.constant 0 : index
    %c0_35 = arith.constant 0 : index
    %58 = vector.load %arg11[%c0_33, %c0_34, %c0_35] : memref<1x16x128xf32, #tpu.memory_space<vmem>>, vector<1x16x128xf32>
    %59 = vector.shape_cast %58 : vector<1x16x128xf32> to vector<16x128xf32>
    %60 = vector.shape_cast %57 : vector<16x128xf32> to vector<1x16x128xf32>
    tpu.vector_store %arg11[%c0_33, %c0_34, %c0_35], %60 {strides = array<i32>} : memref<1x16x128xf32, #tpu.memory_space<vmem>>, vector<1x16x128xf32>,
    return
  }
  func.func @transform_0(%arg0: i32, %arg1: i32) -> (i32, i32, i32) {
    %c0_i32 = arith.constant 0 : i32
    %c0_i32_0 = arith.constant 0 : i32
    return %arg0, %arg1, %c0_i32 : i32, i32, i32
  }
  func.func @transform_1(%arg0: i32, %arg1: i32) -> (i32, i32, i32) {
    %c0_i32 = arith.constant 0 : i32
    %c0_i32_0 = arith.constant 0 : i32
    return %arg0, %arg1, %c0_i32 : i32, i32, i32
  }
  func.func @transform_2(%arg0: i32, %arg1: i32) -> (i32, i32) {
    %c0_i32 = arith.constant 0 : i32
    %c0_i32_0 = arith.constant 0 : i32
    %c0_i32_1 = arith.constant 0 : i32
    return %c0_i32, %c0_i32_0 : i32, i32
  }
  func.func @transform_3(%arg0: i32, %arg1: i32) -> (i32, i32) {
    %c0_i32 = arith.constant 0 : i32
    %c0_i32_0 = arith.constant 0 : i32
    %c0_i32_1 = arith.constant 0 : i32
    return %c0_i32, %c0_i32_0 : i32, i32
  }
  func.func @transform_4(%arg0: i32, %arg1: i32) -> (i32, i32) {
    %c0_i32 = arith.constant 0 : i32
    %c0_i32_0 = arith.constant 0 : i32
    %c0_i32_1 = arith.constant 0 : i32
    return %c0_i32, %c0_i32_0 : i32, i32
  }
  func.func @transform_5(%arg0: i32, %arg1: i32) -> (i32, i32) {
    %c0_i32 = arith.constant 0 : i32
    %c0_i32_0 = arith.constant 0 : i32
    %c0_i32_1 = arith.constant 0 : i32
    return %c0_i32, %c0_i32_0 : i32, i32
  }
  func.func @transform_6(%arg0: i32, %arg1: i32) -> (i32, i32, i32) {
    %c0_i32 = arith.constant 0 : i32
    %c0_i32_0 = arith.constant 0 : i32
    %c0_i32_1 = arith.constant 0 : i32
    return %arg0, %c0_i32, %c0_i32_0 : i32, i32, i32
  }
  func.func @transform_7(%arg0: i32, %arg1: i32) -> (i32, i32, i32) {
    %c0_i32 = arith.constant 0 : i32
    %c0_i32_0 = arith.constant 0 : i32
    %c0_i32_1 = arith.constant 0 : i32
    return %arg0, %c0_i32, %c0_i32_0 : i32, i32, i32
  }
  func.func @transform_8(%arg0: i32, %arg1: i32) -> (i32, i32, i32) {
    %c0_i32 = arith.constant 0 : i32
    %c0_i32_0 = arith.constant 0 : i32
    %c0_i32_1 = arith.constant 0 : i32
    return %arg0, %c0_i32, %c0_i32_0 : i32, i32, i32
  }
  func.func @transform_9(%arg0: i32, %arg1: i32) -> (i32, i32, i32) {
    %c0_i32 = arith.constant 0 : i32
    %c0_i32_0 = arith.constant 0 : i32
    return %arg0, %arg1, %c0_i32 : i32, i32, i32
  }
}

module attributes {stable_mosaic.version = 11 : i64} {
  func.func @mha_kernel(%arg0: i32, %arg1: memref<1x8x128xf32, #tpu.memory_space<vmem>>, %arg2: memref<1x1x8xf32, #tpu.memory_space<vmem>>, %arg3: memref<1x8x1xf32, #tpu.memory_space<vmem>>, %arg4: memref<128x384xf32, #tpu.memory_space<vmem>>, %arg5: memref<1x384xf32, #tpu.memory_space<vmem>>, %arg6: memref<128x128xf32, #tpu.memory_space<vmem>>, %arg7: memref<1x128xf32, #tpu.memory_space<vmem>>, %arg8: memref<1x8x128xf32, #tpu.memory_space<vmem>>) attributes {dimension_semantics = [#tpu.dimension_semantics<parallel>], iteration_bounds = array<i64: 6>, scalar_prefetch = 0 : i64, scratch_operands = 0 : i64, tpu.core_type = #tpu.core_type<tc>, window_params = [{transform_indices = @transform_0, window_bounds = array<i64: 1, 8, 128>}, {transform_indices = @transform_1, window_bounds = array<i64: 1, 1, 8>}, {transform_indices = @transform_2, window_bounds = array<i64: 1, 8, 1>}, {pipeline_mode = #tpu.pipeline_mode<synchronous>, transform_indices = @transform_3, window_bounds = array<i64: 128, 384>}, {pipeline_mode = #tpu.pipeline_mode<synchronous>, transform_indices = @transform_4, window_bounds = array<i64: 1, 384>}, {pipeline_mode = #tpu.pipeline_mode<synchronous>, transform_indices = @transform_5, window_bounds = array<i64: 128, 128>}, {pipeline_mode = #tpu.pipeline_mode<synchronous>, transform_indices = @transform_6, window_bounds = array<i64: 1, 128>}, {transform_indices = @transform_7, window_bounds = array<i64: 1, 8, 128>}]} {
    %c0 = arith.constant 0 : index
    %c0_0 = arith.constant 0 : index
    %c0_1 = arith.constant 0 : index
    %0 = vector.load %arg1[%c0, %c0_0, %c0_1] : memref<1x8x128xf32, #tpu.memory_space<vmem>>, vector<1x8x128xf32>
    %1 = vector.shape_cast %0 : vector<1x8x128xf32> to vector<8x128xf32>
    %c0_2 = arith.constant 0 : index
    %c0_3 = arith.constant 0 : index
    %2 = vector.load %arg4[%c0_2, %c0_3] : memref<128x384xf32, #tpu.memory_space<vmem>>, vector<128x384xf32>
    %cst = arith.constant dense<0.000000e+00> : vector<8x384xf32>
    %3 = tpu.matmul %1, %2, %cst {dimension_numbers = #tpu.dot_dimension_numbers<[1], [0], [0], [1], [0, 0, 1, 1], [], []>} : vector<8x128xf32>, vector<128x384xf32>, vector<8x384xf32> -> vector<8x384xf32>
    %c0_4 = arith.constant 0 : index
    %c0_5 = arith.constant 0 : index
    %4 = vector.load %arg5[%c0_4, %c0_5] : memref<1x384xf32, #tpu.memory_space<vmem>>, vector<1x384xf32>
    %5 = vector.broadcast %4 : vector<1x384xf32> to vector<8x384xf32>
    %6 = arith.addf %3, %5 : vector<8x384xf32>
    %7 = vector.extract_strided_slice %6 {offsets = [0, 0], sizes = [8, 128], strides = [1, 1]} : vector<8x384xf32> to vector<8x128xf32>
    %cst_6 = arith.constant 1.250000e-01 : f32
    %8 = vector.broadcast %cst_6 : f32 to vector<8x128xf32>
    %9 = arith.mulf %7, %8 : vector<8x128xf32>
    %10 = vector.extract_strided_slice %6 {offsets = [0, 128], sizes = [8, 128], strides = [1, 1]} : vector<8x384xf32> to vector<8x128xf32>
    %11 = vector.extract_strided_slice %6 {offsets = [0, 256], sizes = [8, 128], strides = [1, 1]} : vector<8x384xf32> to vector<8x128xf32>
    %12 = vector.shape_cast %9 : vector<8x128xf32> to vector<8x2x64xf32>
    %13 = tpu.transpose %12, [1, 0, 2] : vector<8x2x64xf32> -> vector<2x8x64xf32>
    %14 = vector.shape_cast %10 : vector<8x128xf32> to vector<8x2x64xf32>
    %15 = tpu.transpose %14, [1, 0, 2] : vector<8x2x64xf32> -> vector<2x8x64xf32>
    %16 = vector.shape_cast %11 : vector<8x128xf32> to vector<8x2x64xf32>
    %17 = tpu.transpose %16, [1, 0, 2] : vector<8x2x64xf32> -> vector<2x8x64xf32>
    "tpu.trace_start"() <{level = 10 : i32, message = "hqd,hkd->hqk"}> : () -> ()
    %cst_7 = arith.constant dense<0.000000e+00> : vector<2x8x8xf32>
    %18 = tpu.matmul %13, %15, %cst_7 {dimension_numbers = #tpu.dot_dimension_numbers<[2], [2], [1], [1], [0, 0, 0, 1, 1, 1], [0], [0]>} : vector<2x8x64xf32>, vector<2x8x64xf32>, vector<2x8x8xf32> -> vector<2x8x8xf32>
    "tpu.trace_stop"() : () -> ()
    %19 = tpu.iota {dimensions = array<i32: 0>} : vector<8x8xi32>
    %20 = tpu.iota {dimensions = array<i32: 1>} : vector<8x8xi32>
    %21 = arith.cmpi sle, %20, %19 : vector<8x8xi32>
    %c0_8 = arith.constant 0 : index
    %c0_9 = arith.constant 0 : index
    %c0_10 = arith.constant 0 : index
    %22 = vector.load %arg2[%c0_8, %c0_9, %c0_10] : memref<1x1x8xf32, #tpu.memory_space<vmem>>, vector<1x1x8xf32>
    %23 = vector.shape_cast %22 : vector<1x1x8xf32> to vector<1x8xf32>
    %cst_11 = arith.constant 5.000000e-01 : f32
    %24 = vector.broadcast %cst_11 : f32 to vector<1x8xf32>
    %25 = arith.cmpf ogt, %23, %24 : vector<1x8xf32>
    %26 = vector.broadcast %25 : vector<1x8xi1> to vector<8x8xi1>
    %27 = arith.andi %21, %26 : vector<8x8xi1>
    %28 = vector.shape_cast %27 : vector<8x8xi1> to vector<1x8x8xi1>
    %cst_12 = arith.constant -1.000000e+09 : f32
    %29 = vector.shape_cast %28 : vector<1x8x8xi1> to vector<1x8x8xi1>
    %30 = vector.broadcast %29 : vector<1x8x8xi1> to vector<2x8x8xi1>
    %31 = vector.broadcast %cst_12 : f32 to vector<2x8x8xf32>
    %32 = arith.select %30, %18, %31 : vector<2x8x8xi1>, vector<2x8x8xf32>
    %cst_13 = arith.constant dense<0xFF800000> : vector<2x8xf32>
    %33 = vector.multi_reduction <maximumf>, %32, %cst_13 [2] : vector<2x8x8xf32> to vector<2x8xf32>
    %34 = vector.shape_cast %33 : vector<2x8xf32> to vector<2x8x1xf32>
    %35 = vector.broadcast %34 : vector<2x8x1xf32> to vector<2x8x8xf32>
    %36 = arith.subf %32, %35 : vector<2x8x8xf32>
    %37 = math.exp %36 : vector<2x8x8xf32>
    %cst_14 = arith.constant dense<0.000000e+00> : vector<2x8xf32>
    %38 = vector.multi_reduction <add>, %37, %cst_14 [2] : vector<2x8x8xf32> to vector<2x8xf32>
    %39 = vector.shape_cast %38 : vector<2x8xf32> to vector<2x8x1xf32>
    %40 = tpu.reciprocal %39 {approx = true} : vector<2x8x1xf32> -> vector<2x8x1xf32>
    %41 = vector.broadcast %40 : vector<2x8x1xf32> to vector<2x8x8xf32>
    %42 = arith.mulf %37, %41 : vector<2x8x8xf32>
    "tpu.trace_start"() <{level = 10 : i32, message = "hqk,hkd->hqd"}> : () -> ()
    %cst_15 = arith.constant dense<0.000000e+00> : vector<2x8x64xf32>
    %43 = tpu.matmul %42, %17, %cst_15 {dimension_numbers = #tpu.dot_dimension_numbers<[2], [1], [1], [2], [0, 0, 0, 1, 1, 2], [0], [0]>} : vector<2x8x8xf32>, vector<2x8x64xf32>, vector<2x8x64xf32> -> vector<2x8x64xf32>
    "tpu.trace_stop"() : () -> ()
    %44 = tpu.transpose %43, [1, 0, 2] : vector<2x8x64xf32> -> vector<8x2x64xf32>
    %45 = vector.shape_cast %44 : vector<8x2x64xf32> to vector<8x128xf32>
    %c0_16 = arith.constant 0 : index
    %c0_17 = arith.constant 0 : index
    %46 = vector.load %arg6[%c0_16, %c0_17] : memref<128x128xf32, #tpu.memory_space<vmem>>, vector<128x128xf32>
    %cst_18 = arith.constant dense<0.000000e+00> : vector<8x128xf32>
    %47 = tpu.matmul %45, %46, %cst_18 {dimension_numbers = #tpu.dot_dimension_numbers<[1], [0], [0], [1], [0, 0, 1, 1], [], []>} : vector<8x128xf32>, vector<128x128xf32>, vector<8x128xf32> -> vector<8x128xf32>
    %c0_19 = arith.constant 0 : index
    %c0_20 = arith.constant 0 : index
    %48 = vector.load %arg7[%c0_19, %c0_20] : memref<1x128xf32, #tpu.memory_space<vmem>>, vector<1x128xf32>
    %49 = vector.broadcast %48 : vector<1x128xf32> to vector<8x128xf32>
    %50 = arith.addf %47, %49 : vector<8x128xf32>
    %51 = arith.addf %50, %1 : vector<8x128xf32>
    %c0_21 = arith.constant 0 : index
    %c0_22 = arith.constant 0 : index
    %c0_23 = arith.constant 0 : index
    %52 = vector.load %arg3[%c0_21, %c0_22, %c0_23] : memref<1x8x1xf32, #tpu.memory_space<vmem>>, vector<1x8x1xf32>
    %53 = vector.shape_cast %52 : vector<1x8x1xf32> to vector<8x1xf32>
    %54 = vector.broadcast %53 : vector<8x1xf32> to vector<8x128xf32>
    %55 = arith.mulf %51, %54 : vector<8x128xf32>
    %c0_24 = arith.constant 0 : index
    %c0_25 = arith.constant 0 : index
    %c0_26 = arith.constant 0 : index
    %56 = vector.load %arg8[%c0_24, %c0_25, %c0_26] : memref<1x8x128xf32, #tpu.memory_space<vmem>>, vector<1x8x128xf32>
    %57 = vector.shape_cast %56 : vector<1x8x128xf32> to vector<8x128xf32>
    %58 = vector.shape_cast %55 : vector<8x128xf32> to vector<1x8x128xf32>
    tpu.vector_store %arg8[%c0_24, %c0_25, %c0_26], %58 {strides = array<i32>} : memref<1x8x128xf32, #tpu.memory_space<vmem>>, vector<1x8x128xf32>,
    return
  }
  func.func @transform_0(%arg0: i32) -> (i32, i32, i32) {
    %c0_i32 = arith.constant 0 : i32
    %c0_i32_0 = arith.constant 0 : i32
    %c0_i32_1 = arith.constant 0 : i32
    return %arg0, %c0_i32, %c0_i32_0 : i32, i32, i32
  }
  func.func @transform_1(%arg0: i32) -> (i32, i32, i32) {
    %c0_i32 = arith.constant 0 : i32
    %c0_i32_0 = arith.constant 0 : i32
    %c0_i32_1 = arith.constant 0 : i32
    return %arg0, %c0_i32, %c0_i32_0 : i32, i32, i32
  }
  func.func @transform_2(%arg0: i32) -> (i32, i32, i32) {
    %c0_i32 = arith.constant 0 : i32
    %c0_i32_0 = arith.constant 0 : i32
    %c0_i32_1 = arith.constant 0 : i32
    return %arg0, %c0_i32, %c0_i32_0 : i32, i32, i32
  }
  func.func @transform_3(%arg0: i32) -> (i32, i32) {
    %c0_i32 = arith.constant 0 : i32
    %c0_i32_0 = arith.constant 0 : i32
    %c0_i32_1 = arith.constant 0 : i32
    return %c0_i32, %c0_i32_0 : i32, i32
  }
  func.func @transform_4(%arg0: i32) -> (i32, i32) {
    %c0_i32 = arith.constant 0 : i32
    %c0_i32_0 = arith.constant 0 : i32
    %c0_i32_1 = arith.constant 0 : i32
    return %c0_i32, %c0_i32_0 : i32, i32
  }
  func.func @transform_5(%arg0: i32) -> (i32, i32) {
    %c0_i32 = arith.constant 0 : i32
    %c0_i32_0 = arith.constant 0 : i32
    %c0_i32_1 = arith.constant 0 : i32
    return %c0_i32, %c0_i32_0 : i32, i32
  }
  func.func @transform_6(%arg0: i32) -> (i32, i32) {
    %c0_i32 = arith.constant 0 : i32
    %c0_i32_0 = arith.constant 0 : i32
    %c0_i32_1 = arith.constant 0 : i32
    return %c0_i32, %c0_i32_0 : i32, i32
  }
  func.func @transform_7(%arg0: i32) -> (i32, i32, i32) {
    %c0_i32 = arith.constant 0 : i32
    %c0_i32_0 = arith.constant 0 : i32
    %c0_i32_1 = arith.constant 0 : i32
    return %arg0, %c0_i32, %c0_i32_0 : i32, i32, i32
  }
}

module attributes {stable_mosaic.version = 11 : i64} {
  func.func @combine_kernel(%arg0: i32, %arg1: memref<16x128xf32, #tpu.memory_space<vmem>>, %arg2: memref<16x128xf32, #tpu.memory_space<vmem>>, %arg3: memref<16x128xf32, #tpu.memory_space<vmem>>, %arg4: memref<16x1xf32, #tpu.memory_space<vmem>>, %arg5: memref<16x1xf32, #tpu.memory_space<vmem>>, %arg6: memref<3x128x128xf32, #tpu.memory_space<vmem>>, %arg7: memref<3x1x128xf32, #tpu.memory_space<vmem>>, %arg8: memref<3x128x128xf32, #tpu.memory_space<vmem>>, %arg9: memref<3x1x128xf32, #tpu.memory_space<vmem>>, %arg10: memref<2x128x128xf32, #tpu.memory_space<vmem>>, %arg11: memref<4x1x128xf32, #tpu.memory_space<vmem>>, %arg12: memref<4x1x128xf32, #tpu.memory_space<vmem>>, %arg13: memref<16x128xf32, #tpu.memory_space<vmem>>) attributes {dimension_semantics = [#tpu.dimension_semantics<parallel>], iteration_bounds = array<i64: 1>, scalar_prefetch = 0 : i64, scratch_operands = 0 : i64, tpu.core_type = #tpu.core_type<tc>, window_params = [{transform_indices = @transform_0, window_bounds = array<i64: 16, 128>}, {transform_indices = @transform_1, window_bounds = array<i64: 16, 128>}, {transform_indices = @transform_2, window_bounds = array<i64: 16, 128>}, {transform_indices = @transform_3, window_bounds = array<i64: 16, 1>}, {transform_indices = @transform_4, window_bounds = array<i64: 16, 1>}, {pipeline_mode = #tpu.pipeline_mode<synchronous>, transform_indices = @transform_5, window_bounds = array<i64: 3, 128, 128>}, {pipeline_mode = #tpu.pipeline_mode<synchronous>, transform_indices = @transform_6, window_bounds = array<i64: 3, 1, 128>}, {pipeline_mode = #tpu.pipeline_mode<synchronous>, transform_indices = @transform_7, window_bounds = array<i64: 3, 128, 128>}, {pipeline_mode = #tpu.pipeline_mode<synchronous>, transform_indices = @transform_8, window_bounds = array<i64: 3, 1, 128>}, {pipeline_mode = #tpu.pipeline_mode<synchronous>, transform_indices = @transform_9, window_bounds = array<i64: 2, 128, 128>}, {pipeline_mode = #tpu.pipeline_mode<synchronous>, transform_indices = @transform_10, window_bounds = array<i64: 4, 1, 128>}, {pipeline_mode = #tpu.pipeline_mode<synchronous>, transform_indices = @transform_11, window_bounds = array<i64: 4, 1, 128>}, {transform_indices = @transform_12, window_bounds = array<i64: 16, 128>}]} {
    %c0 = arith.constant 0 : index
    %c0_0 = arith.constant 0 : index
    %0 = vector.load %arg1[%c0, %c0_0] : memref<16x128xf32, #tpu.memory_space<vmem>>, vector<16x128xf32>
    %c0_1 = arith.constant 0 : index
    %c0_2 = arith.constant 0 : index
    %1 = vector.load %arg2[%c0_1, %c0_2] : memref<16x128xf32, #tpu.memory_space<vmem>>, vector<16x128xf32>
    %c0_3 = arith.constant 0 : index
    %c0_4 = arith.constant 0 : index
    %2 = vector.load %arg3[%c0_3, %c0_4] : memref<16x128xf32, #tpu.memory_space<vmem>>, vector<16x128xf32>
    %c0_5 = arith.constant 0 : index
    %c0_6 = arith.constant 0 : index
    %3 = vector.load %arg4[%c0_5, %c0_6] : memref<16x1xf32, #tpu.memory_space<vmem>>, vector<16x1xf32>
    %c0_7 = arith.constant 0 : index
    %c0_8 = arith.constant 0 : index
    %4 = vector.load %arg5[%c0_7, %c0_8] : memref<16x1xf32, #tpu.memory_space<vmem>>, vector<16x1xf32>
    %c0_9 = arith.constant 0 : index
    %c0_10 = arith.constant 0 : index
    %c0_11 = arith.constant 0 : index
    %5 = vector.load %arg6[%c0_9, %c0_10, %c0_11] : memref<3x128x128xf32, #tpu.memory_space<vmem>>, vector<1x128x128xf32>
    %6 = vector.shape_cast %5 : vector<1x128x128xf32> to vector<128x128xf32>
    %cst = arith.constant dense<0.000000e+00> : vector<16x128xf32>
    %7 = tpu.matmul %0, %6, %cst {dimension_numbers = #tpu.dot_dimension_numbers<[1], [0], [0], [1], [0, 0, 1, 1], [], []>} : vector<16x128xf32>, vector<128x128xf32>, vector<16x128xf32> -> vector<16x128xf32>
    %c0_12 = arith.constant 0 : index
    %c0_13 = arith.constant 0 : index
    %c0_14 = arith.constant 0 : index
    %8 = vector.load %arg7[%c0_12, %c0_13, %c0_14] : memref<3x1x128xf32, #tpu.memory_space<vmem>>, vector<1x1x128xf32>
    %9 = vector.shape_cast %8 : vector<1x1x128xf32> to vector<1x128xf32>
    %10 = vector.broadcast %9 : vector<1x128xf32> to vector<16x128xf32>
    %11 = arith.addf %7, %10 : vector<16x128xf32>
    %cst_15 = arith.constant 5.000000e-01 : f32
    %12 = vector.broadcast %cst_15 : f32 to vector<16x128xf32>
    %13 = arith.mulf %12, %11 : vector<16x128xf32>
    %cst_16 = arith.constant 4.471500e-02 : f32
    %14 = vector.broadcast %cst_16 : f32 to vector<16x128xf32>
    %15 = arith.mulf %14, %11 : vector<16x128xf32>
    %16 = arith.mulf %15, %11 : vector<16x128xf32>
    %17 = arith.mulf %16, %11 : vector<16x128xf32>
    %18 = arith.addf %11, %17 : vector<16x128xf32>
    %cst_17 = arith.constant 0.797884583 : f32
    %19 = vector.broadcast %cst_17 : f32 to vector<16x128xf32>
    %20 = arith.mulf %19, %18 : vector<16x128xf32>
    %21 = math.tanh %20 : vector<16x128xf32>
    %cst_18 = arith.constant 1.000000e+00 : f32
    %22 = vector.broadcast %cst_18 : f32 to vector<16x128xf32>
    %23 = arith.addf %22, %21 : vector<16x128xf32>
    %24 = arith.mulf %13, %23 : vector<16x128xf32>
    %c0_19 = arith.constant 0 : index
    %c0_20 = arith.constant 0 : index
    %c0_21 = arith.constant 0 : index
    %25 = vector.load %arg8[%c0_19, %c0_20, %c0_21] : memref<3x128x128xf32, #tpu.memory_space<vmem>>, vector<1x128x128xf32>
    %26 = vector.shape_cast %25 : vector<1x128x128xf32> to vector<128x128xf32>
    %cst_22 = arith.constant dense<0.000000e+00> : vector<16x128xf32>
    %27 = tpu.matmul %24, %26, %cst_22 {dimension_numbers = #tpu.dot_dimension_numbers<[1], [0], [0], [1], [0, 0, 1, 1], [], []>} : vector<16x128xf32>, vector<128x128xf32>, vector<16x128xf32> -> vector<16x128xf32>
    %c0_23 = arith.constant 0 : index
    %c0_24 = arith.constant 0 : index
    %c0_25 = arith.constant 0 : index
    %28 = vector.load %arg9[%c0_23, %c0_24, %c0_25] : memref<3x1x128xf32, #tpu.memory_space<vmem>>, vector<1x1x128xf32>
    %29 = vector.shape_cast %28 : vector<1x1x128xf32> to vector<1x128xf32>
    %30 = vector.broadcast %29 : vector<1x128xf32> to vector<16x128xf32>
    %31 = arith.addf %27, %30 : vector<16x128xf32>
    %c1 = arith.constant 1 : index
    %c0_26 = arith.constant 0 : index
    %c0_27 = arith.constant 0 : index
    %32 = vector.load %arg6[%c1, %c0_26, %c0_27] : memref<3x128x128xf32, #tpu.memory_space<vmem>>, vector<1x128x128xf32>
    %33 = vector.shape_cast %32 : vector<1x128x128xf32> to vector<128x128xf32>
    %cst_28 = arith.constant dense<0.000000e+00> : vector<16x128xf32>
    %34 = tpu.matmul %1, %33, %cst_28 {dimension_numbers = #tpu.dot_dimension_numbers<[1], [0], [0], [1], [0, 0, 1, 1], [], []>} : vector<16x128xf32>, vector<128x128xf32>, vector<16x128xf32> -> vector<16x128xf32>
    %c1_29 = arith.constant 1 : index
    %c0_30 = arith.constant 0 : index
    %c0_31 = arith.constant 0 : index
    %35 = vector.load %arg7[%c1_29, %c0_30, %c0_31] : memref<3x1x128xf32, #tpu.memory_space<vmem>>, vector<1x1x128xf32>
    %36 = vector.shape_cast %35 : vector<1x1x128xf32> to vector<1x128xf32>
    %37 = vector.broadcast %36 : vector<1x128xf32> to vector<16x128xf32>
    %38 = arith.addf %34, %37 : vector<16x128xf32>
    %cst_32 = arith.constant 5.000000e-01 : f32
    %39 = vector.broadcast %cst_32 : f32 to vector<16x128xf32>
    %40 = arith.mulf %39, %38 : vector<16x128xf32>
    %cst_33 = arith.constant 4.471500e-02 : f32
    %41 = vector.broadcast %cst_33 : f32 to vector<16x128xf32>
    %42 = arith.mulf %41, %38 : vector<16x128xf32>
    %43 = arith.mulf %42, %38 : vector<16x128xf32>
    %44 = arith.mulf %43, %38 : vector<16x128xf32>
    %45 = arith.addf %38, %44 : vector<16x128xf32>
    %cst_34 = arith.constant 0.797884583 : f32
    %46 = vector.broadcast %cst_34 : f32 to vector<16x128xf32>
    %47 = arith.mulf %46, %45 : vector<16x128xf32>
    %48 = math.tanh %47 : vector<16x128xf32>
    %cst_35 = arith.constant 1.000000e+00 : f32
    %49 = vector.broadcast %cst_35 : f32 to vector<16x128xf32>
    %50 = arith.addf %49, %48 : vector<16x128xf32>
    %51 = arith.mulf %40, %50 : vector<16x128xf32>
    %c1_36 = arith.constant 1 : index
    %c0_37 = arith.constant 0 : index
    %c0_38 = arith.constant 0 : index
    %52 = vector.load %arg8[%c1_36, %c0_37, %c0_38] : memref<3x128x128xf32, #tpu.memory_space<vmem>>, vector<1x128x128xf32>
    %53 = vector.shape_cast %52 : vector<1x128x128xf32> to vector<128x128xf32>
    %cst_39 = arith.constant dense<0.000000e+00> : vector<16x128xf32>
    %54 = tpu.matmul %51, %53, %cst_39 {dimension_numbers = #tpu.dot_dimension_numbers<[1], [0], [0], [1], [0, 0, 1, 1], [], []>} : vector<16x128xf32>, vector<128x128xf32>, vector<16x128xf32> -> vector<16x128xf32>
    %c1_40 = arith.constant 1 : index
    %c0_41 = arith.constant 0 : index
    %c0_42 = arith.constant 0 : index
    %55 = vector.load %arg9[%c1_40, %c0_41, %c0_42] : memref<3x1x128xf32, #tpu.memory_space<vmem>>, vector<1x1x128xf32>
    %56 = vector.shape_cast %55 : vector<1x1x128xf32> to vector<1x128xf32>
    %57 = vector.broadcast %56 : vector<1x128xf32> to vector<16x128xf32>
    %58 = arith.addf %54, %57 : vector<16x128xf32>
    %c2 = arith.constant 2 : index
    %c0_43 = arith.constant 0 : index
    %c0_44 = arith.constant 0 : index
    %59 = vector.load %arg6[%c2, %c0_43, %c0_44] : memref<3x128x128xf32, #tpu.memory_space<vmem>>, vector<1x128x128xf32>
    %60 = vector.shape_cast %59 : vector<1x128x128xf32> to vector<128x128xf32>
    %cst_45 = arith.constant dense<0.000000e+00> : vector<16x128xf32>
    %61 = tpu.matmul %2, %60, %cst_45 {dimension_numbers = #tpu.dot_dimension_numbers<[1], [0], [0], [1], [0, 0, 1, 1], [], []>} : vector<16x128xf32>, vector<128x128xf32>, vector<16x128xf32> -> vector<16x128xf32>
    %c2_46 = arith.constant 2 : index
    %c0_47 = arith.constant 0 : index
    %c0_48 = arith.constant 0 : index
    %62 = vector.load %arg7[%c2_46, %c0_47, %c0_48] : memref<3x1x128xf32, #tpu.memory_space<vmem>>, vector<1x1x128xf32>
    %63 = vector.shape_cast %62 : vector<1x1x128xf32> to vector<1x128xf32>
    %64 = vector.broadcast %63 : vector<1x128xf32> to vector<16x128xf32>
    %65 = arith.addf %61, %64 : vector<16x128xf32>
    %cst_49 = arith.constant 5.000000e-01 : f32
    %66 = vector.broadcast %cst_49 : f32 to vector<16x128xf32>
    %67 = arith.mulf %66, %65 : vector<16x128xf32>
    %cst_50 = arith.constant 4.471500e-02 : f32
    %68 = vector.broadcast %cst_50 : f32 to vector<16x128xf32>
    %69 = arith.mulf %68, %65 : vector<16x128xf32>
    %70 = arith.mulf %69, %65 : vector<16x128xf32>
    %71 = arith.mulf %70, %65 : vector<16x128xf32>
    %72 = arith.addf %65, %71 : vector<16x128xf32>
    %cst_51 = arith.constant 0.797884583 : f32
    %73 = vector.broadcast %cst_51 : f32 to vector<16x128xf32>
    %74 = arith.mulf %73, %72 : vector<16x128xf32>
    %75 = math.tanh %74 : vector<16x128xf32>
    %cst_52 = arith.constant 1.000000e+00 : f32
    %76 = vector.broadcast %cst_52 : f32 to vector<16x128xf32>
    %77 = arith.addf %76, %75 : vector<16x128xf32>
    %78 = arith.mulf %67, %77 : vector<16x128xf32>
    %c2_53 = arith.constant 2 : index
    %c0_54 = arith.constant 0 : index
    %c0_55 = arith.constant 0 : index
    %79 = vector.load %arg8[%c2_53, %c0_54, %c0_55] : memref<3x128x128xf32, #tpu.memory_space<vmem>>, vector<1x128x128xf32>
    %80 = vector.shape_cast %79 : vector<1x128x128xf32> to vector<128x128xf32>
    %cst_56 = arith.constant dense<0.000000e+00> : vector<16x128xf32>
    %81 = tpu.matmul %78, %80, %cst_56 {dimension_numbers = #tpu.dot_dimension_numbers<[1], [0], [0], [1], [0, 0, 1, 1], [], []>} : vector<16x128xf32>, vector<128x128xf32>, vector<16x128xf32> -> vector<16x128xf32>
    %c2_57 = arith.constant 2 : index
    %c0_58 = arith.constant 0 : index
    %c0_59 = arith.constant 0 : index
    %82 = vector.load %arg9[%c2_57, %c0_58, %c0_59] : memref<3x1x128xf32, #tpu.memory_space<vmem>>, vector<1x1x128xf32>
    %83 = vector.shape_cast %82 : vector<1x1x128xf32> to vector<1x128xf32>
    %84 = vector.broadcast %83 : vector<1x128xf32> to vector<16x128xf32>
    %85 = arith.addf %81, %84 : vector<16x128xf32>
    %c0_60 = arith.constant 0 : index
    %c0_61 = arith.constant 0 : index
    %c0_62 = arith.constant 0 : index
    %86 = vector.load %arg10[%c0_60, %c0_61, %c0_62] : memref<2x128x128xf32, #tpu.memory_space<vmem>>, vector<1x128x128xf32>
    %87 = vector.shape_cast %86 : vector<1x128x128xf32> to vector<128x128xf32>
    %cst_63 = arith.constant dense<0.000000e+00> : vector<16x128xf32>
    %88 = tpu.matmul %0, %87, %cst_63 {dimension_numbers = #tpu.dot_dimension_numbers<[1], [0], [0], [1], [0, 0, 1, 1], [], []>} : vector<16x128xf32>, vector<128x128xf32>, vector<16x128xf32> -> vector<16x128xf32>
    %c1_64 = arith.constant 1 : index
    %c0_65 = arith.constant 0 : index
    %c0_66 = arith.constant 0 : index
    %89 = vector.load %arg10[%c1_64, %c0_65, %c0_66] : memref<2x128x128xf32, #tpu.memory_space<vmem>>, vector<1x128x128xf32>
    %90 = vector.shape_cast %89 : vector<1x128x128xf32> to vector<128x128xf32>
    %cst_67 = arith.constant dense<0.000000e+00> : vector<16x128xf32>
    %91 = tpu.matmul %0, %90, %cst_67 {dimension_numbers = #tpu.dot_dimension_numbers<[1], [0], [0], [1], [0, 0, 1, 1], [], []>} : vector<16x128xf32>, vector<128x128xf32>, vector<16x128xf32> -> vector<16x128xf32>
    %92 = arith.addf %0, %31 : vector<16x128xf32>
    %93 = arith.addf %92, %88 : vector<16x128xf32>
    %94 = vector.broadcast %3 : vector<16x1xf32> to vector<16x128xf32>
    %95 = arith.mulf %93, %94 : vector<16x128xf32>
    %c0_68 = arith.constant 0 : index
    %c0_69 = arith.constant 0 : index
    %c0_70 = arith.constant 0 : index
    %96 = vector.load %arg11[%c0_68, %c0_69, %c0_70] : memref<4x1x128xf32, #tpu.memory_space<vmem>>, vector<1x1x128xf32>
    %97 = vector.shape_cast %96 : vector<1x1x128xf32> to vector<1x128xf32>
    %c0_71 = arith.constant 0 : index
    %c0_72 = arith.constant 0 : index
    %c0_73 = arith.constant 0 : index
    %98 = vector.load %arg12[%c0_71, %c0_72, %c0_73] : memref<4x1x128xf32, #tpu.memory_space<vmem>>, vector<1x1x128xf32>
    %99 = vector.shape_cast %98 : vector<1x1x128xf32> to vector<1x128xf32>
    %cst_74 = arith.constant dense<0.000000e+00> : vector<16xf32>
    %100 = vector.multi_reduction <add>, %95, %cst_74 [1] : vector<16x128xf32> to vector<16xf32>
    %101 = vector.shape_cast %100 : vector<16xf32> to vector<16x1xf32>
    %cst_75 = arith.constant 1.280000e+02 : f32
    %102 = vector.broadcast %cst_75 : f32 to vector<16x1xf32>
    %103 = arith.divf %101, %102 : vector<16x1xf32>
    %104 = vector.broadcast %103 : vector<16x1xf32> to vector<16x128xf32>
    %105 = arith.subf %95, %104 : vector<16x128xf32>
    %106 = arith.mulf %105, %105 : vector<16x128xf32>
    %cst_76 = arith.constant dense<0.000000e+00> : vector<16xf32>
    %107 = vector.multi_reduction <add>, %106, %cst_76 [1] : vector<16x128xf32> to vector<16xf32>
    %108 = vector.shape_cast %107 : vector<16xf32> to vector<16x1xf32>
    %cst_77 = arith.constant 1.280000e+02 : f32
    %109 = vector.broadcast %cst_77 : f32 to vector<16x1xf32>
    %110 = arith.divf %108, %109 : vector<16x1xf32>
    %cst_78 = arith.constant 9.99999974E-6 : f32
    %111 = vector.broadcast %cst_78 : f32 to vector<16x1xf32>
    %112 = arith.addf %110, %111 : vector<16x1xf32>
    %113 = math.rsqrt %112 : vector<16x1xf32>
    %114 = vector.broadcast %113 : vector<16x1xf32> to vector<16x128xf32>
    %115 = arith.mulf %105, %114 : vector<16x128xf32>
    %116 = vector.broadcast %97 : vector<1x128xf32> to vector<16x128xf32>
    %117 = arith.mulf %115, %116 : vector<16x128xf32>
    %118 = vector.broadcast %99 : vector<1x128xf32> to vector<16x128xf32>
    %119 = arith.addf %117, %118 : vector<16x128xf32>
    %120 = arith.addf %1, %58 : vector<16x128xf32>
    %121 = vector.broadcast %3 : vector<16x1xf32> to vector<16x128xf32>
    %122 = arith.mulf %120, %121 : vector<16x128xf32>
    %c1_79 = arith.constant 1 : index
    %c0_80 = arith.constant 0 : index
    %c0_81 = arith.constant 0 : index
    %123 = vector.load %arg11[%c1_79, %c0_80, %c0_81] : memref<4x1x128xf32, #tpu.memory_space<vmem>>, vector<1x1x128xf32>
    %124 = vector.shape_cast %123 : vector<1x1x128xf32> to vector<1x128xf32>
    %c1_82 = arith.constant 1 : index
    %c0_83 = arith.constant 0 : index
    %c0_84 = arith.constant 0 : index
    %125 = vector.load %arg12[%c1_82, %c0_83, %c0_84] : memref<4x1x128xf32, #tpu.memory_space<vmem>>, vector<1x1x128xf32>
    %126 = vector.shape_cast %125 : vector<1x1x128xf32> to vector<1x128xf32>
    %cst_85 = arith.constant dense<0.000000e+00> : vector<16xf32>
    %127 = vector.multi_reduction <add>, %122, %cst_85 [1] : vector<16x128xf32> to vector<16xf32>
    %128 = vector.shape_cast %127 : vector<16xf32> to vector<16x1xf32>
    %cst_86 = arith.constant 1.280000e+02 : f32
    %129 = vector.broadcast %cst_86 : f32 to vector<16x1xf32>
    %130 = arith.divf %128, %129 : vector<16x1xf32>
    %131 = vector.broadcast %130 : vector<16x1xf32> to vector<16x128xf32>
    %132 = arith.subf %122, %131 : vector<16x128xf32>
    %133 = arith.mulf %132, %132 : vector<16x128xf32>
    %cst_87 = arith.constant dense<0.000000e+00> : vector<16xf32>
    %134 = vector.multi_reduction <add>, %133, %cst_87 [1] : vector<16x128xf32> to vector<16xf32>
    %135 = vector.shape_cast %134 : vector<16xf32> to vector<16x1xf32>
    %cst_88 = arith.constant 1.280000e+02 : f32
    %136 = vector.broadcast %cst_88 : f32 to vector<16x1xf32>
    %137 = arith.divf %135, %136 : vector<16x1xf32>
    %cst_89 = arith.constant 9.99999974E-6 : f32
    %138 = vector.broadcast %cst_89 : f32 to vector<16x1xf32>
    %139 = arith.addf %137, %138 : vector<16x1xf32>
    %140 = math.rsqrt %139 : vector<16x1xf32>
    %141 = vector.broadcast %140 : vector<16x1xf32> to vector<16x128xf32>
    %142 = arith.mulf %132, %141 : vector<16x128xf32>
    %143 = vector.broadcast %124 : vector<1x128xf32> to vector<16x128xf32>
    %144 = arith.mulf %142, %143 : vector<16x128xf32>
    %145 = vector.broadcast %126 : vector<1x128xf32> to vector<16x128xf32>
    %146 = arith.addf %144, %145 : vector<16x128xf32>
    %147 = arith.addf %0, %31 : vector<16x128xf32>
    %148 = arith.addf %147, %91 : vector<16x128xf32>
    %149 = vector.broadcast %4 : vector<16x1xf32> to vector<16x128xf32>
    %150 = arith.mulf %148, %149 : vector<16x128xf32>
    %c2_90 = arith.constant 2 : index
    %c0_91 = arith.constant 0 : index
    %c0_92 = arith.constant 0 : index
    %151 = vector.load %arg11[%c2_90, %c0_91, %c0_92] : memref<4x1x128xf32, #tpu.memory_space<vmem>>, vector<1x1x128xf32>
    %152 = vector.shape_cast %151 : vector<1x1x128xf32> to vector<1x128xf32>
    %c2_93 = arith.constant 2 : index
    %c0_94 = arith.constant 0 : index
    %c0_95 = arith.constant 0 : index
    %153 = vector.load %arg12[%c2_93, %c0_94, %c0_95] : memref<4x1x128xf32, #tpu.memory_space<vmem>>, vector<1x1x128xf32>
    %154 = vector.shape_cast %153 : vector<1x1x128xf32> to vector<1x128xf32>
    %cst_96 = arith.constant dense<0.000000e+00> : vector<16xf32>
    %155 = vector.multi_reduction <add>, %150, %cst_96 [1] : vector<16x128xf32> to vector<16xf32>
    %156 = vector.shape_cast %155 : vector<16xf32> to vector<16x1xf32>
    %cst_97 = arith.constant 1.280000e+02 : f32
    %157 = vector.broadcast %cst_97 : f32 to vector<16x1xf32>
    %158 = arith.divf %156, %157 : vector<16x1xf32>
    %159 = vector.broadcast %158 : vector<16x1xf32> to vector<16x128xf32>
    %160 = arith.subf %150, %159 : vector<16x128xf32>
    %161 = arith.mulf %160, %160 : vector<16x128xf32>
    %cst_98 = arith.constant dense<0.000000e+00> : vector<16xf32>
    %162 = vector.multi_reduction <add>, %161, %cst_98 [1] : vector<16x128xf32> to vector<16xf32>
    %163 = vector.shape_cast %162 : vector<16xf32> to vector<16x1xf32>
    %cst_99 = arith.constant 1.280000e+02 : f32
    %164 = vector.broadcast %cst_99 : f32 to vector<16x1xf32>
    %165 = arith.divf %163, %164 : vector<16x1xf32>
    %cst_100 = arith.constant 9.99999974E-6 : f32
    %166 = vector.broadcast %cst_100 : f32 to vector<16x1xf32>
    %167 = arith.addf %165, %166 : vector<16x1xf32>
    %168 = math.rsqrt %167 : vector<16x1xf32>
    %169 = vector.broadcast %168 : vector<16x1xf32> to vector<16x128xf32>
    %170 = arith.mulf %160, %169 : vector<16x128xf32>
    %171 = vector.broadcast %152 : vector<1x128xf32> to vector<16x128xf32>
    %172 = arith.mulf %170, %171 : vector<16x128xf32>
    %173 = vector.broadcast %154 : vector<1x128xf32> to vector<16x128xf32>
    %174 = arith.addf %172, %173 : vector<16x128xf32>
    %175 = arith.addf %2, %85 : vector<16x128xf32>
    %176 = vector.broadcast %4 : vector<16x1xf32> to vector<16x128xf32>
    %177 = arith.mulf %175, %176 : vector<16x128xf32>
    %c3 = arith.constant 3 : index
    %c0_101 = arith.constant 0 : index
    %c0_102 = arith.constant 0 : index
    %178 = vector.load %arg11[%c3, %c0_101, %c0_102] : memref<4x1x128xf32, #tpu.memory_space<vmem>>, vector<1x1x128xf32>
    %179 = vector.shape_cast %178 : vector<1x1x128xf32> to vector<1x128xf32>
    %c3_103 = arith.constant 3 : index
    %c0_104 = arith.constant 0 : index
    %c0_105 = arith.constant 0 : index
    %180 = vector.load %arg12[%c3_103, %c0_104, %c0_105] : memref<4x1x128xf32, #tpu.memory_space<vmem>>, vector<1x1x128xf32>
    %181 = vector.shape_cast %180 : vector<1x1x128xf32> to vector<1x128xf32>
    %cst_106 = arith.constant dense<0.000000e+00> : vector<16xf32>
    %182 = vector.multi_reduction <add>, %177, %cst_106 [1] : vector<16x128xf32> to vector<16xf32>
    %183 = vector.shape_cast %182 : vector<16xf32> to vector<16x1xf32>
    %cst_107 = arith.constant 1.280000e+02 : f32
    %184 = vector.broadcast %cst_107 : f32 to vector<16x1xf32>
    %185 = arith.divf %183, %184 : vector<16x1xf32>
    %186 = vector.broadcast %185 : vector<16x1xf32> to vector<16x128xf32>
    %187 = arith.subf %177, %186 : vector<16x128xf32>
    %188 = arith.mulf %187, %187 : vector<16x128xf32>
    %cst_108 = arith.constant dense<0.000000e+00> : vector<16xf32>
    %189 = vector.multi_reduction <add>, %188, %cst_108 [1] : vector<16x128xf32> to vector<16xf32>
    %190 = vector.shape_cast %189 : vector<16xf32> to vector<16x1xf32>
    %cst_109 = arith.constant 1.280000e+02 : f32
    %191 = vector.broadcast %cst_109 : f32 to vector<16x1xf32>
    %192 = arith.divf %190, %191 : vector<16x1xf32>
    %cst_110 = arith.constant 9.99999974E-6 : f32
    %193 = vector.broadcast %cst_110 : f32 to vector<16x1xf32>
    %194 = arith.addf %192, %193 : vector<16x1xf32>
    %195 = math.rsqrt %194 : vector<16x1xf32>
    %196 = vector.broadcast %195 : vector<16x1xf32> to vector<16x128xf32>
    %197 = arith.mulf %187, %196 : vector<16x128xf32>
    %198 = vector.broadcast %179 : vector<1x128xf32> to vector<16x128xf32>
    %199 = arith.mulf %197, %198 : vector<16x128xf32>
    %200 = vector.broadcast %181 : vector<1x128xf32> to vector<16x128xf32>
    %201 = arith.addf %199, %200 : vector<16x128xf32>
    %202 = arith.addf %119, %146 : vector<16x128xf32>
    %203 = vector.broadcast %3 : vector<16x1xf32> to vector<16x128xf32>
    %204 = arith.mulf %202, %203 : vector<16x128xf32>
    %205 = arith.addf %174, %201 : vector<16x128xf32>
    %206 = vector.broadcast %4 : vector<16x1xf32> to vector<16x128xf32>
    %207 = arith.mulf %205, %206 : vector<16x128xf32>
    %208 = arith.addf %204, %207 : vector<16x128xf32>
    %c0_111 = arith.constant 0 : index
    %c0_112 = arith.constant 0 : index
    %209 = vector.load %arg13[%c0_111, %c0_112] : memref<16x128xf32, #tpu.memory_space<vmem>>, vector<16x128xf32>
    tpu.vector_store %arg13[%c0_111, %c0_112], %208 {strides = array<i32>} : memref<16x128xf32, #tpu.memory_space<vmem>>, vector<16x128xf32>,
    return
  }
  func.func @transform_0(%arg0: i32) -> (i32, i32) {
    %c0_i32 = arith.constant 0 : i32
    %c0_i32_0 = arith.constant 0 : i32
    return %arg0, %c0_i32 : i32, i32
  }
  func.func @transform_1(%arg0: i32) -> (i32, i32) {
    %c0_i32 = arith.constant 0 : i32
    %c0_i32_0 = arith.constant 0 : i32
    return %arg0, %c0_i32 : i32, i32
  }
  func.func @transform_2(%arg0: i32) -> (i32, i32) {
    %c0_i32 = arith.constant 0 : i32
    %c0_i32_0 = arith.constant 0 : i32
    return %arg0, %c0_i32 : i32, i32
  }
  func.func @transform_3(%arg0: i32) -> (i32, i32) {
    %c0_i32 = arith.constant 0 : i32
    %c0_i32_0 = arith.constant 0 : i32
    return %arg0, %c0_i32 : i32, i32
  }
  func.func @transform_4(%arg0: i32) -> (i32, i32) {
    %c0_i32 = arith.constant 0 : i32
    %c0_i32_0 = arith.constant 0 : i32
    return %arg0, %c0_i32 : i32, i32
  }
  func.func @transform_5(%arg0: i32) -> (i32, i32, i32) {
    %c0_i32 = arith.constant 0 : i32
    %c0_i32_0 = arith.constant 0 : i32
    %c0_i32_1 = arith.constant 0 : i32
    %c0_i32_2 = arith.constant 0 : i32
    return %c0_i32, %c0_i32_0, %c0_i32_1 : i32, i32, i32
  }
  func.func @transform_6(%arg0: i32) -> (i32, i32, i32) {
    %c0_i32 = arith.constant 0 : i32
    %c0_i32_0 = arith.constant 0 : i32
    %c0_i32_1 = arith.constant 0 : i32
    %c0_i32_2 = arith.constant 0 : i32
    return %c0_i32, %c0_i32_0, %c0_i32_1 : i32, i32, i32
  }
  func.func @transform_7(%arg0: i32) -> (i32, i32, i32) {
    %c0_i32 = arith.constant 0 : i32
    %c0_i32_0 = arith.constant 0 : i32
    %c0_i32_1 = arith.constant 0 : i32
    %c0_i32_2 = arith.constant 0 : i32
    return %c0_i32, %c0_i32_0, %c0_i32_1 : i32, i32, i32
  }
  func.func @transform_8(%arg0: i32) -> (i32, i32, i32) {
    %c0_i32 = arith.constant 0 : i32
    %c0_i32_0 = arith.constant 0 : i32
    %c0_i32_1 = arith.constant 0 : i32
    %c0_i32_2 = arith.constant 0 : i32
    return %c0_i32, %c0_i32_0, %c0_i32_1 : i32, i32, i32
  }
  func.func @transform_9(%arg0: i32) -> (i32, i32, i32) {
    %c0_i32 = arith.constant 0 : i32
    %c0_i32_0 = arith.constant 0 : i32
    %c0_i32_1 = arith.constant 0 : i32
    %c0_i32_2 = arith.constant 0 : i32
    return %c0_i32, %c0_i32_0, %c0_i32_1 : i32, i32, i32
  }
  func.func @transform_10(%arg0: i32) -> (i32, i32, i32) {
    %c0_i32 = arith.constant 0 : i32
    %c0_i32_0 = arith.constant 0 : i32
    %c0_i32_1 = arith.constant 0 : i32
    %c0_i32_2 = arith.constant 0 : i32
    return %c0_i32, %c0_i32_0, %c0_i32_1 : i32, i32, i32
  }
  func.func @transform_11(%arg0: i32) -> (i32, i32, i32) {
    %c0_i32 = arith.constant 0 : i32
    %c0_i32_0 = arith.constant 0 : i32
    %c0_i32_1 = arith.constant 0 : i32
    %c0_i32_2 = arith.constant 0 : i32
    return %c0_i32, %c0_i32_0, %c0_i32_1 : i32, i32, i32
  }
  func.func @transform_12(%arg0: i32) -> (i32, i32) {
    %c0_i32 = arith.constant 0 : i32
    %c0_i32_0 = arith.constant 0 : i32
    return %arg0, %c0_i32 : i32, i32
  }
}

</mosaic_0001>

<llo_original>
// kernel: abxi_forward.4
$region0: #{abxi_forward.4}
  #allocation0 [shape = 'u32[]', space=smem, size = 0x4, offset = 0x4, fixed_abs, tag = 'smem constant byte address 0x4 - core index']
  #allocation1 [shape = 'u32[144,128]{1,0:T(1,128)}', space=vmem, size = 0x12000, scoped, tag = 'internal scratch']
  %s0 = inlined_call_operand.vmem [shape: f32[3,16,128], index: 0, kind: input, shape index: {}]
  %s1 = inlined_call_operand.vmem [shape: f32[3,16,1], index: 1, kind: input, shape index: {}]
  %s2 = inlined_call_operand.vmem [shape: f32[128,128], index: 2, kind: input, shape index: {}]
  %s3 = inlined_call_operand.vmem [shape: f32[1,128], index: 3, kind: input, shape index: {}]
  %s4 = inlined_call_operand.vmem [shape: f32[128,128], index: 4, kind: input, shape index: {}]
  %s5 = inlined_call_operand.vmem [shape: f32[1,128], index: 5, kind: input, shape index: {}]
  %s6 = inlined_call_operand.vmem [shape: f32[3,128,128], index: 6, kind: input, shape index: {}]
  %s7 = inlined_call_operand.vmem [shape: f32[3,1,128], index: 7, kind: input, shape index: {}]
  %s8 = inlined_call_operand.vmem [shape: f32[3,1,128], index: 8, kind: input, shape index: {}]
  %s9 = inlined_call_operand.vmem [shape: f32[3,16,128], index: 9, kind: output, shape index: {}]
  %s10 = sld [smem:[#allocation0]]
  $region69: #{abxi_forward.4} parent=0
    _
  %s12 = ssub.s32 1, %s10
  %s13 = scalar_select 0, %s12, %s10
  loop: start=0, step=1, limit=5
  $region2: #{abxi_forward.4} parent=0 // loop_pre_header
    _
  $region3: #{abxi_forward.4} parent=0 // loop_header
    %s15 = sphi 0, %s19
    %p16 = scmp.ge.s32.totalorder %s15, 5
    %s22 = sphi 0, %s34
    %s23 = sphi 0, %s30
    %s24 = sphi 0, %s22
    %s25 = sphi 0, %s23
    %s26 = sphi 0, %s24
    %s27 = sphi 0, %s25
    %s39 = sphi 0, %s41
    %s42 = sphi 0, %s39
    %s43 = sphi 0, %s42
    %s59 = sphi 0, %s43
    %s67 = sphi 0, %s69
    %s70 = sphi 0, %s67
    %s71 = sphi 0, %s70
    %s87 = sphi 0, %s71
    %s91 = sphi 0, %s91
    %s93 = sphi 0, %s91
    %s94 = sphi 0, %s93
    %s108 = sphi 0, %s94
    %s112 = sphi 0, %s112
    %s114 = sphi 0, %s112
    %s115 = sphi 0, %s114
    %s129 = sphi 0, %s115
    %s133 = sphi 0, %s133
    %s135 = sphi 0, %s133
    %s136 = sphi 0, %s135
    %s150 = sphi 0, %s136
    %s154 = sphi 0, %s154
    %s156 = sphi 0, %s154
    %s157 = sphi 0, %s156
    %s171 = sphi 0, %s157
    %s177 = sphi 0, %s179
    %s180 = sphi 0, %s177
    %s181 = sphi 0, %s180
    %s197 = sphi 0, %s181
    %s203 = sphi 0, %s205
    %s206 = sphi 0, %s203
    %s207 = sphi 0, %s206
    %s223 = sphi 0, %s207
    %s229 = sphi 0, %s231
    %s232 = sphi 0, %s229
    %s233 = sphi 0, %s232
    %s249 = sphi 0, %s233
    %s257 = sphi 0, %s259
    %s260 = sphi 0, %s257
    %s261 = sphi 0, %s260
    %s277 = sphi 0, %s261
  $region4: #{abxi_forward.4} parent=0 // loop_header_branch
    %18 = sbr.rel (%p16) target = $region8
  $region5: #{abxi_forward.4} parent=0 // loop_body
    %s20 = ssub.s32 %s15, 1
    %s21 = ssub.s32 %s15, 2
    %s28 = sadd.s32 1, %s23
    %p29 = scmp.ge.s32.totalorder %s28, 1
    %s30 = scalar_select %p29, 0, %s28
    %s31 = sadd.s32 1, %s22
    %s32 = scalar_select %p29, %s31, %s22
    %p33 = scmp.ge.s32.totalorder %s32, 3
    %s34 = scalar_select %p33, 0, %s32
    %s35 = ssub.s32 %s22, %s34
    %s36 = ssub.s32 %s23, %s30
    %s37 = sor.u32 %s35, %s36
    %p38 = scmp.eq.s32.totalorder %s37, 0
    %s40 = sadd.s32 %s39, 1
    %s41 = scalar_select %p38, %s39, %s40
    %p44 = pneg %p38
    %p45 = scmp.eq.s32.totalorder %s15, 2
    %p46 = por %p44, %p45
    %p47 = scmp.ne.s32.totalorder %s39, %s42
    %p48 = scmp.eq.s32.totalorder %s15, 0
    %p49 = por %p47, %p48
    %p50 = scmp.ne.s32.totalorder %s39, %s42
    %p51 = scmp.eq.s32.totalorder %s20, 2
    %p52 = por %p50, %p51
    %p53 = scmp.ne.s32.totalorder %s42, %s43
    %p54 = scmp.eq.s32.totalorder %s20, 0
    %p55 = por %p53, %p54
    %p56 = scmp.ne.s32.totalorder %s42, %s43
    %p57 = scmp.eq.s32.totalorder %s21, 2
    %p58 = por %p56, %p57
    %p60 = scmp.ne.s32.totalorder %s43, %s59
    %p61 = scmp.eq.s32.totalorder %s21, 0
    %p62 = por %p60, %p61
    %s63 = ssub.s32 %s22, %s34
    %s64 = ssub.s32 %s23, %s30
    %s65 = sor.u32 %s63, %s64
    %p66 = scmp.eq.s32.totalorder %s65, 0
    %s68 = sadd.s32 %s67, 1
    %s69 = scalar_select %p66, %s67, %s68
    %p72 = pneg %p66
    %p73 = scmp.eq.s32.totalorder %s15, 2
    %p74 = por %p72, %p73
    %p75 = scmp.ne.s32.totalorder %s67, %s70
    %p76 = scmp.eq.s32.totalorder %s15, 0
    %p77 = por %p75, %p76
    %p78 = scmp.ne.s32.totalorder %s67, %s70
    %p79 = scmp.eq.s32.totalorder %s20, 2
    %p80 = por %p78, %p79
    %p81 = scmp.ne.s32.totalorder %s70, %s71
    %p82 = scmp.eq.s32.totalorder %s20, 0
    %p83 = por %p81, %p82
    %p84 = scmp.ne.s32.totalorder %s70, %s71
    %p85 = scmp.eq.s32.totalorder %s21, 2
    %p86 = por %p84, %p85
    %p88 = scmp.ne.s32.totalorder %s71, %s87
    %p89 = scmp.eq.s32.totalorder %s21, 0
    %p90 = por %p88, %p89
    %s92 = sadd.s32 %s91, 1
    %p95 = scmp.eq.s32.totalorder %s15, 2
    %p96 = scmp.ne.s32.totalorder %s91, %s93
    %p97 = scmp.eq.s32.totalorder %s15, 0
    %p98 = por %p96, %p97
    %p99 = scmp.ne.s32.totalorder %s91, %s93
    %p100 = scmp.eq.s32.totalorder %s20, 2
    %p101 = por %p99, %p100
    %p102 = scmp.ne.s32.totalorder %s93, %s94
    %p103 = scmp.eq.s32.totalorder %s20, 0
    %p104 = por %p102, %p103
    %p105 = scmp.ne.s32.totalorder %s93, %s94
    %p106 = scmp.eq.s32.totalorder %s21, 2
    %p107 = por %p105, %p106
    %p109 = scmp.ne.s32.totalorder %s94, %s108
    %p110 = scmp.eq.s32.totalorder %s21, 0
    %p111 = por %p109, %p110
    %s113 = sadd.s32 %s112, 1
    %p116 = scmp.eq.s32.totalorder %s15, 2
    %p117 = scmp.ne.s32.totalorder %s112, %s114
    %p118 = scmp.eq.s32.totalorder %s15, 0
    %p119 = por %p117, %p118
    %p120 = scmp.ne.s32.totalorder %s112, %s114
    %p121 = scmp.eq.s32.totalorder %s20, 2
    %p122 = por %p120, %p121
    %p123 = scmp.ne.s32.totalorder %s114, %s115
    %p124 = scmp.eq.s32.totalorder %s20, 0
    %p125 = por %p123, %p124
    %p126 = scmp.ne.s32.totalorder %s114, %s115
    %p127 = scmp.eq.s32.totalorder %s21, 2
    %p128 = por %p126, %p127
    %p130 = scmp.ne.s32.totalorder %s115, %s129
    %p131 = scmp.eq.s32.totalorder %s21, 0
    %p132 = por %p130, %p131
    %s134 = sadd.s32 %s133, 1
    %p137 = scmp.eq.s32.totalorder %s15, 2
    %p138 = scmp.ne.s32.totalorder %s133, %s135
    %p139 = scmp.eq.s32.totalorder %s15, 0
    %p140 = por %p138, %p139
    %p141 = scmp.ne.s32.totalorder %s133, %s135
    %p142 = scmp.eq.s32.totalorder %s20, 2
    %p143 = por %p141, %p142
    %p144 = scmp.ne.s32.totalorder %s135, %s136
    %p145 = scmp.eq.s32.totalorder %s20, 0
    %p146 = por %p144, %p145
    %p147 = scmp.ne.s32.totalorder %s135, %s136
    %p148 = scmp.eq.s32.totalorder %s21, 2
    %p149 = por %p147, %p148
    %p151 = scmp.ne.s32.totalorder %s136, %s150
    %p152 = scmp.eq.s32.totalorder %s21, 0
    %p153 = por %p151, %p152
    %s155 = sadd.s32 %s154, 1
    %p158 = scmp.eq.s32.totalorder %s15, 2
    %p159 = scmp.ne.s32.totalorder %s154, %s156
    %p160 = scmp.eq.s32.totalorder %s15, 0
    %p161 = por %p159, %p160
    %p162 = scmp.ne.s32.totalorder %s154, %s156
    %p163 = scmp.eq.s32.totalorder %s20, 2
    %p164 = por %p162, %p163
    %p165 = scmp.ne.s32.totalorder %s156, %s157
    %p166 = scmp.eq.s32.totalorder %s20, 0
    %p167 = por %p165, %p166
    %p168 = scmp.ne.s32.totalorder %s156, %s157
    %p169 = scmp.eq.s32.totalorder %s21, 2
    %p170 = por %p168, %p169
    %p172 = scmp.ne.s32.totalorder %s157, %s171
    %p173 = scmp.eq.s32.totalorder %s21, 0
    %p174 = por %p172, %p173
    %s175 = ssub.s32 %s22, %s34
    %p176 = scmp.eq.s32.totalorder %s175, 0
    %s178 = sadd.s32 %s177, 1
    %s179 = scalar_select %p176, %s177, %s178
    %p182 = pneg %p176
    %p183 = scmp.eq.s32.totalorder %s15, 2
    %p184 = por %p182, %p183
    %p185 = scmp.ne.s32.totalorder %s177, %s180
    %p186 = scmp.eq.s32.totalorder %s15, 0
    %p187 = por %p185, %p186
    %p188 = scmp.ne.s32.totalorder %s177, %s180
    %p189 = scmp.eq.s32.totalorder %s20, 2
    %p190 = por %p188, %p189
    %p191 = scmp.ne.s32.totalorder %s180, %s181
    %p192 = scmp.eq.s32.totalorder %s20, 0
    %p193 = por %p191, %p192
    %p194 = scmp.ne.s32.totalorder %s180, %s181
    %p195 = scmp.eq.s32.totalorder %s21, 2
    %p196 = por %p194, %p195
    %p198 = scmp.ne.s32.totalorder %s181, %s197
    %p199 = scmp.eq.s32.totalorder %s21, 0
    %p200 = por %p198, %p199
    %s201 = ssub.s32 %s22, %s34
    %p202 = scmp.eq.s32.totalorder %s201, 0
    %s204 = sadd.s32 %s203, 1
    %s205 = scalar_select %p202, %s203, %s204
    %p208 = pneg %p202
    %p209 = scmp.eq.s32.totalorder %s15, 2
    %p210 = por %p208, %p209
    %p211 = scmp.ne.s32.totalorder %s203, %s206
    %p212 = scmp.eq.s32.totalorder %s15, 0
    %p213 = por %p211, %p212
    %p214 = scmp.ne.s32.totalorder %s203, %s206
    %p215 = scmp.eq.s32.totalorder %s20, 2
    %p216 = por %p214, %p215
    %p217 = scmp.ne.s32.totalorder %s206, %s207
    %p218 = scmp.eq.s32.totalorder %s20, 0
    %p219 = por %p217, %p218
    %p220 = scmp.ne.s32.totalorder %s206, %s207
    %p221 = scmp.eq.s32.totalorder %s21, 2
    %p222 = por %p220, %p221
    %p224 = scmp.ne.s32.totalorder %s207, %s223
    %p225 = scmp.eq.s32.totalorder %s21, 0
    %p226 = por %p224, %p225
    %s227 = ssub.s32 %s22, %s34
    %p228 = scmp.eq.s32.totalorder %s227, 0
    %s230 = sadd.s32 %s229, 1
    %s231 = scalar_select %p228, %s229, %s230
    %p234 = pneg %p228
    %p235 = scmp.eq.s32.totalorder %s15, 2
    %p236 = por %p234, %p235
    %p237 = scmp.ne.s32.totalorder %s229, %s232
    %p238 = scmp.eq.s32.totalorder %s15, 0
    %p239 = por %p237, %p238
    %p240 = scmp.ne.s32.totalorder %s229, %s232
    %p241 = scmp.eq.s32.totalorder %s20, 2
    %p242 = por %p240, %p241
    %p243 = scmp.ne.s32.totalorder %s232, %s233
    %p244 = scmp.eq.s32.totalorder %s20, 0
    %p245 = por %p243, %p244
    %p246 = scmp.ne.s32.totalorder %s232, %s233
    %p247 = scmp.eq.s32.totalorder %s21, 2
    %p248 = por %p246, %p247
    %p250 = scmp.ne.s32.totalorder %s233, %s249
    %p251 = scmp.eq.s32.totalorder %s21, 0
    %p252 = por %p250, %p251
    %s253 = ssub.s32 %s22, %s34
    %s254 = ssub.s32 %s23, %s30
    %s255 = sor.u32 %s253, %s254
    %p256 = scmp.eq.s32.totalorder %s255, 0
    %s258 = sadd.s32 %s257, 1
    %s259 = scalar_select %p256, %s257, %s258
    %p262 = pneg %p256
    %p263 = scmp.eq.s32.totalorder %s15, 2
    %p264 = por %p262, %p263
    %p265 = scmp.ne.s32.totalorder %s257, %s260
    %p266 = scmp.eq.s32.totalorder %s15, 0
    %p267 = por %p265, %p266
    %p268 = scmp.ne.s32.totalorder %s257, %s260
    %p269 = scmp.eq.s32.totalorder %s20, 2
    %p270 = por %p268, %p269
    %p271 = scmp.ne.s32.totalorder %s260, %s261
    %p272 = scmp.eq.s32.totalorder %s20, 0
    %p273 = por %p271, %p272
    %p274 = scmp.ne.s32.totalorder %s260, %s261
    %p275 = scmp.eq.s32.totalorder %s21, 2
    %p276 = por %p274, %p275
    %p278 = scmp.ne.s32.totalorder %s261, %s277
    %p279 = scmp.eq.s32.totalorder %s21, 0
    %p280 = por %p278, %p279
    %p281 = scmp.le.s32.totalorder 1, %s15
    %p282 = scmp.lt.s32.totalorder %s15, 4
    %p283 = pnand %p281, %p282
    %p284 = pneg %p283
    // Predicated region
    $region9: #{abxi_forward.4} parent=5 // pred_check
      _
    $region10: #{abxi_forward.4} parent=5 // pred_check_branch
      %286 = sbr.rel (%p283) target = $region12
    $region11: #{abxi_forward.4} parent=5 // pred_region
      %s287 = ssub.s32 %s15, 1
      // Predicated region
      $region13: #{abxi_forward.4} parent=11 // pred_check
        %p288 = pneg %p104
      $region14: #{abxi_forward.4} parent=11 // pred_check_branch
        %290 = sbr.rel (%p288) target = $region16
      $region15: #{abxi_forward.4} parent=11 // pred_region
        _
      $region16: #{abxi_forward.4} parent=11 // pred_fallthru
        _
      // Predicated region
      $region17: #{abxi_forward.4} parent=11 // pred_check
        %p291 = pneg %p125
      $region18: #{abxi_forward.4} parent=11 // pred_check_branch
        %293 = sbr.rel (%p291) target = $region20
      $region19: #{abxi_forward.4} parent=11 // pred_region
        _
      $region20: #{abxi_forward.4} parent=11 // pred_fallthru
        _
      // Predicated region
      $region21: #{abxi_forward.4} parent=11 // pred_check
        %p294 = pneg %p146
      $region22: #{abxi_forward.4} parent=11 // pred_check_branch
        %296 = sbr.rel (%p294) target = $region24
      $region23: #{abxi_forward.4} parent=11 // pred_region
        _
      $region24: #{abxi_forward.4} parent=11 // pred_fallthru
        _
      // Predicated region
      $region25: #{abxi_forward.4} parent=11 // pred_check
        %p297 = pneg %p167
      $region26: #{abxi_forward.4} parent=11 // pred_check_branch
        %299 = sbr.rel (%p297) target = $region28
      $region27: #{abxi_forward.4} parent=11 // pred_region
        _
      $region28: #{abxi_forward.4} parent=11 // pred_fallthru
        _
    $region12: #{abxi_forward.4} parent=5 // pred_fallthru
      _
    %p300 = scmp.lt.s32.totalorder %s15, 3
    // Predicated region
    $region29: #{abxi_forward.4} parent=5 // pred_check
      %p301 = pneg %p300
    $region30: #{abxi_forward.4} parent=5 // pred_check_branch
      %303 = sbr.rel (%p301) target = $region32
    $region31: #{abxi_forward.4} parent=5 // pred_region
      // Predicated region
      $region33: #{abxi_forward.4} parent=31 // pred_check
        %p304 = pneg %p49
      $region34: #{abxi_forward.4} parent=31 // pred_check_branch
        %306 = sbr.rel (%p304) target = $region36
      $region35: #{abxi_forward.4} parent=31 // pred_region
        %s307 = smul.u32 2, %s23
        %p308 = scmp.lt.s32.totalorder %s22, 2
        %s309 = scalar_select %p308, %s22, 2
        %p310 = scmp.lt.s32.totalorder %s307, 1
        %s311 = scalar_select %p310, %s307, 1
        %s312 = smul.addr %s309, 2
        %s313 = sadd.s32 %s311, %s312
        %s314 = smul.addr %s313, 8
        %s315 = scalar_lea.vmem %s0, %s314
        %s316 = smul.u32 2, %s23
      $region36: #{abxi_forward.4} parent=31 // pred_fallthru
        _
      // Predicated region
      $region37: #{abxi_forward.4} parent=31 // pred_check
        %p317 = pneg %p77
      $region38: #{abxi_forward.4} parent=31 // pred_check_branch
        %319 = sbr.rel (%p317) target = $region40
      $region39: #{abxi_forward.4} parent=31 // pred_region
        %s320 = smul.u32 2, %s23
        %p321 = scmp.lt.s32.totalorder %s22, 2
        %s322 = scalar_select %p321, %s22, 2
        %p323 = scmp.lt.s32.totalorder %s320, 1
        %s324 = scalar_select %p323, %s320, 1
        %s325 = smul.addr %s322, 2
        %s326 = sadd.s32 %s324, %s325
        %s327 = smul.addr %s326, 8
        %s328 = scalar_lea.vmem %s1, %s327
        %s329 = smul.u32 2, %s23
      $region40: #{abxi_forward.4} parent=31 // pred_fallthru
        _
      // Predicated region
      $region41: #{abxi_forward.4} parent=31 // pred_check
        %p330 = pneg %p187
      $region42: #{abxi_forward.4} parent=31 // pred_check_branch
        %332 = sbr.rel (%p330) target = $region44
      $region43: #{abxi_forward.4} parent=31 // pred_region
        %p333 = scmp.lt.s32.totalorder %s22, 2
        %s334 = scalar_select %p333, %s22, 2
        %s335 = smul.addr %s334, 16
        %s336 = smul.addr %s335, 8
        %s337 = scalar_lea.vmem %s6, %s336
      $region44: #{abxi_forward.4} parent=31 // pred_fallthru
        _
      // Predicated region
      $region45: #{abxi_forward.4} parent=31 // pred_check
        %p338 = pneg %p213
      $region46: #{abxi_forward.4} parent=31 // pred_check_branch
        %340 = sbr.rel (%p338) target = $region48
      $region47: #{abxi_forward.4} parent=31 // pred_region
        %p341 = scmp.lt.s32.totalorder %s22, 2
        %s342 = scalar_select %p341, %s22, 2
        %s343 = scalar_lea.vmem %s7, %s342
      $region48: #{abxi_forward.4} parent=31 // pred_fallthru
        _
      // Predicated region
      $region49: #{abxi_forward.4} parent=31 // pred_check
        %p344 = pneg %p239
      $region50: #{abxi_forward.4} parent=31 // pred_check_branch
        %346 = sbr.rel (%p344) target = $region52
      $region51: #{abxi_forward.4} parent=31 // pred_region
        %p347 = scmp.lt.s32.totalorder %s22, 2
        %s348 = scalar_select %p347, %s22, 2
        %s349 = scalar_lea.vmem %s8, %s348
      $region52: #{abxi_forward.4} parent=31 // pred_fallthru
        _
    $region32: #{abxi_forward.4} parent=5 // pred_fallthru
      _
    %p350 = scmp.le.s32.totalorder 1, %s15
    %p351 = scmp.lt.s32.totalorder %s15, 4
    %p352 = pnand %p350, %p351
    %p353 = pneg %p352
    // Predicated region
    $region53: #{abxi_forward.4} parent=5 // pred_check
      _
    $region54: #{abxi_forward.4} parent=5 // pred_check_branch
      %355 = sbr.rel (%p352) target = $region56
    $region55: #{abxi_forward.4} parent=5 // pred_region
      %s356 = ssub.s32 %s15, 1
      %s357 = smul.u32 2, %s25
      %p358 = scmp.lt.s32.totalorder %s24, 2
      %s359 = scalar_select %p358, %s24, 2
      %p360 = scmp.lt.s32.totalorder %s357, 1
      %s361 = scalar_select %p360, %s357, 1
      %s362 = smul.addr %s359, 2
      %s363 = sadd.s32 %s361, %s362
      %s364 = smul.addr %s363, 8
      %s365 = scalar_lea.vmem %s0, %s364
      %p366 = pneg %p55
      %p367 = pneg %p52
      %s368 = smul.u32 2, %s25
      %p369 = scmp.lt.s32.totalorder %s24, 2
      %s370 = scalar_select %p369, %s24, 2
      %p371 = scmp.lt.s32.totalorder %s368, 1
      %s372 = scalar_select %p371, %s368, 1
      %s373 = smul.addr %s370, 2
      %s374 = sadd.s32 %s372, %s373
      %s375 = smul.addr %s374, 8
      %s376 = scalar_lea.vmem %s1, %s375
      %p377 = pneg %p83
      %p378 = pneg %p80
      %p379 = pneg %p104
      %p380 = pneg %p101
      %p381 = pneg %p125
      %p382 = pneg %p122
      %p383 = pneg %p146
      %p384 = pneg %p143
      %p385 = pneg %p167
      %p386 = pneg %p164
      %p387 = scmp.lt.s32.totalorder %s24, 2
      %s388 = scalar_select %p387, %s24, 2
      %s389 = smul.addr %s388, 16
      %s390 = smul.addr %s389, 8
      %s391 = scalar_lea.vmem %s6, %s390
      %p392 = pneg %p193
      %p393 = pneg %p190
      %p394 = scmp.lt.s32.totalorder %s24, 2
      %s395 = scalar_select %p394, %s24, 2
      %s396 = scalar_lea.vmem %s7, %s395
      %p397 = pneg %p219
      %p398 = pneg %p216
      %p399 = scmp.lt.s32.totalorder %s24, 2
      %s400 = scalar_select %p399, %s24, 2
      %s401 = scalar_lea.vmem %s8, %s400
      %p402 = pneg %p245
      %p403 = pneg %p242
      %p404 = pneg %p273
      %p405 = pneg %p270
      %s406 = smul.u32 2, %s25
      %p407 = scmp.lt.s32.totalorder %s24, 2
      %s408 = scalar_select %p407, %s24, 2
      %p409 = scmp.lt.s32.totalorder %s406, 1
      %s410 = scalar_select %p409, %s406, 1
      %s411 = smul.addr %s408, 2
      %s412 = sadd.s32 %s410, %s411
      %s413 = smul.addr %s412, 8
      %s414 = scalar_lea.vmem %s9, %s413
      %s415 = smul.u32 2, %s25
      %p416 = scmp.lt.s32.totalorder %s24, 2
      %s417 = scalar_select %p416, %s24, 2
      %p418 = scmp.lt.s32.totalorder %s415, 1
      %s419 = scalar_select %p418, %s415, 1
      %s420 = smul.addr %s417, 2
      %s421 = sadd.s32 %s419, %s420
      %s422 = smul.addr %s421, 8
      %s423 = scalar_lea.vmem %s0, %s422
      %s424 = smul.u32 2, %s25
      %s425 = smul.u32 2, %s25
      %p426 = scmp.lt.s32.totalorder %s24, 2
      %s427 = scalar_select %p426, %s24, 2
      %p428 = scmp.lt.s32.totalorder %s425, 1
      %s429 = scalar_select %p428, %s425, 1
      %s430 = smul.addr %s427, 2
      %s431 = sadd.s32 %s429, %s430
      %s432 = smul.addr %s431, 8
      %s433 = scalar_lea.vmem %s1, %s432
      %s434 = smul.u32 2, %s25
      %p435 = scmp.lt.s32.totalorder %s24, 2
      %s436 = scalar_select %p435, %s24, 2
      %s437 = smul.addr %s436, 16
      %s438 = smul.addr %s437, 8
      %s439 = scalar_lea.vmem %s6, %s438
      %p440 = scmp.lt.s32.totalorder %s24, 2
      %s441 = scalar_select %p440, %s24, 2
      %s442 = scalar_lea.vmem %s7, %s441
      %p443 = scmp.lt.s32.totalorder %s24, 2
      %s444 = scalar_select %p443, %s24, 2
      %s445 = scalar_lea.vmem %s8, %s444
      %s446 = smul.u32 2, %s25
      %p447 = scmp.lt.s32.totalorder %s24, 2
      %s448 = scalar_select %p447, %s24, 2
      %p449 = scmp.lt.s32.totalorder %s446, 1
      %s450 = scalar_select %p449, %s446, 1
      %s451 = smul.addr %s448, 2
      %s452 = sadd.s32 %s450, %s451
      %s453 = smul.addr %s452, 8
      %s454 = scalar_lea.vmem %s9, %s453
      %s455 = smul.u32 2, %s25
      %v456 = vld [vmem:[%s423] sm:$0xff]
      %v457 = vld [vmem:[%s423 + $0x8] sm:$0xff]
      %v458 = vld [vmem:[%s2] sm:$0xff]
      %v459 = vld [vmem:[%s2 + $0x8] sm:$0xff]
      %v460 = vld [vmem:[%s2 + $0x10] sm:$0xff]
      %v461 = vld [vmem:[%s2 + $0x18] sm:$0xff]
      %v462 = vld [vmem:[%s2 + $0x20] sm:$0xff]
      %v463 = vld [vmem:[%s2 + $0x28] sm:$0xff]
      %v464 = vld [vmem:[%s2 + $0x30] sm:$0xff]
      %v465 = vld [vmem:[%s2 + $0x38] sm:$0xff]
      %v466 = vld [vmem:[%s2 + $0x40] sm:$0xff]
      %v467 = vld [vmem:[%s2 + $0x48] sm:$0xff]
      %v468 = vld [vmem:[%s2 + $0x50] sm:$0xff]
      %v469 = vld [vmem:[%s2 + $0x58] sm:$0xff]
      %v470 = vld [vmem:[%s2 + $0x60] sm:$0xff]
      %v471 = vld [vmem:[%s2 + $0x68] sm:$0xff]
      %v472 = vld [vmem:[%s2 + $0x70] sm:$0xff]
      %v473 = vld [vmem:[%s2 + $0x78] sm:$0xff]
      %v474 = vld [vmem:[%s3] sm:$0x1]
      %v476 = vlaneseq
      %v477 = vshrl.u32 %v476, 7
      %v478 = vsub.s32 0, %v477
      %v479 = vrot.slane %v474, %v478
      %481 = vmatprep.subr.mxu0 0.0
      %482 = vmatpush1.msra.mxu0 %v473
      %483 = vmatprep.subr.mxu0 0.0
      %484 = vmatpush1.msra.mxu0 %v472
      %485 = vmatprep.subr.mxu0 0.0
      %486 = vmatpush1.msra.mxu0 %v471
      %487 = vmatprep.subr.mxu0 0.0
      %488 = vmatpush1.msra.mxu0 %v470
      %489 = vmatprep.subr.mxu0 0.0
      %490 = vmatpush1.msra.mxu0 %v469
      %491 = vmatprep.subr.mxu0 0.0
      %492 = vmatpush1.msra.mxu0 %v468
      %493 = vmatprep.subr.mxu0 0.0
      %494 = vmatpush1.msra.mxu0 %v467
      %495 = vmatprep.subr.mxu0 0.0
      %496 = vmatpush1.msra.mxu0 %v466
      %497 = vmatprep.subr.mxu0 0.0
      %498 = vmatpush1.msra.mxu0 %v465
      %499 = vmatprep.subr.mxu0 0.0
      %500 = vmatpush1.msra.mxu0 %v464
      %501 = vmatprep.subr.mxu0 0.0
      %502 = vmatpush1.msra.mxu0 %v463
      %503 = vmatprep.subr.mxu0 0.0
      %504 = vmatpush1.msra.mxu0 %v462
      %505 = vmatprep.subr.mxu0 0.0
      %506 = vmatpush1.msra.mxu0 %v461
      %507 = vmatprep.subr.mxu0 0.0
      %508 = vmatpush1.msra.mxu0 %v460
      %509 = vmatprep.subr.mxu0 0.0
      %510 = vmatpush1.msra.mxu0 %v459
      %511 = vmatprep.subr.mxu0 0.0
      %512 = vmatpush1.msra.mxu0 %v458
      %513 = vmatprep.subr.mxu0 0.0
      %514 = vmatpush2.msra.mxu0 0.0
      %515 = vmatprep.subr.mxu0 0.0
      %516 = vmatpush2.msra.mxu0 0.0
      %517 = vmatprep.subr.mxu0 0.0
      %518 = vmatpush2.msra.mxu0 0.0
      %519 = vmatprep.subr.mxu0 0.0
      %520 = vmatpush2.msra.mxu0 0.0
      %521 = vmatprep.subr.mxu0 0.0
      %522 = vmatpush2.msra.mxu0 0.0
      %523 = vmatprep.subr.mxu0 0.0
      %524 = vmatpush2.msra.mxu0 0.0
      %525 = vmatprep.subr.mxu0 0.0
      %526 = vmatpush2.msra.mxu0 0.0
      %527 = vmatprep.subr.mxu0 0.0
      %528 = vmatpush2.msra.mxu0 0.0
      %529 = vmatprep.subr.mxu0 0.0
      %530 = vmatpush2.msra.mxu0 0.0
      %531 = vmatprep.subr.mxu0 0.0
      %532 = vmatpush2.msra.mxu0 0.0
      %533 = vmatprep.subr.mxu0 0.0
      %534 = vmatpush2.msra.mxu0 0.0
      %535 = vmatprep.subr.mxu0 0.0
      %536 = vmatpush2.msra.mxu0 0.0
      %537 = vmatprep.subr.mxu0 0.0
      %538 = vmatpush2.msra.mxu0 0.0
      %539 = vmatprep.subr.mxu0 0.0
      %540 = vmatpush2.msra.mxu0 0.0
      %541 = vmatprep.subr.mxu0 0.0
      %542 = vmatpush2.msra.mxu0 0.0
      %543 = vmatprep.subr.mxu0 0.0
      %544 = vmatpush2.msra.mxu0 0.0
      %545 = vmatprep.mubr.f32.mxu0 0.0
      %546 = vmatmul.mubr.f32.gmra.mxu0 %v456
      %v547 = vpop.f32.mrf.mxu0
      %v548 = vadd.f32 %v479, %v547
      %v549 = vpop.f32.mrf.mxu0
      %550 = vmatprep.mubr.f32.mxu0 0.0
      %551 = vmatmul.mubr.f32.gmra.mxu0 %v457
      %v552 = vpop.f32.mrf.mxu0
      %v553 = vadd.f32 %v479, %v552
      %v554 = vpop.f32.mrf.mxu0
      %555 = vdwg.mxu0
      %v556 = vmul.f32 %v548, 0.5
      %v557 = vmul.f32 %v553, 0.5
      %v558 = vmul.f32 %v548, 0.044715
      %v559 = vmul.f32 %v553, 0.044715
      %v560 = vmul.f32 %v558, %v548
      %v561 = vmul.f32 %v559, %v553
      %v562 = vmul.f32 %v560, %v548
      %v563 = vmul.f32 %v561, %v553
      %v564 = vadd.f32 %v548, %v562
      %v565 = vadd.f32 %v553, %v563
      %v566 = vmul.f32 %v564, 0.7978846
      %v567 = vmul.f32 %v565, 0.7978846
      %v568 = vtanh.pop %v566
      %v569 = vtanh.pop %v567
      %v570 = vadd.f32 %v568, 1.0
      %v571 = vadd.f32 %v569, 1.0
      %v572 = vmul.f32 %v556, %v570
      %v573 = vmul.f32 %v557, %v571
      %v574 = vld [vmem:[%s4] sm:$0xff]
      %v575 = vld [vmem:[%s4 + $0x8] sm:$0xff]
      %v576 = vld [vmem:[%s4 + $0x10] sm:$0xff]
      %v577 = vld [vmem:[%s4 + $0x18] sm:$0xff]
      %v578 = vld [vmem:[%s4 + $0x20] sm:$0xff]
      %v579 = vld [vmem:[%s4 + $0x28] sm:$0xff]
      %v580 = vld [vmem:[%s4 + $0x30] sm:$0xff]
      %v581 = vld [vmem:[%s4 + $0x38] sm:$0xff]
      %v582 = vld [vmem:[%s4 + $0x40] sm:$0xff]
      %v583 = vld [vmem:[%s4 + $0x48] sm:$0xff]
      %v584 = vld [vmem:[%s4 + $0x50] sm:$0xff]
      %v585 = vld [vmem:[%s4 + $0x58] sm:$0xff]
      %v586 = vld [vmem:[%s4 + $0x60] sm:$0xff]
      %v587 = vld [vmem:[%s4 + $0x68] sm:$0xff]
      %v588 = vld [vmem:[%s4 + $0x70] sm:$0xff]
      %v589 = vld [vmem:[%s4 + $0x78] sm:$0xff]
      %v590 = vld [vmem:[%s5] sm:$0x1]
      %v592 = vlaneseq
      %v593 = vshrl.u32 %v592, 7
      %v594 = vsub.s32 0, %v593
      %v595 = vrot.slane %v590, %v594
      %597 = vmatprep.subr.mxu0 0.0
      %598 = vmatpush1.msra.mxu0 %v589
      %599 = vmatprep.subr.mxu0 0.0
      %600 = vmatpush1.msra.mxu0 %v588
      %601 = vmatprep.subr.mxu0 0.0
      %602 = vmatpush1.msra.mxu0 %v587
      %603 = vmatprep.subr.mxu0 0.0
      %604 = vmatpush1.msra.mxu0 %v586
      %605 = vmatprep.subr.mxu0 0.0
      %606 = vmatpush1.msra.mxu0 %v585
      %607 = vmatprep.subr.mxu0 0.0
      %608 = vmatpush1.msra.mxu0 %v584
      %609 = vmatprep.subr.mxu0 0.0
      %610 = vmatpush1.msra.mxu0 %v583
      %611 = vmatprep.subr.mxu0 0.0
      %612 = vmatpush1.msra.mxu0 %v582
      %613 = vmatprep.subr.mxu0 0.0
      %614 = vmatpush1.msra.mxu0 %v581
      %615 = vmatprep.subr.mxu0 0.0
      %616 = vmatpush1.msra.mxu0 %v580
      %617 = vmatprep.subr.mxu0 0.0
      %618 = vmatpush1.msra.mxu0 %v579
      %619 = vmatprep.subr.mxu0 0.0
      %620 = vmatpush1.msra.mxu0 %v578
      %621 = vmatprep.subr.mxu0 0.0
      %622 = vmatpush1.msra.mxu0 %v577
      %623 = vmatprep.subr.mxu0 0.0
      %624 = vmatpush1.msra.mxu0 %v576
      %625 = vmatprep.subr.mxu0 0.0
      %626 = vmatpush1.msra.mxu0 %v575
      %627 = vmatprep.subr.mxu0 0.0
      %628 = vmatpush1.msra.mxu0 %v574
      %629 = vmatprep.subr.mxu0 0.0
      %630 = vmatpush2.msra.mxu0 0.0
      %631 = vmatprep.subr.mxu0 0.0
      %632 = vmatpush2.msra.mxu0 0.0
      %633 = vmatprep.subr.mxu0 0.0
      %634 = vmatpush2.msra.mxu0 0.0
      %635 = vmatprep.subr.mxu0 0.0
      %636 = vmatpush2.msra.mxu0 0.0
      %637 = vmatprep.subr.mxu0 0.0
      %638 = vmatpush2.msra.mxu0 0.0
      %639 = vmatprep.subr.mxu0 0.0
      %640 = vmatpush2.msra.mxu0 0.0
      %641 = vmatprep.subr.mxu0 0.0
      %642 = vmatpush2.msra.mxu0 0.0
      %643 = vmatprep.subr.mxu0 0.0
      %644 = vmatpush2.msra.mxu0 0.0
      %645 = vmatprep.subr.mxu0 0.0
      %646 = vmatpush2.msra.mxu0 0.0
      %647 = vmatprep.subr.mxu0 0.0
      %648 = vmatpush2.msra.mxu0 0.0
      %649 = vmatprep.subr.mxu0 0.0
      %650 = vmatpush2.msra.mxu0 0.0
      %651 = vmatprep.subr.mxu0 0.0
      %652 = vmatpush2.msra.mxu0 0.0
      %653 = vmatprep.subr.mxu0 0.0
      %654 = vmatpush2.msra.mxu0 0.0
      %655 = vmatprep.subr.mxu0 0.0
      %656 = vmatpush2.msra.mxu0 0.0
      %657 = vmatprep.subr.mxu0 0.0
      %658 = vmatpush2.msra.mxu0 0.0
      %659 = vmatprep.subr.mxu0 0.0
      %660 = vmatpush2.msra.mxu0 0.0
      %661 = vmatprep.mubr.f32.mxu0 0.0
      %662 = vmatmul.mubr.f32.gmra.mxu0 %v572
      %v663 = vpop.f32.mrf.mxu0
      %v664 = vadd.f32 %v595, %v663
      %v665 = vpop.f32.mrf.mxu0
      %666 = vmatprep.mubr.f32.mxu0 0.0
      %667 = vmatmul.mubr.f32.gmra.mxu0 %v573
      %v668 = vpop.f32.mrf.mxu0
      %v669 = vadd.f32 %v595, %v668
      %v670 = vpop.f32.mrf.mxu0
      %671 = vdwg.mxu0
      %v672 = vld [vmem:[%s439] sm:$0xff]
      %v673 = vld [vmem:[%s439 + $0x8] sm:$0xff]
      %v674 = vld [vmem:[%s439 + $0x10] sm:$0xff]
      %v675 = vld [vmem:[%s439 + $0x18] sm:$0xff]
      %v676 = vld [vmem:[%s439 + $0x20] sm:$0xff]
      %v677 = vld [vmem:[%s439 + $0x28] sm:$0xff]
      %v678 = vld [vmem:[%s439 + $0x30] sm:$0xff]
      %v679 = vld [vmem:[%s439 + $0x38] sm:$0xff]
      %v680 = vld [vmem:[%s439 + $0x40] sm:$0xff]
      %v681 = vld [vmem:[%s439 + $0x48] sm:$0xff]
      %v682 = vld [vmem:[%s439 + $0x50] sm:$0xff]
      %v683 = vld [vmem:[%s439 + $0x58] sm:$0xff]
      %v684 = vld [vmem:[%s439 + $0x60] sm:$0xff]
      %v685 = vld [vmem:[%s439 + $0x68] sm:$0xff]
      %v686 = vld [vmem:[%s439 + $0x70] sm:$0xff]
      %v687 = vld [vmem:[%s439 + $0x78] sm:$0xff]
      %688 = vmatprep.subr.mxu0 0.0
      %689 = vmatpush1.msra.mxu0 %v687
      %690 = vmatprep.subr.mxu0 0.0
      %691 = vmatpush1.msra.mxu0 %v686
      %692 = vmatprep.subr.mxu0 0.0
      %693 = vmatpush1.msra.mxu0 %v685
      %694 = vmatprep.subr.mxu0 0.0
      %695 = vmatpush1.msra.mxu0 %v684
      %696 = vmatprep.subr.mxu0 0.0
      %697 = vmatpush1.msra.mxu0 %v683
      %698 = vmatprep.subr.mxu0 0.0
      %699 = vmatpush1.msra.mxu0 %v682
      %700 = vmatprep.subr.mxu0 0.0
      %701 = vmatpush1.msra.mxu0 %v681
      %702 = vmatprep.subr.mxu0 0.0
      %703 = vmatpush1.msra.mxu0 %v680
      %704 = vmatprep.subr.mxu0 0.0
      %705 = vmatpush1.msra.mxu0 %v679
      %706 = vmatprep.subr.mxu0 0.0
      %707 = vmatpush1.msra.mxu0 %v678
      %708 = vmatprep.subr.mxu0 0.0
      %709 = vmatpush1.msra.mxu0 %v677
      %710 = vmatprep.subr.mxu0 0.0
      %711 = vmatpush1.msra.mxu0 %v676
      %712 = vmatprep.subr.mxu0 0.0
      %713 = vmatpush1.msra.mxu0 %v675
      %714 = vmatprep.subr.mxu0 0.0
      %715 = vmatpush1.msra.mxu0 %v674
      %716 = vmatprep.subr.mxu0 0.0
      %717 = vmatpush1.msra.mxu0 %v673
      %718 = vmatprep.subr.mxu0 0.0
      %719 = vmatpush1.msra.mxu0 %v672
      %720 = vmatprep.subr.mxu0 0.0
      %721 = vmatpush2.msra.mxu0 0.0
      %722 = vmatprep.subr.mxu0 0.0
      %723 = vmatpush2.msra.mxu0 0.0
      %724 = vmatprep.subr.mxu0 0.0
      %725 = vmatpush2.msra.mxu0 0.0
      %726 = vmatprep.subr.mxu0 0.0
      %727 = vmatpush2.msra.mxu0 0.0
      %728 = vmatprep.subr.mxu0 0.0
      %729 = vmatpush2.msra.mxu0 0.0
      %730 = vmatprep.subr.mxu0 0.0
      %731 = vmatpush2.msra.mxu0 0.0
      %732 = vmatprep.subr.mxu0 0.0
      %733 = vmatpush2.msra.mxu0 0.0
      %734 = vmatprep.subr.mxu0 0.0
      %735 = vmatpush2.msra.mxu0 0.0
      %736 = vmatprep.subr.mxu0 0.0
      %737 = vmatpush2.msra.mxu0 0.0
      %738 = vmatprep.subr.mxu0 0.0
      %739 = vmatpush2.msra.mxu0 0.0
      %740 = vmatprep.subr.mxu0 0.0
      %741 = vmatpush2.msra.mxu0 0.0
      %742 = vmatprep.subr.mxu0 0.0
      %743 = vmatpush2.msra.mxu0 0.0
      %744 = vmatprep.subr.mxu0 0.0
      %745 = vmatpush2.msra.mxu0 0.0
      %746 = vmatprep.subr.mxu0 0.0
      %747 = vmatpush2.msra.mxu0 0.0
      %748 = vmatprep.subr.mxu0 0.0
      %749 = vmatpush2.msra.mxu0 0.0
      %750 = vmatprep.subr.mxu0 0.0
      %751 = vmatpush2.msra.mxu0 0.0
      %752 = vmatprep.mubr.f32.mxu0 0.0
      %753 = vmatmul.mubr.f32.gmra.mxu0 %v456
      %v754 = vpop.f32.mrf.mxu0
      %v755 = vadd.f32 0.0, %v754
      %v756 = vpop.f32.mrf.mxu0
      %757 = vmatprep.mubr.f32.mxu0 0.0
      %758 = vmatmul.mubr.f32.gmra.mxu0 %v457
      %v759 = vpop.f32.mrf.mxu0
      %v760 = vadd.f32 0.0, %v759
      %v761 = vpop.f32.mrf.mxu0
      %762 = vdwg.mxu0
      %v763 = vadd.f32 %v456, %v664
      %v764 = vadd.f32 %v457, %v669
      %v765 = vadd.f32 %v763, %v755
      %v766 = vadd.f32 %v764, %v760
      %v767 = vld [vmem:[%s442] sm:$0x1]
      %v768 = vld [vmem:[%s445] sm:$0x1]
      %769 = vadd.xlane.f32.xlu0 %v765
      %v770 = vpop.xlane.xlu0 %769
      %771 = vadd.xlane.f32.xlu0 %v766
      %v772 = vpop.xlane.xlu0 %771
      %v773 = vrcp.pop 128.0
      %v774 = vmul.f32 %v770, %v773
      %v775 = vmul.f32 %v772, %v773
      %v776 = vsub.f32 %v765, %v774
      %v777 = vsub.f32 %v766, %v775
      %v778 = vmul.f32 %v776, %v776
      %v779 = vmul.f32 %v777, %v777
      %780 = vadd.xlane.f32.xlu0 %v778
      %v781 = vpop.xlane.xlu0 %780
      %782 = vadd.xlane.f32.xlu0 %v779
      %v783 = vpop.xlane.xlu0 %782
      %v784 = vmul.f32 %v781, %v773
      %v785 = vmul.f32 %v783, %v773
      %v786 = vadd.f32 %v784, 1e-05
      %v787 = vadd.f32 %v785, 1e-05
      %v788 = vrsqrt.pop %v786
      %v789 = vrsqrt.pop %v787
      %v790 = vmul.f32 %v776, %v788
      %v791 = vmul.f32 %v777, %v789
      %v793 = vlaneseq
      %v794 = vshrl.u32 %v793, 7
      %v795 = vsub.s32 0, %v794
      %v796 = vrot.slane %v767, %v795
      %v798 = vmul.f32 %v790, %v796
      %v799 = vmul.f32 %v791, %v796
      %v801 = vlaneseq
      %v802 = vshrl.u32 %v801, 7
      %v803 = vsub.s32 0, %v802
      %v804 = vrot.slane %v768, %v803
      %v806 = vadd.f32 %v798, %v804
      %v807 = vadd.f32 %v799, %v804
      %v808 = vld [vmem:[%s433] sm:$0xff]
      %v809 = vld [vmem:[%s433 + $0x8] sm:$0xff]
      %811 = vset.pattern.permute.xlu0 0
      %812 = vperm.xlu0 %811, %v808
      %v813 = vpop.permute.xlu0 %812
      %816 = vset.pattern.permute.xlu0 0
      %817 = vperm.xlu0 %816, %v809
      %v818 = vpop.permute.xlu0 %817
      %v820 = vmul.f32 %v806, %v813
      %v821 = vmul.f32 %v807, %v818
      %822 = vst [vmem:[%s454] sm:$0xff] %v820
      %823 = vst [vmem:[%s454 + $0x8] sm:$0xff] %v821
      %s824 = smul.u32 2, %s25
      %p825 = scmp.lt.s32.totalorder %s24, 2
      %s826 = scalar_select %p825, %s24, 2
      %p827 = scmp.lt.s32.totalorder %s824, 1
      %s828 = scalar_select %p827, %s824, 1
      %s829 = smul.addr %s826, 2
      %s830 = sadd.s32 %s828, %s829
      %s831 = smul.addr %s830, 8
      %s832 = scalar_lea.vmem %s9, %s831
      // Predicated region
      $region57: #{abxi_forward.4} parent=55 // pred_check
        %p833 = pneg %p270
      $region58: #{abxi_forward.4} parent=55 // pred_check_branch
        %835 = sbr.rel (%p833) target = $region60
      $region59: #{abxi_forward.4} parent=55 // pred_region
        %s836 = smul.u32 2, %s25
      $region60: #{abxi_forward.4} parent=55 // pred_fallthru
        _
    $region56: #{abxi_forward.4} parent=5 // pred_fallthru
      _
    %p837 = scmp.le.s32.totalorder 2, %s15
    // Predicated region
    $region61: #{abxi_forward.4} parent=5 // pred_check
      %p838 = pneg %p837
    $region62: #{abxi_forward.4} parent=5 // pred_check_branch
      %840 = sbr.rel (%p838) target = $region64
    $region63: #{abxi_forward.4} parent=5 // pred_region
      %s841 = ssub.s32 %s15, 2
      // Predicated region
      $region65: #{abxi_forward.4} parent=63 // pred_check
        %p842 = pneg %p276
      $region66: #{abxi_forward.4} parent=63 // pred_check_branch
        %844 = sbr.rel (%p842) target = $region68
      $region67: #{abxi_forward.4} parent=63 // pred_region
        %s845 = smul.u32 2, %s27
        %p846 = scmp.lt.s32.totalorder %s26, 2
        %s847 = scalar_select %p846, %s26, 2
        %p848 = scmp.lt.s32.totalorder %s845, 1
        %s849 = scalar_select %p848, %s845, 1
        %s850 = smul.addr %s847, 2
        %s851 = sadd.s32 %s849, %s850
        %s852 = smul.addr %s851, 8
        %s853 = scalar_lea.vmem %s9, %s852
      $region68: #{abxi_forward.4} parent=63 // pred_fallthru
        _
    $region64: #{abxi_forward.4} parent=5 // pred_fallthru
      _
  $region6: #{abxi_forward.4} parent=0 // loop_footer
    %s19 = sadd.s32 1, %s15
  $region7: #{abxi_forward.4} parent=0 // loop_footer_branch
    %14 = sbr.rel target = $region3
  $region8: #{abxi_forward.4} parent=0 // loop_exit
    _

// kernel: abxi_forward.3
$region0: #{abxi_forward.3}
  #allocation0 [shape = 'u32[]', space=smem, size = 0x4, offset = 0x4, fixed_abs, tag = 'smem constant byte address 0x4 - core index']
  #allocation1 [shape = 'u32[144,128]{1,0:T(1,128)}', space=vmem, size = 0x12000, scoped, tag = 'internal scratch']
  %s0 = inlined_call_operand.vmem [shape: f32[6,8,128], index: 0, kind: input, shape index: {}]
  %s1 = inlined_call_operand.vmem [shape: f32[6,1,8], index: 1, kind: input, shape index: {}]
  %s2 = inlined_call_operand.vmem [shape: f32[6,8,1], index: 2, kind: input, shape index: {}]
  %s3 = inlined_call_operand.vmem [shape: f32[128,384], index: 3, kind: input, shape index: {}]
  %s4 = inlined_call_operand.vmem [shape: f32[1,384], index: 4, kind: input, shape index: {}]
  %s5 = inlined_call_operand.vmem [shape: f32[128,128], index: 5, kind: input, shape index: {}]
  %s6 = inlined_call_operand.vmem [shape: f32[1,128], index: 6, kind: input, shape index: {}]
  %s7 = inlined_call_operand.vmem [shape: f32[6,8,128], index: 7, kind: output, shape index: {}]
  %s8 = sld [smem:[#allocation0]]
  $region61: #{abxi_forward.3} parent=0
    _
  %s10 = ssub.s32 1, %s8
  %s11 = scalar_select 0, %s10, %s8
  loop: start=0, step=1, limit=8
  $region2: #{abxi_forward.3} parent=0 // loop_pre_header
    _
  $region3: #{abxi_forward.3} parent=0 // loop_header
    %s13 = sphi 0, %s17
    %p14 = scmp.ge.s32.totalorder %s13, 8
    %s23 = sphi 0, %s25
    %s26 = sphi 0, %s23
    %s27 = sphi 0, %s26
    %s43 = sphi 0, %s27
    %s49 = sphi 0, %s51
    %s52 = sphi 0, %s49
    %s53 = sphi 0, %s52
    %s69 = sphi 0, %s53
    %s75 = sphi 0, %s77
    %s78 = sphi 0, %s75
    %s79 = sphi 0, %s78
    %s95 = sphi 0, %s79
    %s99 = sphi 0, %s99
    %s101 = sphi 0, %s99
    %s102 = sphi 0, %s101
    %s116 = sphi 0, %s102
    %s120 = sphi 0, %s120
    %s122 = sphi 0, %s120
    %s123 = sphi 0, %s122
    %s137 = sphi 0, %s123
    %s141 = sphi 0, %s141
    %s143 = sphi 0, %s141
    %s144 = sphi 0, %s143
    %s158 = sphi 0, %s144
    %s162 = sphi 0, %s162
    %s164 = sphi 0, %s162
    %s165 = sphi 0, %s164
    %s179 = sphi 0, %s165
    %s185 = sphi 0, %s187
    %s188 = sphi 0, %s185
    %s189 = sphi 0, %s188
    %s205 = sphi 0, %s189
  $region4: #{abxi_forward.3} parent=0 // loop_header_branch
    %16 = sbr.rel (%p14) target = $region8
  $region5: #{abxi_forward.3} parent=0 // loop_body
    %s18 = ssub.s32 %s13, 1
    %s19 = ssub.s32 %s13, 2
    %s20 = sadd.s32 %s13, 1
    %s21 = ssub.s32 %s13, %s20
    %p22 = scmp.eq.s32.totalorder %s21, 0
    %s24 = sadd.s32 %s23, 1
    %s25 = scalar_select %p22, %s23, %s24
    %p28 = pneg %p22
    %p29 = scmp.eq.s32.totalorder %s13, 5
    %p30 = por %p28, %p29
    %p31 = scmp.ne.s32.totalorder %s23, %s26
    %p32 = scmp.eq.s32.totalorder %s13, 0
    %p33 = por %p31, %p32
    %p34 = scmp.ne.s32.totalorder %s23, %s26
    %p35 = scmp.eq.s32.totalorder %s18, 5
    %p36 = por %p34, %p35
    %p37 = scmp.ne.s32.totalorder %s26, %s27
    %p38 = scmp.eq.s32.totalorder %s18, 0
    %p39 = por %p37, %p38
    %p40 = scmp.ne.s32.totalorder %s26, %s27
    %p41 = scmp.eq.s32.totalorder %s19, 5
    %p42 = por %p40, %p41
    %p44 = scmp.ne.s32.totalorder %s27, %s43
    %p45 = scmp.eq.s32.totalorder %s19, 0
    %p46 = por %p44, %p45
    %s47 = ssub.s32 %s13, %s20
    %p48 = scmp.eq.s32.totalorder %s47, 0
    %s50 = sadd.s32 %s49, 1
    %s51 = scalar_select %p48, %s49, %s50
    %p54 = pneg %p48
    %p55 = scmp.eq.s32.totalorder %s13, 5
    %p56 = por %p54, %p55
    %p57 = scmp.ne.s32.totalorder %s49, %s52
    %p58 = scmp.eq.s32.totalorder %s13, 0
    %p59 = por %p57, %p58
    %p60 = scmp.ne.s32.totalorder %s49, %s52
    %p61 = scmp.eq.s32.totalorder %s18, 5
    %p62 = por %p60, %p61
    %p63 = scmp.ne.s32.totalorder %s52, %s53
    %p64 = scmp.eq.s32.totalorder %s18, 0
    %p65 = por %p63, %p64
    %p66 = scmp.ne.s32.totalorder %s52, %s53
    %p67 = scmp.eq.s32.totalorder %s19, 5
    %p68 = por %p66, %p67
    %p70 = scmp.ne.s32.totalorder %s53, %s69
    %p71 = scmp.eq.s32.totalorder %s19, 0
    %p72 = por %p70, %p71
    %s73 = ssub.s32 %s13, %s20
    %p74 = scmp.eq.s32.totalorder %s73, 0
    %s76 = sadd.s32 %s75, 1
    %s77 = scalar_select %p74, %s75, %s76
    %p80 = pneg %p74
    %p81 = scmp.eq.s32.totalorder %s13, 5
    %p82 = por %p80, %p81
    %p83 = scmp.ne.s32.totalorder %s75, %s78
    %p84 = scmp.eq.s32.totalorder %s13, 0
    %p85 = por %p83, %p84
    %p86 = scmp.ne.s32.totalorder %s75, %s78
    %p87 = scmp.eq.s32.totalorder %s18, 5
    %p88 = por %p86, %p87
    %p89 = scmp.ne.s32.totalorder %s78, %s79
    %p90 = scmp.eq.s32.totalorder %s18, 0
    %p91 = por %p89, %p90
    %p92 = scmp.ne.s32.totalorder %s78, %s79
    %p93 = scmp.eq.s32.totalorder %s19, 5
    %p94 = por %p92, %p93
    %p96 = scmp.ne.s32.totalorder %s79, %s95
    %p97 = scmp.eq.s32.totalorder %s19, 0
    %p98 = por %p96, %p97
    %s100 = sadd.s32 %s99, 1
    %p103 = scmp.eq.s32.totalorder %s13, 5
    %p104 = scmp.ne.s32.totalorder %s99, %s101
    %p105 = scmp.eq.s32.totalorder %s13, 0
    %p106 = por %p104, %p105
    %p107 = scmp.ne.s32.totalorder %s99, %s101
    %p108 = scmp.eq.s32.totalorder %s18, 5
    %p109 = por %p107, %p108
    %p110 = scmp.ne.s32.totalorder %s101, %s102
    %p111 = scmp.eq.s32.totalorder %s18, 0
    %p112 = por %p110, %p111
    %p113 = scmp.ne.s32.totalorder %s101, %s102
    %p114 = scmp.eq.s32.totalorder %s19, 5
    %p115 = por %p113, %p114
    %p117 = scmp.ne.s32.totalorder %s102, %s116
    %p118 = scmp.eq.s32.totalorder %s19, 0
    %p119 = por %p117, %p118
    %s121 = sadd.s32 %s120, 1
    %p124 = scmp.eq.s32.totalorder %s13, 5
    %p125 = scmp.ne.s32.totalorder %s120, %s122
    %p126 = scmp.eq.s32.totalorder %s13, 0
    %p127 = por %p125, %p126
    %p128 = scmp.ne.s32.totalorder %s120, %s122
    %p129 = scmp.eq.s32.totalorder %s18, 5
    %p130 = por %p128, %p129
    %p131 = scmp.ne.s32.totalorder %s122, %s123
    %p132 = scmp.eq.s32.totalorder %s18, 0
    %p133 = por %p131, %p132
    %p134 = scmp.ne.s32.totalorder %s122, %s123
    %p135 = scmp.eq.s32.totalorder %s19, 5
    %p136 = por %p134, %p135
    %p138 = scmp.ne.s32.totalorder %s123, %s137
    %p139 = scmp.eq.s32.totalorder %s19, 0
    %p140 = por %p138, %p139
    %s142 = sadd.s32 %s141, 1
    %p145 = scmp.eq.s32.totalorder %s13, 5
    %p146 = scmp.ne.s32.totalorder %s141, %s143
    %p147 = scmp.eq.s32.totalorder %s13, 0
    %p148 = por %p146, %p147
    %p149 = scmp.ne.s32.totalorder %s141, %s143
    %p150 = scmp.eq.s32.totalorder %s18, 5
    %p151 = por %p149, %p150
    %p152 = scmp.ne.s32.totalorder %s143, %s144
    %p153 = scmp.eq.s32.totalorder %s18, 0
    %p154 = por %p152, %p153
    %p155 = scmp.ne.s32.totalorder %s143, %s144
    %p156 = scmp.eq.s32.totalorder %s19, 5
    %p157 = por %p155, %p156
    %p159 = scmp.ne.s32.totalorder %s144, %s158
    %p160 = scmp.eq.s32.totalorder %s19, 0
    %p161 = por %p159, %p160
    %s163 = sadd.s32 %s162, 1
    %p166 = scmp.eq.s32.totalorder %s13, 5
    %p167 = scmp.ne.s32.totalorder %s162, %s164
    %p168 = scmp.eq.s32.totalorder %s13, 0
    %p169 = por %p167, %p168
    %p170 = scmp.ne.s32.totalorder %s162, %s164
    %p171 = scmp.eq.s32.totalorder %s18, 5
    %p172 = por %p170, %p171
    %p173 = scmp.ne.s32.totalorder %s164, %s165
    %p174 = scmp.eq.s32.totalorder %s18, 0
    %p175 = por %p173, %p174
    %p176 = scmp.ne.s32.totalorder %s164, %s165
    %p177 = scmp.eq.s32.totalorder %s19, 5
    %p178 = por %p176, %p177
    %p180 = scmp.ne.s32.totalorder %s165, %s179
    %p181 = scmp.eq.s32.totalorder %s19, 0
    %p182 = por %p180, %p181
    %s183 = ssub.s32 %s13, %s20
    %p184 = scmp.eq.s32.totalorder %s183, 0
    %s186 = sadd.s32 %s185, 1
    %s187 = scalar_select %p184, %s185, %s186
    %p190 = pneg %p184
    %p191 = scmp.eq.s32.totalorder %s13, 5
    %p192 = por %p190, %p191
    %p193 = scmp.ne.s32.totalorder %s185, %s188
    %p194 = scmp.eq.s32.totalorder %s13, 0
    %p195 = por %p193, %p194
    %p196 = scmp.ne.s32.totalorder %s185, %s188
    %p197 = scmp.eq.s32.totalorder %s18, 5
    %p198 = por %p196, %p197
    %p199 = scmp.ne.s32.totalorder %s188, %s189
    %p200 = scmp.eq.s32.totalorder %s18, 0
    %p201 = por %p199, %p200
    %p202 = scmp.ne.s32.totalorder %s188, %s189
    %p203 = scmp.eq.s32.totalorder %s19, 5
    %p204 = por %p202, %p203
    %p206 = scmp.ne.s32.totalorder %s189, %s205
    %p207 = scmp.eq.s32.totalorder %s19, 0
    %p208 = por %p206, %p207
    %p209 = scmp.le.s32.totalorder 1, %s13
    %p210 = scmp.lt.s32.totalorder %s13, 7
    %p211 = pnand %p209, %p210
    %p212 = pneg %p211
    // Predicated region
    $region9: #{abxi_forward.3} parent=5 // pred_check
      _
    $region10: #{abxi_forward.3} parent=5 // pred_check_branch
      %214 = sbr.rel (%p211) target = $region12
    $region11: #{abxi_forward.3} parent=5 // pred_region
      %s215 = ssub.s32 %s13, 1
      // Predicated region
      $region13: #{abxi_forward.3} parent=11 // pred_check
        %p216 = pneg %p112
      $region14: #{abxi_forward.3} parent=11 // pred_check_branch
        %218 = sbr.rel (%p216) target = $region16
      $region15: #{abxi_forward.3} parent=11 // pred_region
        _
      $region16: #{abxi_forward.3} parent=11 // pred_fallthru
        _
      // Predicated region
      $region17: #{abxi_forward.3} parent=11 // pred_check
        %p219 = pneg %p133
      $region18: #{abxi_forward.3} parent=11 // pred_check_branch
        %221 = sbr.rel (%p219) target = $region20
      $region19: #{abxi_forward.3} parent=11 // pred_region
        _
      $region20: #{abxi_forward.3} parent=11 // pred_fallthru
        _
      // Predicated region
      $region21: #{abxi_forward.3} parent=11 // pred_check
        %p222 = pneg %p154
      $region22: #{abxi_forward.3} parent=11 // pred_check_branch
        %224 = sbr.rel (%p222) target = $region24
      $region23: #{abxi_forward.3} parent=11 // pred_region
        _
      $region24: #{abxi_forward.3} parent=11 // pred_fallthru
        _
      // Predicated region
      $region25: #{abxi_forward.3} parent=11 // pred_check
        %p225 = pneg %p175
      $region26: #{abxi_forward.3} parent=11 // pred_check_branch
        %227 = sbr.rel (%p225) target = $region28
      $region27: #{abxi_forward.3} parent=11 // pred_region
        _
      $region28: #{abxi_forward.3} parent=11 // pred_fallthru
        _
    $region12: #{abxi_forward.3} parent=5 // pred_fallthru
      _
    %p228 = scmp.lt.s32.totalorder %s13, 6
    // Predicated region
    $region29: #{abxi_forward.3} parent=5 // pred_check
      %p229 = pneg %p228
    $region30: #{abxi_forward.3} parent=5 // pred_check_branch
      %231 = sbr.rel (%p229) target = $region32
    $region31: #{abxi_forward.3} parent=5 // pred_region
      // Predicated region
      $region33: #{abxi_forward.3} parent=31 // pred_check
        %p232 = pneg %p33
      $region34: #{abxi_forward.3} parent=31 // pred_check_branch
        %234 = sbr.rel (%p232) target = $region36
      $region35: #{abxi_forward.3} parent=31 // pred_region
        %p235 = scmp.lt.s32.totalorder %s13, 5
        %s236 = scalar_select %p235, %s13, 5
        %s237 = smul.addr %s236, 8
        %s238 = scalar_lea.vmem %s0, %s237
      $region36: #{abxi_forward.3} parent=31 // pred_fallthru
        _
      // Predicated region
      $region37: #{abxi_forward.3} parent=31 // pred_check
        %p239 = pneg %p59
      $region38: #{abxi_forward.3} parent=31 // pred_check_branch
        %241 = sbr.rel (%p239) target = $region40
      $region39: #{abxi_forward.3} parent=31 // pred_region
        %p242 = scmp.lt.s32.totalorder %s13, 5
        %s243 = scalar_select %p242, %s13, 5
        %s244 = scalar_lea.vmem %s1, %s243
      $region40: #{abxi_forward.3} parent=31 // pred_fallthru
        _
      // Predicated region
      $region41: #{abxi_forward.3} parent=31 // pred_check
        %p245 = pneg %p85
      $region42: #{abxi_forward.3} parent=31 // pred_check_branch
        %247 = sbr.rel (%p245) target = $region44
      $region43: #{abxi_forward.3} parent=31 // pred_region
        %p248 = scmp.lt.s32.totalorder %s13, 5
        %s249 = scalar_select %p248, %s13, 5
        %s250 = smul.addr %s249, 8
        %s251 = scalar_lea.vmem %s2, %s250
      $region44: #{abxi_forward.3} parent=31 // pred_fallthru
        _
    $region32: #{abxi_forward.3} parent=5 // pred_fallthru
      _
    %p252 = scmp.le.s32.totalorder 1, %s13
    %p253 = scmp.lt.s32.totalorder %s13, 7
    %p254 = pnand %p252, %p253
    %p255 = pneg %p254
    // Predicated region
    $region45: #{abxi_forward.3} parent=5 // pred_check
      _
    $region46: #{abxi_forward.3} parent=5 // pred_check_branch
      %257 = sbr.rel (%p254) target = $region48
    $region47: #{abxi_forward.3} parent=5 // pred_region
      %s258 = ssub.s32 %s13, 1
      %p259 = scmp.lt.s32.totalorder %s18, 5
      %s260 = scalar_select %p259, %s18, 5
      %s261 = smul.addr %s260, 8
      %s262 = scalar_lea.vmem %s0, %s261
      %p263 = pneg %p39
      %p264 = pneg %p36
      %p265 = scmp.lt.s32.totalorder %s18, 5
      %s266 = scalar_select %p265, %s18, 5
      %s267 = scalar_lea.vmem %s1, %s266
      %p268 = pneg %p65
      %p269 = pneg %p62
      %p270 = scmp.lt.s32.totalorder %s18, 5
      %s271 = scalar_select %p270, %s18, 5
      %s272 = smul.addr %s271, 8
      %s273 = scalar_lea.vmem %s2, %s272
      %p274 = pneg %p91
      %p275 = pneg %p88
      %p276 = pneg %p112
      %p277 = pneg %p109
      %p278 = pneg %p133
      %p279 = pneg %p130
      %p280 = pneg %p154
      %p281 = pneg %p151
      %p282 = pneg %p175
      %p283 = pneg %p172
      %p284 = pneg %p201
      %p285 = pneg %p198
      %p286 = scmp.lt.s32.totalorder %s18, 5
      %s287 = scalar_select %p286, %s18, 5
      %s288 = smul.addr %s287, 8
      %s289 = scalar_lea.vmem %s7, %s288
      %p290 = scmp.lt.s32.totalorder %s18, 5
      %s291 = scalar_select %p290, %s18, 5
      %s292 = smul.addr %s291, 8
      %s293 = scalar_lea.vmem %s0, %s292
      %p294 = scmp.lt.s32.totalorder %s18, 5
      %s295 = scalar_select %p294, %s18, 5
      %s296 = scalar_lea.vmem %s1, %s295
      %p297 = scmp.lt.s32.totalorder %s18, 5
      %s298 = scalar_select %p297, %s18, 5
      %s299 = smul.addr %s298, 8
      %s300 = scalar_lea.vmem %s2, %s299
      %p301 = scmp.lt.s32.totalorder %s18, 5
      %s302 = scalar_select %p301, %s18, 5
      %s303 = smul.addr %s302, 8
      %s304 = scalar_lea.vmem %s7, %s303
      %v305 = vld [vmem:[%s293] sm:$0xff]
      %v306 = vld [vmem:[%s3] sm:$0xff]
      %v307 = vld [vmem:[%s3 + $0x8] sm:$0xff]
      %v308 = vld [vmem:[%s3 + $0x10] sm:$0xff]
      %v309 = vld [vmem:[%s3 + $0x18] sm:$0xff]
      %v310 = vld [vmem:[%s3 + $0x20] sm:$0xff]
      %v311 = vld [vmem:[%s3 + $0x28] sm:$0xff]
      %v312 = vld [vmem:[%s3 + $0x30] sm:$0xff]
      %v313 = vld [vmem:[%s3 + $0x38] sm:$0xff]
      %v314 = vld [vmem:[%s3 + $0x40] sm:$0xff]
      %v315 = vld [vmem:[%s3 + $0x48] sm:$0xff]
      %v316 = vld [vmem:[%s3 + $0x50] sm:$0xff]
      %v317 = vld [vmem:[%s3 + $0x58] sm:$0xff]
      %v318 = vld [vmem:[%s3 + $0x60] sm:$0xff]
      %v319 = vld [vmem:[%s3 + $0x68] sm:$0xff]
      %v320 = vld [vmem:[%s3 + $0x70] sm:$0xff]
      %v321 = vld [vmem:[%s3 + $0x78] sm:$0xff]
      %v322 = vld [vmem:[%s3 + $0x80] sm:$0xff]
      %v323 = vld [vmem:[%s3 + $0x88] sm:$0xff]
      %v324 = vld [vmem:[%s3 + $0x90] sm:$0xff]
      %v325 = vld [vmem:[%s3 + $0x98] sm:$0xff]
      %v326 = vld [vmem:[%s3 + $0xa0] sm:$0xff]
      %v327 = vld [vmem:[%s3 + $0xa8] sm:$0xff]
      %v328 = vld [vmem:[%s3 + $0xb0] sm:$0xff]
      %v329 = vld [vmem:[%s3 + $0xb8] sm:$0xff]
      %v330 = vld [vmem:[%s3 + $0xc0] sm:$0xff]
      %v331 = vld [vmem:[%s3 + $0xc8] sm:$0xff]
      %v332 = vld [vmem:[%s3 + $0xd0] sm:$0xff]
      %v333 = vld [vmem:[%s3 + $0xd8] sm:$0xff]
      %v334 = vld [vmem:[%s3 + $0xe0] sm:$0xff]
      %v335 = vld [vmem:[%s3 + $0xe8] sm:$0xff]
      %v336 = vld [vmem:[%s3 + $0xf0] sm:$0xff]
      %v337 = vld [vmem:[%s3 + $0xf8] sm:$0xff]
      %v338 = vld [vmem:[%s3 + $0x100] sm:$0xff]
      %v339 = vld [vmem:[%s3 + $0x108] sm:$0xff]
      %v340 = vld [vmem:[%s3 + $0x110] sm:$0xff]
      %v341 = vld [vmem:[%s3 + $0x118] sm:$0xff]
      %v342 = vld [vmem:[%s3 + $0x120] sm:$0xff]
      %v343 = vld [vmem:[%s3 + $0x128] sm:$0xff]
      %v344 = vld [vmem:[%s3 + $0x130] sm:$0xff]
      %v345 = vld [vmem:[%s3 + $0x138] sm:$0xff]
      %v346 = vld [vmem:[%s3 + $0x140] sm:$0xff]
      %v347 = vld [vmem:[%s3 + $0x148] sm:$0xff]
      %v348 = vld [vmem:[%s3 + $0x150] sm:$0xff]
      %v349 = vld [vmem:[%s3 + $0x158] sm:$0xff]
      %v350 = vld [vmem:[%s3 + $0x160] sm:$0xff]
      %v351 = vld [vmem:[%s3 + $0x168] sm:$0xff]
      %v352 = vld [vmem:[%s3 + $0x170] sm:$0xff]
      %v353 = vld [vmem:[%s3 + $0x178] sm:$0xff]
      %v354 = vld [vmem:[%s4] sm:$0x7]
      %v356 = vlaneseq
      %v357 = vshrl.u32 %v356, 7
      %v358 = vsub.s32 0, %v357
      %v359 = vrot.slane %v354, %v358
      %v360 = vlaneseq
      %v361 = vshrl.u32 %v360, 7
      %v362 = vsub.s32 1, %v361
      %v363 = vrot.slane %v354, %v362
      %v364 = vlaneseq
      %v365 = vshrl.u32 %v364, 7
      %v366 = vsub.s32 2, %v365
      %v367 = vrot.slane %v354, %v366
      %371 = vmatprep.subr.mxu0 %v352
      %372 = vmatpush1.msra.mxu0 %v351
      %373 = vmatprep.subr.mxu0 %v349
      %374 = vmatpush1.msra.mxu0 %v348
      %375 = vmatprep.subr.mxu0 %v346
      %376 = vmatpush1.msra.mxu0 %v345
      %377 = vmatprep.subr.mxu0 %v343
      %378 = vmatpush1.msra.mxu0 %v342
      %379 = vmatprep.subr.mxu0 %v340
      %380 = vmatpush1.msra.mxu0 %v339
      %381 = vmatprep.subr.mxu0 %v337
      %382 = vmatpush1.msra.mxu0 %v336
      %383 = vmatprep.subr.mxu0 %v334
      %384 = vmatpush1.msra.mxu0 %v333
      %385 = vmatprep.subr.mxu0 %v331
      %386 = vmatpush1.msra.mxu0 %v330
      %387 = vmatprep.subr.mxu0 %v328
      %388 = vmatpush1.msra.mxu0 %v327
      %389 = vmatprep.subr.mxu0 %v325
      %390 = vmatpush1.msra.mxu0 %v324
      %391 = vmatprep.subr.mxu0 %v322
      %392 = vmatpush1.msra.mxu0 %v321
      %393 = vmatprep.subr.mxu0 %v319
      %394 = vmatpush1.msra.mxu0 %v318
      %395 = vmatprep.subr.mxu0 %v316
      %396 = vmatpush1.msra.mxu0 %v315
      %397 = vmatprep.subr.mxu0 %v313
      %398 = vmatpush1.msra.mxu0 %v312
      %399 = vmatprep.subr.mxu0 %v310
      %400 = vmatpush1.msra.mxu0 %v309
      %401 = vmatprep.subr.mxu0 %v307
      %402 = vmatpush1.msra.mxu0 %v306
      %403 = vmatprep.subr.mxu0 0.0
      %404 = vmatpush2.msra.mxu0 0.0
      %405 = vmatprep.subr.mxu0 0.0
      %406 = vmatpush2.msra.mxu0 0.0
      %407 = vmatprep.subr.mxu0 0.0
      %408 = vmatpush2.msra.mxu0 0.0
      %409 = vmatprep.subr.mxu0 0.0
      %410 = vmatpush2.msra.mxu0 0.0
      %411 = vmatprep.subr.mxu0 0.0
      %412 = vmatpush2.msra.mxu0 0.0
      %413 = vmatprep.subr.mxu0 0.0
      %414 = vmatpush2.msra.mxu0 0.0
      %415 = vmatprep.subr.mxu0 0.0
      %416 = vmatpush2.msra.mxu0 0.0
      %417 = vmatprep.subr.mxu0 0.0
      %418 = vmatpush2.msra.mxu0 0.0
      %419 = vmatprep.subr.mxu0 0.0
      %420 = vmatpush2.msra.mxu0 0.0
      %421 = vmatprep.subr.mxu0 0.0
      %422 = vmatpush2.msra.mxu0 0.0
      %423 = vmatprep.subr.mxu0 0.0
      %424 = vmatpush2.msra.mxu0 0.0
      %425 = vmatprep.subr.mxu0 0.0
      %426 = vmatpush2.msra.mxu0 0.0
      %427 = vmatprep.subr.mxu0 0.0
      %428 = vmatpush2.msra.mxu0 0.0
      %429 = vmatprep.subr.mxu0 0.0
      %430 = vmatpush2.msra.mxu0 0.0
      %431 = vmatprep.subr.mxu0 0.0
      %432 = vmatpush2.msra.mxu0 0.0
      %433 = vmatprep.subr.mxu0 0.0
      %434 = vmatpush2.msra.mxu0 0.0
      %435 = vmatprep.mubr.f32.mxu0 0.0
      %436 = vmatmul.mubr.f32.gmra.mxu0 %v305
      %v437 = vpop.f32.mrf.mxu0
      %v438 = vadd.f32 %v359, %v437
      %v439 = vpop.f32.mrf.mxu0
      %v440 = vadd.f32 %v363, %v439
      %441 = vdwg.mxu0
      %442 = vmatprep.subr.mxu0 0.0
      %443 = vmatpush1.msra.mxu0 %v353
      %444 = vmatprep.subr.mxu0 0.0
      %445 = vmatpush1.msra.mxu0 %v350
      %446 = vmatprep.subr.mxu0 0.0
      %447 = vmatpush1.msra.mxu0 %v347
      %448 = vmatprep.subr.mxu0 0.0
      %449 = vmatpush1.msra.mxu0 %v344
      %450 = vmatprep.subr.mxu0 0.0
      %451 = vmatpush1.msra.mxu0 %v341
      %452 = vmatprep.subr.mxu0 0.0
      %453 = vmatpush1.msra.mxu0 %v338
      %454 = vmatprep.subr.mxu0 0.0
      %455 = vmatpush1.msra.mxu0 %v335
      %456 = vmatprep.subr.mxu0 0.0
      %457 = vmatpush1.msra.mxu0 %v332
      %458 = vmatprep.subr.mxu0 0.0
      %459 = vmatpush1.msra.mxu0 %v329
      %460 = vmatprep.subr.mxu0 0.0
      %461 = vmatpush1.msra.mxu0 %v326
      %462 = vmatprep.subr.mxu0 0.0
      %463 = vmatpush1.msra.mxu0 %v323
      %464 = vmatprep.subr.mxu0 0.0
      %465 = vmatpush1.msra.mxu0 %v320
      %466 = vmatprep.subr.mxu0 0.0
      %467 = vmatpush1.msra.mxu0 %v317
      %468 = vmatprep.subr.mxu0 0.0
      %469 = vmatpush1.msra.mxu0 %v314
      %470 = vmatprep.subr.mxu0 0.0
      %471 = vmatpush1.msra.mxu0 %v311
      %472 = vmatprep.subr.mxu0 0.0
      %473 = vmatpush1.msra.mxu0 %v308
      %474 = vmatprep.subr.mxu0 0.0
      %475 = vmatpush2.msra.mxu0 0.0
      %476 = vmatprep.subr.mxu0 0.0
      %477 = vmatpush2.msra.mxu0 0.0
      %478 = vmatprep.subr.mxu0 0.0
      %479 = vmatpush2.msra.mxu0 0.0
      %480 = vmatprep.subr.mxu0 0.0
      %481 = vmatpush2.msra.mxu0 0.0
      %482 = vmatprep.subr.mxu0 0.0
      %483 = vmatpush2.msra.mxu0 0.0
      %484 = vmatprep.subr.mxu0 0.0
      %485 = vmatpush2.msra.mxu0 0.0
      %486 = vmatprep.subr.mxu0 0.0
      %487 = vmatpush2.msra.mxu0 0.0
      %488 = vmatprep.subr.mxu0 0.0
      %489 = vmatpush2.msra.mxu0 0.0
      %490 = vmatprep.subr.mxu0 0.0
      %491 = vmatpush2.msra.mxu0 0.0
      %492 = vmatprep.subr.mxu0 0.0
      %493 = vmatpush2.msra.mxu0 0.0
      %494 = vmatprep.subr.mxu0 0.0
      %495 = vmatpush2.msra.mxu0 0.0
      %496 = vmatprep.subr.mxu0 0.0
      %497 = vmatpush2.msra.mxu0 0.0
      %498 = vmatprep.subr.mxu0 0.0
      %499 = vmatpush2.msra.mxu0 0.0
      %500 = vmatprep.subr.mxu0 0.0
      %501 = vmatpush2.msra.mxu0 0.0
      %502 = vmatprep.subr.mxu0 0.0
      %503 = vmatpush2.msra.mxu0 0.0
      %504 = vmatprep.subr.mxu0 0.0
      %505 = vmatpush2.msra.mxu0 0.0
      %506 = vmatprep.mubr.f32.mxu0 0.0
      %507 = vmatmul.mubr.f32.gmra.mxu0 %v305
      %v508 = vpop.f32.mrf.mxu0
      %v509 = vadd.f32 %v367, %v508
      %v510 = vpop.f32.mrf.mxu0
      %511 = vdwg.mxu0
      %v512 = vmul.f32 %v438, 0.125
      %514 = vrot.lane.b32.xlu0 %v512, 64
      %v515 = vpop.permute.xlu0 %514
      %v517 = vcombine.high %v512, 0.0
      %v519 = vunpack.c.l.s4 1983009808
      %v520 = vunpack.c.0.s8 %v519
      %v521 = vlaneseq
      %v522 = vshrl.u32 %v521, 7
      %v523 = vsub.s32 %v520, %v522
      %v524 = vrot.slane %v512, %v523
      %v526 = vunpack.c.l.s4 1983009808
      %v527 = vunpack.c.0.s8 %v526
      %v528 = vlaneseq
      %v529 = vshrl.u32 %v528, 7
      %v530 = vsub.s32 %v527, %v529
      %v531 = vrot.slane %v517, %v530
      %v532 = vcombine.high %v515, 0.0
      %v534 = vunpack.c.l.s4 1983009808
      %v535 = vunpack.c.0.s8 %v534
      %v536 = vlaneseq
      %v537 = vshrl.u32 %v536, 7
      %v538 = vsub.s32 %v535, %v537
      %v539 = vrot.slane %v515, %v538
      %v541 = vunpack.c.l.s4 1983009808
      %v542 = vunpack.c.0.s8 %v541
      %v543 = vlaneseq
      %v544 = vshrl.u32 %v543, 7
      %v545 = vsub.s32 %v542, %v544
      %v546 = vrot.slane %v532, %v545
      %v547 = vcombine.low %v524, %v539
      %v548 = vcombine.high %v524, %v539
      %v550 = vunpack.c.l.s4 1934713408
      %v551 = vunpack.c.0.s8 %v550
      %v552 = vlaneseq
      %v553 = vshrl.u32 %v552, 7
      %v554 = vsub.s32 %v551, %v553
      %v555 = vrot.slane %v547, %v554
      %v557 = vunpack.c.l.s4 1934713408
      %v558 = vunpack.c.0.s8 %v557
      %v559 = vlaneseq
      %v560 = vshrl.u32 %v559, 7
      %v561 = vsub.s32 %v558, %v560
      %v562 = vrot.slane %v548, %v561
      %v563 = vcombine.low %v531, %v546
      %v564 = vcombine.high %v531, %v546
      %v566 = vunpack.c.l.s4 1934713408
      %v567 = vunpack.c.0.s8 %v566
      %v568 = vlaneseq
      %v569 = vshrl.u32 %v568, 7
      %v570 = vsub.s32 %v567, %v569
      %v571 = vrot.slane %v563, %v570
      %v573 = vunpack.c.l.s4 1934713408
      %v574 = vunpack.c.0.s8 %v573
      %v575 = vlaneseq
      %v576 = vshrl.u32 %v575, 7
      %v577 = vsub.s32 %v574, %v576
      %v578 = vrot.slane %v564, %v577
      %v579 = vcombine.high %v555, 0.0
      %v580 = vcombine.high %v562, 0.0
      %v581 = vcombine.high %v571, 0.0
      %v582 = vcombine.high %v578, 0.0
      %v583 = vcombine.low %v555, %v562
      %v585 = vunpack.c.l.s4 1983009808
      %v586 = vunpack.c.0.s8 %v585
      %v587 = vlaneseq
      %v588 = vshrl.u32 %v587, 7
      %v589 = vsub.s32 %v586, %v588
      %v590 = vrot.slane %v583, %v589
      %v591 = vcombine.low %v579, %v580
      %v593 = vunpack.c.l.s4 1983009808
      %v594 = vunpack.c.0.s8 %v593
      %v595 = vlaneseq
      %v596 = vshrl.u32 %v595, 7
      %v597 = vsub.s32 %v594, %v596
      %v598 = vrot.slane %v591, %v597
      %v599 = vcombine.low %v571, %v578
      %v601 = vunpack.c.l.s4 1983009808
      %v602 = vunpack.c.0.s8 %v601
      %v603 = vlaneseq
      %v604 = vshrl.u32 %v603, 7
      %v605 = vsub.s32 %v602, %v604
      %v606 = vrot.slane %v599, %v605
      %v607 = vcombine.low %v581, %v582
      %v609 = vunpack.c.l.s4 1983009808
      %v610 = vunpack.c.0.s8 %v609
      %v611 = vlaneseq
      %v612 = vshrl.u32 %v611, 7
      %v613 = vsub.s32 %v610, %v612
      %v614 = vrot.slane %v607, %v613
      %v615 = vcombine.low %v590, %v598
      %v617 = vunpack.c.l.s4 1934713408
      %v618 = vunpack.c.0.s8 %v617
      %v619 = vlaneseq
      %v620 = vshrl.u32 %v619, 7
      %v621 = vsub.s32 %v618, %v620
      %v622 = vrot.slane %v615, %v621
      %v623 = vcombine.low %v606, %v614
      %v625 = vunpack.c.l.s4 1934713408
      %v626 = vunpack.c.0.s8 %v625
      %v627 = vlaneseq
      %v628 = vshrl.u32 %v627, 7
      %v629 = vsub.s32 %v626, %v628
      %v630 = vrot.slane %v623, %v629
      %v631 = vcombine.low %v622, %v630
      %v632 = vcombine.high %v622, %v630
      %634 = vrot.lane.b32.xlu0 %v440, 64
      %v635 = vpop.permute.xlu0 %634
      %v637 = vcombine.high %v440, 0.0
      %v639 = vunpack.c.l.s4 1983009808
      %v640 = vunpack.c.0.s8 %v639
      %v641 = vlaneseq
      %v642 = vshrl.u32 %v641, 7
      %v643 = vsub.s32 %v640, %v642
      %v644 = vrot.slane %v440, %v643
      %v646 = vunpack.c.l.s4 1983009808
      %v647 = vunpack.c.0.s8 %v646
      %v648 = vlaneseq
      %v649 = vshrl.u32 %v648, 7
      %v650 = vsub.s32 %v647, %v649
      %v651 = vrot.slane %v637, %v650
      %v652 = vcombine.high %v635, 0.0
      %v654 = vunpack.c.l.s4 1983009808
      %v655 = vunpack.c.0.s8 %v654
      %v656 = vlaneseq
      %v657 = vshrl.u32 %v656, 7
      %v658 = vsub.s32 %v655, %v657
      %v659 = vrot.slane %v635, %v658
      %v661 = vunpack.c.l.s4 1983009808
      %v662 = vunpack.c.0.s8 %v661
      %v663 = vlaneseq
      %v664 = vshrl.u32 %v663, 7
      %v665 = vsub.s32 %v662, %v664
      %v666 = vrot.slane %v652, %v665
      %v667 = vcombine.low %v644, %v659
      %v668 = vcombine.high %v644, %v659
      %v670 = vunpack.c.l.s4 1934713408
      %v671 = vunpack.c.0.s8 %v670
      %v672 = vlaneseq
      %v673 = vshrl.u32 %v672, 7
      %v674 = vsub.s32 %v671, %v673
      %v675 = vrot.slane %v667, %v674
      %v677 = vunpack.c.l.s4 1934713408
      %v678 = vunpack.c.0.s8 %v677
      %v679 = vlaneseq
      %v680 = vshrl.u32 %v679, 7
      %v681 = vsub.s32 %v678, %v680
      %v682 = vrot.slane %v668, %v681
      %v683 = vcombine.low %v651, %v666
      %v684 = vcombine.high %v651, %v666
      %v686 = vunpack.c.l.s4 1934713408
      %v687 = vunpack.c.0.s8 %v686
      %v688 = vlaneseq
      %v689 = vshrl.u32 %v688, 7
      %v690 = vsub.s32 %v687, %v689
      %v691 = vrot.slane %v683, %v690
      %v693 = vunpack.c.l.s4 1934713408
      %v694 = vunpack.c.0.s8 %v693
      %v695 = vlaneseq
      %v696 = vshrl.u32 %v695, 7
      %v697 = vsub.s32 %v694, %v696
      %v698 = vrot.slane %v684, %v697
      %v699 = vcombine.high %v675, 0.0
      %v700 = vcombine.high %v682, 0.0
      %v701 = vcombine.high %v691, 0.0
      %v702 = vcombine.high %v698, 0.0
      %v703 = vcombine.low %v675, %v682
      %v705 = vunpack.c.l.s4 1983009808
      %v706 = vunpack.c.0.s8 %v705
      %v707 = vlaneseq
      %v708 = vshrl.u32 %v707, 7
      %v709 = vsub.s32 %v706, %v708
      %v710 = vrot.slane %v703, %v709
      %v711 = vcombine.low %v699, %v700
      %v713 = vunpack.c.l.s4 1983009808
      %v714 = vunpack.c.0.s8 %v713
      %v715 = vlaneseq
      %v716 = vshrl.u32 %v715, 7
      %v717 = vsub.s32 %v714, %v716
      %v718 = vrot.slane %v711, %v717
      %v719 = vcombine.low %v691, %v698
      %v721 = vunpack.c.l.s4 1983009808
      %v722 = vunpack.c.0.s8 %v721
      %v723 = vlaneseq
      %v724 = vshrl.u32 %v723, 7
      %v725 = vsub.s32 %v722, %v724
      %v726 = vrot.slane %v719, %v725
      %v727 = vcombine.low %v701, %v702
      %v729 = vunpack.c.l.s4 1983009808
      %v730 = vunpack.c.0.s8 %v729
      %v731 = vlaneseq
      %v732 = vshrl.u32 %v731, 7
      %v733 = vsub.s32 %v730, %v732
      %v734 = vrot.slane %v727, %v733
      %v735 = vcombine.low %v710, %v718
      %v737 = vunpack.c.l.s4 1934713408
      %v738 = vunpack.c.0.s8 %v737
      %v739 = vlaneseq
      %v740 = vshrl.u32 %v739, 7
      %v741 = vsub.s32 %v738, %v740
      %v742 = vrot.slane %v735, %v741
      %v743 = vcombine.low %v726, %v734
      %v745 = vunpack.c.l.s4 1934713408
      %v746 = vunpack.c.0.s8 %v745
      %v747 = vlaneseq
      %v748 = vshrl.u32 %v747, 7
      %v749 = vsub.s32 %v746, %v748
      %v750 = vrot.slane %v743, %v749
      %v751 = vcombine.low %v742, %v750
      %v752 = vcombine.high %v742, %v750
      %754 = vrot.lane.b32.xlu0 %v509, 64
      %v755 = vpop.permute.xlu0 %754
      %v757 = vcombine.high %v509, 0.0
      %v759 = vunpack.c.l.s4 1983009808
      %v760 = vunpack.c.0.s8 %v759
      %v761 = vlaneseq
      %v762 = vshrl.u32 %v761, 7
      %v763 = vsub.s32 %v760, %v762
      %v764 = vrot.slane %v509, %v763
      %v766 = vunpack.c.l.s4 1983009808
      %v767 = vunpack.c.0.s8 %v766
      %v768 = vlaneseq
      %v769 = vshrl.u32 %v768, 7
      %v770 = vsub.s32 %v767, %v769
      %v771 = vrot.slane %v757, %v770
      %v772 = vcombine.high %v755, 0.0
      %v774 = vunpack.c.l.s4 1983009808
      %v775 = vunpack.c.0.s8 %v774
      %v776 = vlaneseq
      %v777 = vshrl.u32 %v776, 7
      %v778 = vsub.s32 %v775, %v777
      %v779 = vrot.slane %v755, %v778
      %v781 = vunpack.c.l.s4 1983009808
      %v782 = vunpack.c.0.s8 %v781
      %v783 = vlaneseq
      %v784 = vshrl.u32 %v783, 7
      %v785 = vsub.s32 %v782, %v784
      %v786 = vrot.slane %v772, %v785
      %v787 = vcombine.low %v764, %v779
      %v788 = vcombine.high %v764, %v779
      %v790 = vunpack.c.l.s4 1934713408
      %v791 = vunpack.c.0.s8 %v790
      %v792 = vlaneseq
      %v793 = vshrl.u32 %v792, 7
      %v794 = vsub.s32 %v791, %v793
      %v795 = vrot.slane %v787, %v794
      %v797 = vunpack.c.l.s4 1934713408
      %v798 = vunpack.c.0.s8 %v797
      %v799 = vlaneseq
      %v800 = vshrl.u32 %v799, 7
      %v801 = vsub.s32 %v798, %v800
      %v802 = vrot.slane %v788, %v801
      %v803 = vcombine.low %v771, %v786
      %v804 = vcombine.high %v771, %v786
      %v806 = vunpack.c.l.s4 1934713408
      %v807 = vunpack.c.0.s8 %v806
      %v808 = vlaneseq
      %v809 = vshrl.u32 %v808, 7
      %v810 = vsub.s32 %v807, %v809
      %v811 = vrot.slane %v803, %v810
      %v813 = vunpack.c.l.s4 1934713408
      %v814 = vunpack.c.0.s8 %v813
      %v815 = vlaneseq
      %v816 = vshrl.u32 %v815, 7
      %v817 = vsub.s32 %v814, %v816
      %v818 = vrot.slane %v804, %v817
      %v819 = vcombine.high %v795, 0.0
      %v820 = vcombine.high %v802, 0.0
      %v821 = vcombine.high %v811, 0.0
      %v822 = vcombine.high %v818, 0.0
      %v823 = vcombine.low %v795, %v802
      %v825 = vunpack.c.l.s4 1983009808
      %v826 = vunpack.c.0.s8 %v825
      %v827 = vlaneseq
      %v828 = vshrl.u32 %v827, 7
      %v829 = vsub.s32 %v826, %v828
      %v830 = vrot.slane %v823, %v829
      %v831 = vcombine.low %v819, %v820
      %v833 = vunpack.c.l.s4 1983009808
      %v834 = vunpack.c.0.s8 %v833
      %v835 = vlaneseq
      %v836 = vshrl.u32 %v835, 7
      %v837 = vsub.s32 %v834, %v836
      %v838 = vrot.slane %v831, %v837
      %v839 = vcombine.low %v811, %v818
      %v841 = vunpack.c.l.s4 1983009808
      %v842 = vunpack.c.0.s8 %v841
      %v843 = vlaneseq
      %v844 = vshrl.u32 %v843, 7
      %v845 = vsub.s32 %v842, %v844
      %v846 = vrot.slane %v839, %v845
      %v847 = vcombine.low %v821, %v822
      %v849 = vunpack.c.l.s4 1983009808
      %v850 = vunpack.c.0.s8 %v849
      %v851 = vlaneseq
      %v852 = vshrl.u32 %v851, 7
      %v853 = vsub.s32 %v850, %v852
      %v854 = vrot.slane %v847, %v853
      %v855 = vcombine.low %v830, %v838
      %v857 = vunpack.c.l.s4 1934713408
      %v858 = vunpack.c.0.s8 %v857
      %v859 = vlaneseq
      %v860 = vshrl.u32 %v859, 7
      %v861 = vsub.s32 %v858, %v860
      %v862 = vrot.slane %v855, %v861
      %v863 = vcombine.low %v846, %v854
      %v865 = vunpack.c.l.s4 1934713408
      %v866 = vunpack.c.0.s8 %v865
      %v867 = vlaneseq
      %v868 = vshrl.u32 %v867, 7
      %v869 = vsub.s32 %v866, %v868
      %v870 = vrot.slane %v863, %v869
      %v871 = vcombine.low %v862, %v870
      %v872 = vcombine.high %v862, %v870
      %vm873 = vcmask 523264
      %v875 = vsel %vm873, %v631, 0
      %v878 = vsel %vm873, %v751, 0
      %880 = vmatprep.subr.mxu0 0.0
      %881 = vmatpush1.xpose.msra.mxu0 0.0
      %882 = vmatprep.subr.mxu0 0.0
      %883 = vmatpush1.xpose.msra.mxu0 0.0
      %884 = vmatprep.subr.mxu0 0.0
      %885 = vmatpush1.xpose.msra.mxu0 0.0
      %886 = vmatprep.subr.mxu0 0.0
      %887 = vmatpush1.xpose.msra.mxu0 0.0
      %888 = vmatprep.subr.mxu0 0.0
      %889 = vmatpush1.xpose.msra.mxu0 0.0
      %890 = vmatprep.subr.mxu0 0.0
      %891 = vmatpush1.xpose.msra.mxu0 0.0
      %892 = vmatprep.subr.mxu0 0.0
      %893 = vmatpush1.xpose.msra.mxu0 0.0
      %894 = vmatprep.subr.mxu0 0.0
      %895 = vmatpush1.xpose.msra.mxu0 0.0
      %896 = vmatprep.subr.mxu0 0.0
      %897 = vmatpush1.xpose.msra.mxu0 0.0
      %898 = vmatprep.subr.mxu0 0.0
      %899 = vmatpush1.xpose.msra.mxu0 0.0
      %900 = vmatprep.subr.mxu0 0.0
      %901 = vmatpush1.xpose.msra.mxu0 0.0
      %902 = vmatprep.subr.mxu0 0.0
      %903 = vmatpush1.xpose.msra.mxu0 0.0
      %904 = vmatprep.subr.mxu0 0.0
      %905 = vmatpush1.xpose.msra.mxu0 0.0
      %906 = vmatprep.subr.mxu0 0.0
      %907 = vmatpush1.xpose.msra.mxu0 0.0
      %908 = vmatprep.subr.mxu0 0.0
      %909 = vmatpush1.xpose.msra.mxu0 0.0
      %910 = vmatprep.subr.mxu0 0.0
      %911 = vmatpush1.xpose.msra.mxu0 %v878
      %912 = vmatprep.subr.mxu0 0.0
      %913 = vmatpush2.xpose.msra.mxu0 0.0
      %914 = vmatprep.subr.mxu0 0.0
      %915 = vmatpush2.xpose.msra.mxu0 0.0
      %916 = vmatprep.subr.mxu0 0.0
      %917 = vmatpush2.xpose.msra.mxu0 0.0
      %918 = vmatprep.subr.mxu0 0.0
      %919 = vmatpush2.xpose.msra.mxu0 0.0
      %920 = vmatprep.subr.mxu0 0.0
      %921 = vmatpush2.xpose.msra.mxu0 0.0
      %922 = vmatprep.subr.mxu0 0.0
      %923 = vmatpush2.xpose.msra.mxu0 0.0
      %924 = vmatprep.subr.mxu0 0.0
      %925 = vmatpush2.xpose.msra.mxu0 0.0
      %926 = vmatprep.subr.mxu0 0.0
      %927 = vmatpush2.xpose.msra.mxu0 0.0
      %928 = vmatprep.subr.mxu0 0.0
      %929 = vmatpush2.xpose.msra.mxu0 0.0
      %930 = vmatprep.subr.mxu0 0.0
      %931 = vmatpush2.xpose.msra.mxu0 0.0
      %932 = vmatprep.subr.mxu0 0.0
      %933 = vmatpush2.xpose.msra.mxu0 0.0
      %934 = vmatprep.subr.mxu0 0.0
      %935 = vmatpush2.xpose.msra.mxu0 0.0
      %936 = vmatprep.subr.mxu0 0.0
      %937 = vmatpush2.xpose.msra.mxu0 0.0
      %938 = vmatprep.subr.mxu0 0.0
      %939 = vmatpush2.xpose.msra.mxu0 0.0
      %940 = vmatprep.subr.mxu0 0.0
      %941 = vmatpush2.xpose.msra.mxu0 0.0
      %942 = vmatprep.subr.mxu0 0.0
      %943 = vmatpush2.xpose.msra.mxu0 0.0
      %944 = vmatprep.mubr.f32.mxu0 0.0
      %945 = vmatmul.mubr.f32.gmra.mxu0 %v875
      %v946 = vpop.f32.mrf.mxu0
      %v947 = vadd.f32 0.0, %v946
      %v948 = vpop.f32.mrf.mxu0
      %949 = vdwg.mxu0
      %v951 = vsel %vm873, %v632, 0
      %v954 = vsel %vm873, %v752, 0
      %956 = vmatprep.subr.mxu0 0.0
      %957 = vmatpush1.xpose.msra.mxu0 0.0
      %958 = vmatprep.subr.mxu0 0.0
      %959 = vmatpush1.xpose.msra.mxu0 0.0
      %960 = vmatprep.subr.mxu0 0.0
      %961 = vmatpush1.xpose.msra.mxu0 0.0
      %962 = vmatprep.subr.mxu0 0.0
      %963 = vmatpush1.xpose.msra.mxu0 0.0
      %964 = vmatprep.subr.mxu0 0.0
      %965 = vmatpush1.xpose.msra.mxu0 0.0
      %966 = vmatprep.subr.mxu0 0.0
      %967 = vmatpush1.xpose.msra.mxu0 0.0
      %968 = vmatprep.subr.mxu0 0.0
      %969 = vmatpush1.xpose.msra.mxu0 0.0
      %970 = vmatprep.subr.mxu0 0.0
      %971 = vmatpush1.xpose.msra.mxu0 0.0
      %972 = vmatprep.subr.mxu0 0.0
      %973 = vmatpush1.xpose.msra.mxu0 0.0
      %974 = vmatprep.subr.mxu0 0.0
      %975 = vmatpush1.xpose.msra.mxu0 0.0
      %976 = vmatprep.subr.mxu0 0.0
      %977 = vmatpush1.xpose.msra.mxu0 0.0
      %978 = vmatprep.subr.mxu0 0.0
      %979 = vmatpush1.xpose.msra.mxu0 0.0
      %980 = vmatprep.subr.mxu0 0.0
      %981 = vmatpush1.xpose.msra.mxu0 0.0
      %982 = vmatprep.subr.mxu0 0.0
      %983 = vmatpush1.xpose.msra.mxu0 0.0
      %984 = vmatprep.subr.mxu0 0.0
      %985 = vmatpush1.xpose.msra.mxu0 0.0
      %986 = vmatprep.subr.mxu0 0.0
      %987 = vmatpush1.xpose.msra.mxu0 %v954
      %988 = vmatprep.subr.mxu0 0.0
      %989 = vmatpush2.xpose.msra.mxu0 0.0
      %990 = vmatprep.subr.mxu0 0.0
      %991 = vmatpush2.xpose.msra.mxu0 0.0
      %992 = vmatprep.subr.mxu0 0.0
      %993 = vmatpush2.xpose.msra.mxu0 0.0
      %994 = vmatprep.subr.mxu0 0.0
      %995 = vmatpush2.xpose.msra.mxu0 0.0
      %996 = vmatprep.subr.mxu0 0.0
      %997 = vmatpush2.xpose.msra.mxu0 0.0
      %998 = vmatprep.subr.mxu0 0.0
      %999 = vmatpush2.xpose.msra.mxu0 0.0
      %1000 = vmatprep.subr.mxu0 0.0
      %1001 = vmatpush2.xpose.msra.mxu0 0.0
      %1002 = vmatprep.subr.mxu0 0.0
      %1003 = vmatpush2.xpose.msra.mxu0 0.0
      %1004 = vmatprep.subr.mxu0 0.0
      %1005 = vmatpush2.xpose.msra.mxu0 0.0
      %1006 = vmatprep.subr.mxu0 0.0
      %1007 = vmatpush2.xpose.msra.mxu0 0.0
      %1008 = vmatprep.subr.mxu0 0.0
      %1009 = vmatpush2.xpose.msra.mxu0 0.0
      %1010 = vmatprep.subr.mxu0 0.0
      %1011 = vmatpush2.xpose.msra.mxu0 0.0
      %1012 = vmatprep.subr.mxu0 0.0
      %1013 = vmatpush2.xpose.msra.mxu0 0.0
      %1014 = vmatprep.subr.mxu0 0.0
      %1015 = vmatpush2.xpose.msra.mxu0 0.0
      %1016 = vmatprep.subr.mxu0 0.0
      %1017 = vmatpush2.xpose.msra.mxu0 0.0
      %1018 = vmatprep.subr.mxu0 0.0
      %1019 = vmatpush2.xpose.msra.mxu0 0.0
      %1020 = vmatprep.mubr.f32.mxu0 0.0
      %1021 = vmatmul.mubr.f32.gmra.mxu0 %v951
      %v1022 = vpop.f32.mrf.mxu0
      %v1023 = vadd.f32 0.0, %v1022
      %v1024 = vpop.f32.mrf.mxu0
      %1025 = vdwg.mxu0
      %v1026 = vlaneseq
      %v1027 = vshrl.u32 %v1026, 7
      %v1028 = vlaneseq
      %v1029 = vand.u32 %v1028, 127
      %vm1030 = vcmp.le.s32.totalorder %v1029, %v1027
      %v1031 = vld [vmem:[%s296] sm:$0x1]
      %vm1032 = vcmp.gt.f32.partialorder %v1031, 0.5
      %v1033 = vsel %vm1032, 1, 0
      %v1034 = vlaneseq
      %v1035 = vshrl.u32 %v1034, 7
      %v1036 = vsub.s32 0, %v1035
      %v1037 = vrot.slane %v1033, %v1036
      %vm1038 = vcmp.eq.s32.totalorder %v1037, 1
      %vm1039 = vmand %vm1030, %vm1038
      %v1040 = vsel %vm1039, 1, 0
      %vm1041 = vcmp.eq.s32.totalorder %v1040, 1
      %v1042 = vsel %vm1041, %v947, -1e+09
      %v1043 = vsel %vm1041, %v1023, -1e+09
      %vm1044 = vcmask 64512
      %v1045 = vsel %vm1044, %v1042, -inf
      %1046 = vmax.xlane.f32.xlu0 %v1045
      %v1047 = vpop.xlane.xlu0 %1046
      %v1048 = vsel %vm1044, %v1043, -inf
      %1049 = vmax.xlane.f32.xlu0 %v1048
      %v1050 = vpop.xlane.xlu0 %1049
      %v1051 = vsub.f32 %v1042, %v1047
      %v1052 = vsub.f32 %v1043, %v1050
      %v1053 = vmul.f32 %v1051, 1.442695
      %v1054 = vpow.pop %v1053
      %v1055 = vmul.f32 %v1052, 1.442695
      %v1056 = vpow.pop %v1055
      %v1057 = vsel %vm1044, %v1054, 0.0
      %1058 = vadd.xlane.f32.xlu0 %v1057
      %v1059 = vpop.xlane.xlu0 %1058
      %v1060 = vsel %vm1044, %v1056, 0.0
      %1061 = vadd.xlane.f32.xlu0 %v1060
      %v1062 = vpop.xlane.xlu0 %1061
      %v1063 = vrcp.pop %v1059
      %v1064 = vrcp.pop %v1062
      %v1065 = vmul.f32 %v1054, %v1063
      %v1066 = vmul.f32 %v1056, %v1064
      %v1068 = vsel %vm1044, %v1065, 0
      %1070 = vmatprep.subr.mxu0 0.0
      %1071 = vmatpush1.msra.mxu0 0.0
      %1072 = vmatprep.subr.mxu0 0.0
      %1073 = vmatpush1.msra.mxu0 0.0
      %1074 = vmatprep.subr.mxu0 0.0
      %1075 = vmatpush1.msra.mxu0 0.0
      %1076 = vmatprep.subr.mxu0 0.0
      %1077 = vmatpush1.msra.mxu0 0.0
      %1078 = vmatprep.subr.mxu0 0.0
      %1079 = vmatpush1.msra.mxu0 0.0
      %1080 = vmatprep.subr.mxu0 0.0
      %1081 = vmatpush1.msra.mxu0 0.0
      %1082 = vmatprep.subr.mxu0 0.0
      %1083 = vmatpush1.msra.mxu0 0.0
      %1084 = vmatprep.subr.mxu0 0.0
      %1085 = vmatpush1.msra.mxu0 0.0
      %1086 = vmatprep.subr.mxu0 0.0
      %1087 = vmatpush1.msra.mxu0 0.0
      %1088 = vmatprep.subr.mxu0 0.0
      %1089 = vmatpush1.msra.mxu0 0.0
      %1090 = vmatprep.subr.mxu0 0.0
      %1091 = vmatpush1.msra.mxu0 0.0
      %1092 = vmatprep.subr.mxu0 0.0
      %1093 = vmatpush1.msra.mxu0 0.0
      %1094 = vmatprep.subr.mxu0 0.0
      %1095 = vmatpush1.msra.mxu0 0.0
      %1096 = vmatprep.subr.mxu0 0.0
      %1097 = vmatpush1.msra.mxu0 0.0
      %1098 = vmatprep.subr.mxu0 0.0
      %1099 = vmatpush1.msra.mxu0 0.0
      %1100 = vmatprep.subr.mxu0 0.0
      %1101 = vmatpush1.msra.mxu0 %v871
      %1102 = vmatprep.subr.mxu0 0.0
      %1103 = vmatpush2.msra.mxu0 0.0
      %1104 = vmatprep.subr.mxu0 0.0
      %1105 = vmatpush2.msra.mxu0 0.0
      %1106 = vmatprep.subr.mxu0 0.0
      %1107 = vmatpush2.msra.mxu0 0.0
      %1108 = vmatprep.subr.mxu0 0.0
      %1109 = vmatpush2.msra.mxu0 0.0
      %1110 = vmatprep.subr.mxu0 0.0
      %1111 = vmatpush2.msra.mxu0 0.0
      %1112 = vmatprep.subr.mxu0 0.0
      %1113 = vmatpush2.msra.mxu0 0.0
      %1114 = vmatprep.subr.mxu0 0.0
      %1115 = vmatpush2.msra.mxu0 0.0
      %1116 = vmatprep.subr.mxu0 0.0
      %1117 = vmatpush2.msra.mxu0 0.0
      %1118 = vmatprep.subr.mxu0 0.0
      %1119 = vmatpush2.msra.mxu0 0.0
      %1120 = vmatprep.subr.mxu0 0.0
      %1121 = vmatpush2.msra.mxu0 0.0
      %1122 = vmatprep.subr.mxu0 0.0
      %1123 = vmatpush2.msra.mxu0 0.0
      %1124 = vmatprep.subr.mxu0 0.0
      %1125 = vmatpush2.msra.mxu0 0.0
      %1126 = vmatprep.subr.mxu0 0.0
      %1127 = vmatpush2.msra.mxu0 0.0
      %1128 = vmatprep.subr.mxu0 0.0
      %1129 = vmatpush2.msra.mxu0 0.0
      %1130 = vmatprep.subr.mxu0 0.0
      %1131 = vmatpush2.msra.mxu0 0.0
      %1132 = vmatprep.subr.mxu0 0.0
      %1133 = vmatpush2.msra.mxu0 0.0
      %1134 = vmatprep.mubr.f32.mxu0 0.0
      %1135 = vmatmul.mubr.f32.gmra.mxu0 %v1068
      %v1136 = vpop.f32.mrf.mxu0
      %v1137 = vadd.f32 0.0, %v1136
      %v1138 = vpop.f32.mrf.mxu0
      %1139 = vdwg.mxu0
      %v1141 = vsel %vm1044, %v1066, 0
      %1143 = vmatprep.subr.mxu0 0.0
      %1144 = vmatpush1.msra.mxu0 0.0
      %1145 = vmatprep.subr.mxu0 0.0
      %1146 = vmatpush1.msra.mxu0 0.0
      %1147 = vmatprep.subr.mxu0 0.0
      %1148 = vmatpush1.msra.mxu0 0.0
      %1149 = vmatprep.subr.mxu0 0.0
      %1150 = vmatpush1.msra.mxu0 0.0
      %1151 = vmatprep.subr.mxu0 0.0
      %1152 = vmatpush1.msra.mxu0 0.0
      %1153 = vmatprep.subr.mxu0 0.0
      %1154 = vmatpush1.msra.mxu0 0.0
      %1155 = vmatprep.subr.mxu0 0.0
      %1156 = vmatpush1.msra.mxu0 0.0
      %1157 = vmatprep.subr.mxu0 0.0
      %1158 = vmatpush1.msra.mxu0 0.0
      %1159 = vmatprep.subr.mxu0 0.0
      %1160 = vmatpush1.msra.mxu0 0.0
      %1161 = vmatprep.subr.mxu0 0.0
      %1162 = vmatpush1.msra.mxu0 0.0
      %1163 = vmatprep.subr.mxu0 0.0
      %1164 = vmatpush1.msra.mxu0 0.0
      %1165 = vmatprep.subr.mxu0 0.0
      %1166 = vmatpush1.msra.mxu0 0.0
      %1167 = vmatprep.subr.mxu0 0.0
      %1168 = vmatpush1.msra.mxu0 0.0
      %1169 = vmatprep.subr.mxu0 0.0
      %1170 = vmatpush1.msra.mxu0 0.0
      %1171 = vmatprep.subr.mxu0 0.0
      %1172 = vmatpush1.msra.mxu0 0.0
      %1173 = vmatprep.subr.mxu0 0.0
      %1174 = vmatpush1.msra.mxu0 %v872
      %1175 = vmatprep.subr.mxu0 0.0
      %1176 = vmatpush2.msra.mxu0 0.0
      %1177 = vmatprep.subr.mxu0 0.0
      %1178 = vmatpush2.msra.mxu0 0.0
      %1179 = vmatprep.subr.mxu0 0.0
      %1180 = vmatpush2.msra.mxu0 0.0
      %1181 = vmatprep.subr.mxu0 0.0
      %1182 = vmatpush2.msra.mxu0 0.0
      %1183 = vmatprep.subr.mxu0 0.0
      %1184 = vmatpush2.msra.mxu0 0.0
      %1185 = vmatprep.subr.mxu0 0.0
      %1186 = vmatpush2.msra.mxu0 0.0
      %1187 = vmatprep.subr.mxu0 0.0
      %1188 = vmatpush2.msra.mxu0 0.0
      %1189 = vmatprep.subr.mxu0 0.0
      %1190 = vmatpush2.msra.mxu0 0.0
      %1191 = vmatprep.subr.mxu0 0.0
      %1192 = vmatpush2.msra.mxu0 0.0
      %1193 = vmatprep.subr.mxu0 0.0
      %1194 = vmatpush2.msra.mxu0 0.0
      %1195 = vmatprep.subr.mxu0 0.0
      %1196 = vmatpush2.msra.mxu0 0.0
      %1197 = vmatprep.subr.mxu0 0.0
      %1198 = vmatpush2.msra.mxu0 0.0
      %1199 = vmatprep.subr.mxu0 0.0
      %1200 = vmatpush2.msra.mxu0 0.0
      %1201 = vmatprep.subr.mxu0 0.0
      %1202 = vmatpush2.msra.mxu0 0.0
      %1203 = vmatprep.subr.mxu0 0.0
      %1204 = vmatpush2.msra.mxu0 0.0
      %1205 = vmatprep.subr.mxu0 0.0
      %1206 = vmatpush2.msra.mxu0 0.0
      %1207 = vmatprep.mubr.f32.mxu0 0.0
      %1208 = vmatmul.mubr.f32.gmra.mxu0 %v1141
      %v1209 = vpop.f32.mrf.mxu0
      %v1210 = vadd.f32 0.0, %v1209
      %v1211 = vpop.f32.mrf.mxu0
      %1212 = vdwg.mxu0
      %v1213 = vcombine.high %v1137, 0.0
      %v1215 = vunpack.c.l.s4 1983009808
      %v1216 = vunpack.c.0.s8 %v1215
      %v1217 = vlaneseq
      %v1218 = vshrl.u32 %v1217, 7
      %v1219 = vsub.s32 %v1216, %v1218
      %v1220 = vrot.slane %v1137, %v1219
      %v1222 = vunpack.c.l.s4 1983009808
      %v1223 = vunpack.c.0.s8 %v1222
      %v1224 = vlaneseq
      %v1225 = vshrl.u32 %v1224, 7
      %v1226 = vsub.s32 %v1223, %v1225
      %v1227 = vrot.slane %v1213, %v1226
      %v1228 = vcombine.high %v1210, 0.0
      %v1230 = vunpack.c.l.s4 1983009808
      %v1231 = vunpack.c.0.s8 %v1230
      %v1232 = vlaneseq
      %v1233 = vshrl.u32 %v1232, 7
      %v1234 = vsub.s32 %v1231, %v1233
      %v1235 = vrot.slane %v1210, %v1234
      %v1237 = vunpack.c.l.s4 1983009808
      %v1238 = vunpack.c.0.s8 %v1237
      %v1239 = vlaneseq
      %v1240 = vshrl.u32 %v1239, 7
      %v1241 = vsub.s32 %v1238, %v1240
      %v1242 = vrot.slane %v1228, %v1241
      %v1243 = vcombine.low %v1220, %v1235
      %v1244 = vcombine.high %v1220, %v1235
      %v1246 = vunpack.c.l.s4 1934713408
      %v1247 = vunpack.c.0.s8 %v1246
      %v1248 = vlaneseq
      %v1249 = vshrl.u32 %v1248, 7
      %v1250 = vsub.s32 %v1247, %v1249
      %v1251 = vrot.slane %v1243, %v1250
      %v1253 = vunpack.c.l.s4 1934713408
      %v1254 = vunpack.c.0.s8 %v1253
      %v1255 = vlaneseq
      %v1256 = vshrl.u32 %v1255, 7
      %v1257 = vsub.s32 %v1254, %v1256
      %v1258 = vrot.slane %v1244, %v1257
      %v1259 = vcombine.low %v1227, %v1242
      %v1260 = vcombine.high %v1227, %v1242
      %v1262 = vunpack.c.l.s4 1934713408
      %v1263 = vunpack.c.0.s8 %v1262
      %v1264 = vlaneseq
      %v1265 = vshrl.u32 %v1264, 7
      %v1266 = vsub.s32 %v1263, %v1265
      %v1267 = vrot.slane %v1259, %v1266
      %v1269 = vunpack.c.l.s4 1934713408
      %v1270 = vunpack.c.0.s8 %v1269
      %v1271 = vlaneseq
      %v1272 = vshrl.u32 %v1271, 7
      %v1273 = vsub.s32 %v1270, %v1272
      %v1274 = vrot.slane %v1260, %v1273
      %v1275 = vcombine.high %v1251, 0.0
      %v1276 = vcombine.high %v1258, 0.0
      %v1277 = vcombine.high %v1267, 0.0
      %v1278 = vcombine.high %v1274, 0.0
      %v1279 = vcombine.low %v1251, %v1258
      %v1281 = vunpack.c.l.s4 1983009808
      %v1282 = vunpack.c.0.s8 %v1281
      %v1283 = vlaneseq
      %v1284 = vshrl.u32 %v1283, 7
      %v1285 = vsub.s32 %v1282, %v1284
      %v1286 = vrot.slane %v1279, %v1285
      %v1287 = vcombine.low %v1275, %v1276
      %v1289 = vunpack.c.l.s4 1983009808
      %v1290 = vunpack.c.0.s8 %v1289
      %v1291 = vlaneseq
      %v1292 = vshrl.u32 %v1291, 7
      %v1293 = vsub.s32 %v1290, %v1292
      %v1294 = vrot.slane %v1287, %v1293
      %v1295 = vcombine.low %v1267, %v1274
      %v1297 = vunpack.c.l.s4 1983009808
      %v1298 = vunpack.c.0.s8 %v1297
      %v1299 = vlaneseq
      %v1300 = vshrl.u32 %v1299, 7
      %v1301 = vsub.s32 %v1298, %v1300
      %v1302 = vrot.slane %v1295, %v1301
      %v1303 = vcombine.low %v1277, %v1278
      %v1305 = vunpack.c.l.s4 1983009808
      %v1306 = vunpack.c.0.s8 %v1305
      %v1307 = vlaneseq
      %v1308 = vshrl.u32 %v1307, 7
      %v1309 = vsub.s32 %v1306, %v1308
      %v1310 = vrot.slane %v1303, %v1309
      %v1311 = vcombine.low %v1286, %v1294
      %v1313 = vunpack.c.l.s4 1934713408
      %v1314 = vunpack.c.0.s8 %v1313
      %v1315 = vlaneseq
      %v1316 = vshrl.u32 %v1315, 7
      %v1317 = vsub.s32 %v1314, %v1316
      %v1318 = vrot.slane %v1311, %v1317
      %v1319 = vcombine.low %v1302, %v1310
      %v1321 = vunpack.c.l.s4 1934713408
      %v1322 = vunpack.c.0.s8 %v1321
      %v1323 = vlaneseq
      %v1324 = vshrl.u32 %v1323, 7
      %v1325 = vsub.s32 %v1322, %v1324
      %v1326 = vrot.slane %v1319, %v1325
      %v1327 = vcombine.low %v1318, %v1326
      %v1328 = vcombine.high %v1318, %v1326
      %1330 = vrot.lane.b32.xlu0 %v1328, 64
      %v1331 = vpop.permute.xlu0 %1330
      %v1333 = vsel %vm873, %v1327, %v1331
      %v1334 = vld [vmem:[%s5] sm:$0xff]
      %v1335 = vld [vmem:[%s5 + $0x8] sm:$0xff]
      %v1336 = vld [vmem:[%s5 + $0x10] sm:$0xff]
      %v1337 = vld [vmem:[%s5 + $0x18] sm:$0xff]
      %v1338 = vld [vmem:[%s5 + $0x20] sm:$0xff]
      %v1339 = vld [vmem:[%s5 + $0x28] sm:$0xff]
      %v1340 = vld [vmem:[%s5 + $0x30] sm:$0xff]
      %v1341 = vld [vmem:[%s5 + $0x38] sm:$0xff]
      %v1342 = vld [vmem:[%s5 + $0x40] sm:$0xff]
      %v1343 = vld [vmem:[%s5 + $0x48] sm:$0xff]
      %v1344 = vld [vmem:[%s5 + $0x50] sm:$0xff]
      %v1345 = vld [vmem:[%s5 + $0x58] sm:$0xff]
      %v1346 = vld [vmem:[%s5 + $0x60] sm:$0xff]
      %v1347 = vld [vmem:[%s5 + $0x68] sm:$0xff]
      %v1348 = vld [vmem:[%s5 + $0x70] sm:$0xff]
      %v1349 = vld [vmem:[%s5 + $0x78] sm:$0xff]
      %v1350 = vld [vmem:[%s6] sm:$0x1]
      %v1352 = vlaneseq
      %v1353 = vshrl.u32 %v1352, 7
      %v1354 = vsub.s32 0, %v1353
      %v1355 = vrot.slane %v1350, %v1354
      %1357 = vmatprep.subr.mxu0 0.0
      %1358 = vmatpush1.msra.mxu0 %v1349
      %1359 = vmatprep.subr.mxu0 0.0
      %1360 = vmatpush1.msra.mxu0 %v1348
      %1361 = vmatprep.subr.mxu0 0.0
      %1362 = vmatpush1.msra.mxu0 %v1347
      %1363 = vmatprep.subr.mxu0 0.0
      %1364 = vmatpush1.msra.mxu0 %v1346
      %1365 = vmatprep.subr.mxu0 0.0
      %1366 = vmatpush1.msra.mxu0 %v1345
      %1367 = vmatprep.subr.mxu0 0.0
      %1368 = vmatpush1.msra.mxu0 %v1344
      %1369 = vmatprep.subr.mxu0 0.0
      %1370 = vmatpush1.msra.mxu0 %v1343
      %1371 = vmatprep.subr.mxu0 0.0
      %1372 = vmatpush1.msra.mxu0 %v1342
      %1373 = vmatprep.subr.mxu0 0.0
      %1374 = vmatpush1.msra.mxu0 %v1341
      %1375 = vmatprep.subr.mxu0 0.0
      %1376 = vmatpush1.msra.mxu0 %v1340
      %1377 = vmatprep.subr.mxu0 0.0
      %1378 = vmatpush1.msra.mxu0 %v1339
      %1379 = vmatprep.subr.mxu0 0.0
      %1380 = vmatpush1.msra.mxu0 %v1338
      %1381 = vmatprep.subr.mxu0 0.0
      %1382 = vmatpush1.msra.mxu0 %v1337
      %1383 = vmatprep.subr.mxu0 0.0
      %1384 = vmatpush1.msra.mxu0 %v1336
      %1385 = vmatprep.subr.mxu0 0.0
      %1386 = vmatpush1.msra.mxu0 %v1335
      %1387 = vmatprep.subr.mxu0 0.0
      %1388 = vmatpush1.msra.mxu0 %v1334
      %1389 = vmatprep.subr.mxu0 0.0
      %1390 = vmatpush2.msra.mxu0 0.0
      %1391 = vmatprep.subr.mxu0 0.0
      %1392 = vmatpush2.msra.mxu0 0.0
      %1393 = vmatprep.subr.mxu0 0.0
      %1394 = vmatpush2.msra.mxu0 0.0
      %1395 = vmatprep.subr.mxu0 0.0
      %1396 = vmatpush2.msra.mxu0 0.0
      %1397 = vmatprep.subr.mxu0 0.0
      %1398 = vmatpush2.msra.mxu0 0.0
      %1399 = vmatprep.subr.mxu0 0.0
      %1400 = vmatpush2.msra.mxu0 0.0
      %1401 = vmatprep.subr.mxu0 0.0
      %1402 = vmatpush2.msra.mxu0 0.0
      %1403 = vmatprep.subr.mxu0 0.0
      %1404 = vmatpush2.msra.mxu0 0.0
      %1405 = vmatprep.subr.mxu0 0.0
      %1406 = vmatpush2.msra.mxu0 0.0
      %1407 = vmatprep.subr.mxu0 0.0
      %1408 = vmatpush2.msra.mxu0 0.0
      %1409 = vmatprep.subr.mxu0 0.0
      %1410 = vmatpush2.msra.mxu0 0.0
      %1411 = vmatprep.subr.mxu0 0.0
      %1412 = vmatpush2.msra.mxu0 0.0
      %1413 = vmatprep.subr.mxu0 0.0
      %1414 = vmatpush2.msra.mxu0 0.0
      %1415 = vmatprep.subr.mxu0 0.0
      %1416 = vmatpush2.msra.mxu0 0.0
      %1417 = vmatprep.subr.mxu0 0.0
      %1418 = vmatpush2.msra.mxu0 0.0
      %1419 = vmatprep.subr.mxu0 0.0
      %1420 = vmatpush2.msra.mxu0 0.0
      %1421 = vmatprep.mubr.f32.mxu0 0.0
      %1422 = vmatmul.mubr.f32.gmra.mxu0 %v1333
      %v1423 = vpop.f32.mrf.mxu0
      %v1424 = vadd.f32 %v1355, %v1423
      %v1425 = vpop.f32.mrf.mxu0
      %1426 = vdwg.mxu0
      %v1427 = vadd.f32 %v1424, %v305
      %v1428 = vld [vmem:[%s300] sm:$0xff]
      %1430 = vset.pattern.permute.xlu0 0
      %1431 = vperm.xlu0 %1430, %v1428
      %v1432 = vpop.permute.xlu0 %1431
      %v1434 = vmul.f32 %v1427, %v1432
      %1435 = vst [vmem:[%s304] sm:$0xff] %v1434
      %p1436 = scmp.lt.s32.totalorder %s18, 5
      %s1437 = scalar_select %p1436, %s18, 5
      %s1438 = smul.addr %s1437, 8
      %s1439 = scalar_lea.vmem %s7, %s1438
      // Predicated region
      $region49: #{abxi_forward.3} parent=47 // pred_check
        %p1440 = pneg %p198
      $region50: #{abxi_forward.3} parent=47 // pred_check_branch
        %1442 = sbr.rel (%p1440) target = $region52
      $region51: #{abxi_forward.3} parent=47 // pred_region
        _
      $region52: #{abxi_forward.3} parent=47 // pred_fallthru
        _
    $region48: #{abxi_forward.3} parent=5 // pred_fallthru
      _
    %p1443 = scmp.le.s32.totalorder 2, %s13
    // Predicated region
    $region53: #{abxi_forward.3} parent=5 // pred_check
      %p1444 = pneg %p1443
    $region54: #{abxi_forward.3} parent=5 // pred_check_branch
      %1446 = sbr.rel (%p1444) target = $region56
    $region55: #{abxi_forward.3} parent=5 // pred_region
      %s1447 = ssub.s32 %s13, 2
      // Predicated region
      $region57: #{abxi_forward.3} parent=55 // pred_check
        %p1448 = pneg %p204
      $region58: #{abxi_forward.3} parent=55 // pred_check_branch
        %1450 = sbr.rel (%p1448) target = $region60
      $region59: #{abxi_forward.3} parent=55 // pred_region
        %p1451 = scmp.lt.s32.totalorder %s19, 5
        %s1452 = scalar_select %p1451, %s19, 5
        %s1453 = smul.addr %s1452, 8
        %s1454 = scalar_lea.vmem %s7, %s1453
      $region60: #{abxi_forward.3} parent=55 // pred_fallthru
        _
    $region56: #{abxi_forward.3} parent=5 // pred_fallthru
      _
  $region6: #{abxi_forward.3} parent=0 // loop_footer
    %s17 = sadd.s32 1, %s13
  $region7: #{abxi_forward.3} parent=0 // loop_footer_branch
    %12 = sbr.rel target = $region3
  $region8: #{abxi_forward.3} parent=0 // loop_exit
    _

// kernel: abxi_forward.5
$region0: #{abxi_forward.5}
  #allocation0 [shape = 'u32[]', space=smem, size = 0x4, offset = 0x4, fixed_abs, tag = 'smem constant byte address 0x4 - core index']
  #allocation1 [shape = 'u32[144,128]{1,0:T(1,128)}', space=vmem, size = 0x12000, scoped, tag = 'internal scratch']
  %s0 = inlined_call_operand.vmem [shape: f32[16,128], index: 0, kind: input, shape index: {}]
  %s1 = inlined_call_operand.vmem [shape: f32[16,128], index: 1, kind: input, shape index: {}]
  %s2 = inlined_call_operand.vmem [shape: f32[16,128], index: 2, kind: input, shape index: {}]
  %s3 = inlined_call_operand.vmem [shape: f32[16,1], index: 3, kind: input, shape index: {}]
  %s4 = inlined_call_operand.vmem [shape: f32[16,1], index: 4, kind: input, shape index: {}]
  %s5 = inlined_call_operand.vmem [shape: f32[3,128,128], index: 5, kind: input, shape index: {}]
  %s6 = inlined_call_operand.vmem [shape: f32[3,1,128], index: 6, kind: input, shape index: {}]
  %s7 = inlined_call_operand.vmem [shape: f32[3,128,128], index: 7, kind: input, shape index: {}]
  %s8 = inlined_call_operand.vmem [shape: f32[3,1,128], index: 8, kind: input, shape index: {}]
  %s9 = inlined_call_operand.vmem [shape: f32[2,128,128], index: 9, kind: input, shape index: {}]
  %s10 = inlined_call_operand.vmem [shape: f32[4,1,128], index: 10, kind: input, shape index: {}]
  %s11 = inlined_call_operand.vmem [shape: f32[4,1,128], index: 11, kind: input, shape index: {}]
  %s12 = inlined_call_operand.hbm [shape: f32[16,128], index: 12, kind: output, shape index: {}]
  %s13 = sld [smem:[#allocation0]]
  $region58: #{abxi_forward.5} parent=0
    _
  %s15 = ssub.s32 1, %s13
  %s16 = scalar_select 0, %s15, %s13
  $region1: #{abxi_forward.5} parent=0
    #allocation2 [shape = 'u8[8192]{0}', space=vmem, size = 0x2000, scoped, tag = 'output window, operand 0, single buffered']
    #allocation3 [shape = 's32[1]{0}', space=sflag, size = 0x4, scoped, tag = 'scoped memory for abxi_forward.5']
    %17 = vsyncpa [#allocation3], 0
    // Predicated region
    $region2: #{abxi_forward.5} parent=1 // pred_check
      _
    $region3: #{abxi_forward.5} parent=1 // pred_check_branch
      %19 = sbr.rel (0) target = $region5
    $region4: #{abxi_forward.5} parent=1 // pred_region
      _
    $region5: #{abxi_forward.5} parent=1 // pred_fallthru
      _
    // Predicated region
    $region6: #{abxi_forward.5} parent=1 // pred_check
      _
    $region7: #{abxi_forward.5} parent=1 // pred_check_branch
      %21 = sbr.rel (0) target = $region9
    $region8: #{abxi_forward.5} parent=1 // pred_region
      _
    $region9: #{abxi_forward.5} parent=1 // pred_fallthru
      _
    // Predicated region
    $region10: #{abxi_forward.5} parent=1 // pred_check
      _
    $region11: #{abxi_forward.5} parent=1 // pred_check_branch
      %23 = sbr.rel (0) target = $region13
    $region12: #{abxi_forward.5} parent=1 // pred_region
      _
    $region13: #{abxi_forward.5} parent=1 // pred_fallthru
      _
    // Predicated region
    $region14: #{abxi_forward.5} parent=1 // pred_check
      _
    $region15: #{abxi_forward.5} parent=1 // pred_check_branch
      %25 = sbr.rel (0) target = $region17
    $region16: #{abxi_forward.5} parent=1 // pred_region
      _
    $region17: #{abxi_forward.5} parent=1 // pred_fallthru
      _
    // Predicated region
    $region18: #{abxi_forward.5} parent=1 // pred_check
      _
    $region19: #{abxi_forward.5} parent=1 // pred_check_branch
      %27 = sbr.rel (0) target = $region21
    $region20: #{abxi_forward.5} parent=1 // pred_region
      _
    $region21: #{abxi_forward.5} parent=1 // pred_fallthru
      _
    // Predicated region
    $region22: #{abxi_forward.5} parent=1 // pred_check
      _
    $region23: #{abxi_forward.5} parent=1 // pred_check_branch
      %29 = sbr.rel (0) target = $region25
    $region24: #{abxi_forward.5} parent=1 // pred_region
      _
    $region25: #{abxi_forward.5} parent=1 // pred_fallthru
      _
    // Predicated region
    $region26: #{abxi_forward.5} parent=1 // pred_check
      _
    $region27: #{abxi_forward.5} parent=1 // pred_check_branch
      %31 = sbr.rel (0) target = $region29
    $region28: #{abxi_forward.5} parent=1 // pred_region
      _
    $region29: #{abxi_forward.5} parent=1 // pred_fallthru
      _
    // Predicated region
    $region30: #{abxi_forward.5} parent=1 // pred_check
      _
    $region31: #{abxi_forward.5} parent=1 // pred_check_branch
      %33 = sbr.rel (0) target = $region33
    $region32: #{abxi_forward.5} parent=1 // pred_region
      _
    $region33: #{abxi_forward.5} parent=1 // pred_fallthru
      _
    // Predicated region
    $region34: #{abxi_forward.5} parent=1 // pred_check
      _
    $region35: #{abxi_forward.5} parent=1 // pred_check_branch
      %35 = sbr.rel (0) target = $region37
    $region36: #{abxi_forward.5} parent=1 // pred_region
      _
    $region37: #{abxi_forward.5} parent=1 // pred_fallthru
      _
    // Predicated region
    $region38: #{abxi_forward.5} parent=1 // pred_check
      _
    $region39: #{abxi_forward.5} parent=1 // pred_check_branch
      %37 = sbr.rel (0) target = $region41
    $region40: #{abxi_forward.5} parent=1 // pred_region
      _
    $region41: #{abxi_forward.5} parent=1 // pred_fallthru
      _
    // Predicated region
    $region42: #{abxi_forward.5} parent=1 // pred_check
      _
    $region43: #{abxi_forward.5} parent=1 // pred_check_branch
      %39 = sbr.rel (0) target = $region45
    $region44: #{abxi_forward.5} parent=1 // pred_region
      _
    $region45: #{abxi_forward.5} parent=1 // pred_fallthru
      _
    // Predicated region
    $region46: #{abxi_forward.5} parent=1 // pred_check
      _
    $region47: #{abxi_forward.5} parent=1 // pred_check_branch
      %41 = sbr.rel (0) target = $region49
    $region48: #{abxi_forward.5} parent=1 // pred_region
      _
    $region49: #{abxi_forward.5} parent=1 // pred_fallthru
      _
    %v42 = vld [vmem:[%s0] sm:$0xff]
    %v43 = vld [vmem:[%s0 + $0x8] sm:$0xff]
    %v44 = vld [vmem:[%s1] sm:$0xff]
    %v45 = vld [vmem:[%s1 + $0x8] sm:$0xff]
    %v46 = vld [vmem:[%s2] sm:$0xff]
    %v47 = vld [vmem:[%s2 + $0x8] sm:$0xff]
    %v48 = vld [vmem:[%s3] sm:$0xff]
    %v49 = vld [vmem:[%s3 + $0x8] sm:$0xff]
    %v50 = vld [vmem:[%s4] sm:$0xff]
    %v51 = vld [vmem:[%s4 + $0x8] sm:$0xff]
    %v52 = vld [vmem:[%s5] sm:$0xff]
    %v53 = vld [vmem:[%s5 + $0x8] sm:$0xff]
    %v54 = vld [vmem:[%s5 + $0x10] sm:$0xff]
    %v55 = vld [vmem:[%s5 + $0x18] sm:$0xff]
    %v56 = vld [vmem:[%s5 + $0x20] sm:$0xff]
    %v57 = vld [vmem:[%s5 + $0x28] sm:$0xff]
    %v58 = vld [vmem:[%s5 + $0x30] sm:$0xff]
    %v59 = vld [vmem:[%s5 + $0x38] sm:$0xff]
    %v60 = vld [vmem:[%s5 + $0x40] sm:$0xff]
    %v61 = vld [vmem:[%s5 + $0x48] sm:$0xff]
    %v62 = vld [vmem:[%s5 + $0x50] sm:$0xff]
    %v63 = vld [vmem:[%s5 + $0x58] sm:$0xff]
    %v64 = vld [vmem:[%s5 + $0x60] sm:$0xff]
    %v65 = vld [vmem:[%s5 + $0x68] sm:$0xff]
    %v66 = vld [vmem:[%s5 + $0x70] sm:$0xff]
    %v67 = vld [vmem:[%s5 + $0x78] sm:$0xff]
    %v68 = vld [vmem:[%s6] sm:$0x1]
    %v70 = vlaneseq
    %v71 = vshrl.u32 %v70, 7
    %v72 = vsub.s32 0, %v71
    %v73 = vrot.slane %v68, %v72
    %75 = vmatprep.subr.mxu0 0.0
    %76 = vmatpush1.msra.mxu0 %v67
    %77 = vmatprep.subr.mxu0 0.0
    %78 = vmatpush1.msra.mxu0 %v66
    %79 = vmatprep.subr.mxu0 0.0
    %80 = vmatpush1.msra.mxu0 %v65
    %81 = vmatprep.subr.mxu0 0.0
    %82 = vmatpush1.msra.mxu0 %v64
    %83 = vmatprep.subr.mxu0 0.0
    %84 = vmatpush1.msra.mxu0 %v63
    %85 = vmatprep.subr.mxu0 0.0
    %86 = vmatpush1.msra.mxu0 %v62
    %87 = vmatprep.subr.mxu0 0.0
    %88 = vmatpush1.msra.mxu0 %v61
    %89 = vmatprep.subr.mxu0 0.0
    %90 = vmatpush1.msra.mxu0 %v60
    %91 = vmatprep.subr.mxu0 0.0
    %92 = vmatpush1.msra.mxu0 %v59
    %93 = vmatprep.subr.mxu0 0.0
    %94 = vmatpush1.msra.mxu0 %v58
    %95 = vmatprep.subr.mxu0 0.0
    %96 = vmatpush1.msra.mxu0 %v57
    %97 = vmatprep.subr.mxu0 0.0
    %98 = vmatpush1.msra.mxu0 %v56
    %99 = vmatprep.subr.mxu0 0.0
    %100 = vmatpush1.msra.mxu0 %v55
    %101 = vmatprep.subr.mxu0 0.0
    %102 = vmatpush1.msra.mxu0 %v54
    %103 = vmatprep.subr.mxu0 0.0
    %104 = vmatpush1.msra.mxu0 %v53
    %105 = vmatprep.subr.mxu0 0.0
    %106 = vmatpush1.msra.mxu0 %v52
    %107 = vmatprep.subr.mxu0 0.0
    %108 = vmatpush2.msra.mxu0 0.0
    %109 = vmatprep.subr.mxu0 0.0
    %110 = vmatpush2.msra.mxu0 0.0
    %111 = vmatprep.subr.mxu0 0.0
    %112 = vmatpush2.msra.mxu0 0.0
    %113 = vmatprep.subr.mxu0 0.0
    %114 = vmatpush2.msra.mxu0 0.0
    %115 = vmatprep.subr.mxu0 0.0
    %116 = vmatpush2.msra.mxu0 0.0
    %117 = vmatprep.subr.mxu0 0.0
    %118 = vmatpush2.msra.mxu0 0.0
    %119 = vmatprep.subr.mxu0 0.0
    %120 = vmatpush2.msra.mxu0 0.0
    %121 = vmatprep.subr.mxu0 0.0
    %122 = vmatpush2.msra.mxu0 0.0
    %123 = vmatprep.subr.mxu0 0.0
    %124 = vmatpush2.msra.mxu0 0.0
    %125 = vmatprep.subr.mxu0 0.0
    %126 = vmatpush2.msra.mxu0 0.0
    %127 = vmatprep.subr.mxu0 0.0
    %128 = vmatpush2.msra.mxu0 0.0
    %129 = vmatprep.subr.mxu0 0.0
    %130 = vmatpush2.msra.mxu0 0.0
    %131 = vmatprep.subr.mxu0 0.0
    %132 = vmatpush2.msra.mxu0 0.0
    %133 = vmatprep.subr.mxu0 0.0
    %134 = vmatpush2.msra.mxu0 0.0
    %135 = vmatprep.subr.mxu0 0.0
    %136 = vmatpush2.msra.mxu0 0.0
    %137 = vmatprep.subr.mxu0 0.0
    %138 = vmatpush2.msra.mxu0 0.0
    %139 = vmatprep.mubr.f32.mxu0 0.0
    %140 = vmatmul.mubr.f32.gmra.mxu0 %v42
    %v141 = vpop.f32.mrf.mxu0
    %v142 = vadd.f32 %v73, %v141
    %v143 = vpop.f32.mrf.mxu0
    %144 = vmatprep.mubr.f32.mxu0 0.0
    %145 = vmatmul.mubr.f32.gmra.mxu0 %v43
    %v146 = vpop.f32.mrf.mxu0
    %v147 = vadd.f32 %v73, %v146
    %v148 = vpop.f32.mrf.mxu0
    %149 = vdwg.mxu0
    %v150 = vmul.f32 %v142, 0.5
    %v151 = vmul.f32 %v147, 0.5
    %v152 = vmul.f32 %v142, 0.044715
    %v153 = vmul.f32 %v147, 0.044715
    %v154 = vmul.f32 %v152, %v142
    %v155 = vmul.f32 %v153, %v147
    %v156 = vmul.f32 %v154, %v142
    %v157 = vmul.f32 %v155, %v147
    %v158 = vadd.f32 %v142, %v156
    %v159 = vadd.f32 %v147, %v157
    %v160 = vmul.f32 %v158, 0.7978846
    %v161 = vmul.f32 %v159, 0.7978846
    %v162 = vtanh.pop %v160
    %v163 = vtanh.pop %v161
    %v164 = vadd.f32 %v162, 1.0
    %v165 = vadd.f32 %v163, 1.0
    %v166 = vmul.f32 %v150, %v164
    %v167 = vmul.f32 %v151, %v165
    %v168 = vld [vmem:[%s7] sm:$0xff]
    %v169 = vld [vmem:[%s7 + $0x8] sm:$0xff]
    %v170 = vld [vmem:[%s7 + $0x10] sm:$0xff]
    %v171 = vld [vmem:[%s7 + $0x18] sm:$0xff]
    %v172 = vld [vmem:[%s7 + $0x20] sm:$0xff]
    %v173 = vld [vmem:[%s7 + $0x28] sm:$0xff]
    %v174 = vld [vmem:[%s7 + $0x30] sm:$0xff]
    %v175 = vld [vmem:[%s7 + $0x38] sm:$0xff]
    %v176 = vld [vmem:[%s7 + $0x40] sm:$0xff]
    %v177 = vld [vmem:[%s7 + $0x48] sm:$0xff]
    %v178 = vld [vmem:[%s7 + $0x50] sm:$0xff]
    %v179 = vld [vmem:[%s7 + $0x58] sm:$0xff]
    %v180 = vld [vmem:[%s7 + $0x60] sm:$0xff]
    %v181 = vld [vmem:[%s7 + $0x68] sm:$0xff]
    %v182 = vld [vmem:[%s7 + $0x70] sm:$0xff]
    %v183 = vld [vmem:[%s7 + $0x78] sm:$0xff]
    %v184 = vld [vmem:[%s8] sm:$0x1]
    %v186 = vlaneseq
    %v187 = vshrl.u32 %v186, 7
    %v188 = vsub.s32 0, %v187
    %v189 = vrot.slane %v184, %v188
    %191 = vmatprep.subr.mxu0 0.0
    %192 = vmatpush1.msra.mxu0 %v183
    %193 = vmatprep.subr.mxu0 0.0
    %194 = vmatpush1.msra.mxu0 %v182
    %195 = vmatprep.subr.mxu0 0.0
    %196 = vmatpush1.msra.mxu0 %v181
    %197 = vmatprep.subr.mxu0 0.0
    %198 = vmatpush1.msra.mxu0 %v180
    %199 = vmatprep.subr.mxu0 0.0
    %200 = vmatpush1.msra.mxu0 %v179
    %201 = vmatprep.subr.mxu0 0.0
    %202 = vmatpush1.msra.mxu0 %v178
    %203 = vmatprep.subr.mxu0 0.0
    %204 = vmatpush1.msra.mxu0 %v177
    %205 = vmatprep.subr.mxu0 0.0
    %206 = vmatpush1.msra.mxu0 %v176
    %207 = vmatprep.subr.mxu0 0.0
    %208 = vmatpush1.msra.mxu0 %v175
    %209 = vmatprep.subr.mxu0 0.0
    %210 = vmatpush1.msra.mxu0 %v174
    %211 = vmatprep.subr.mxu0 0.0
    %212 = vmatpush1.msra.mxu0 %v173
    %213 = vmatprep.subr.mxu0 0.0
    %214 = vmatpush1.msra.mxu0 %v172
    %215 = vmatprep.subr.mxu0 0.0
    %216 = vmatpush1.msra.mxu0 %v171
    %217 = vmatprep.subr.mxu0 0.0
    %218 = vmatpush1.msra.mxu0 %v170
    %219 = vmatprep.subr.mxu0 0.0
    %220 = vmatpush1.msra.mxu0 %v169
    %221 = vmatprep.subr.mxu0 0.0
    %222 = vmatpush1.msra.mxu0 %v168
    %223 = vmatprep.subr.mxu0 0.0
    %224 = vmatpush2.msra.mxu0 0.0
    %225 = vmatprep.subr.mxu0 0.0
    %226 = vmatpush2.msra.mxu0 0.0
    %227 = vmatprep.subr.mxu0 0.0
    %228 = vmatpush2.msra.mxu0 0.0
    %229 = vmatprep.subr.mxu0 0.0
    %230 = vmatpush2.msra.mxu0 0.0
    %231 = vmatprep.subr.mxu0 0.0
    %232 = vmatpush2.msra.mxu0 0.0
    %233 = vmatprep.subr.mxu0 0.0
    %234 = vmatpush2.msra.mxu0 0.0
    %235 = vmatprep.subr.mxu0 0.0
    %236 = vmatpush2.msra.mxu0 0.0
    %237 = vmatprep.subr.mxu0 0.0
    %238 = vmatpush2.msra.mxu0 0.0
    %239 = vmatprep.subr.mxu0 0.0
    %240 = vmatpush2.msra.mxu0 0.0
    %241 = vmatprep.subr.mxu0 0.0
    %242 = vmatpush2.msra.mxu0 0.0
    %243 = vmatprep.subr.mxu0 0.0
    %244 = vmatpush2.msra.mxu0 0.0
    %245 = vmatprep.subr.mxu0 0.0
    %246 = vmatpush2.msra.mxu0 0.0
    %247 = vmatprep.subr.mxu0 0.0
    %248 = vmatpush2.msra.mxu0 0.0
    %249 = vmatprep.subr.mxu0 0.0
    %250 = vmatpush2.msra.mxu0 0.0
    %251 = vmatprep.subr.mxu0 0.0
    %252 = vmatpush2.msra.mxu0 0.0
    %253 = vmatprep.subr.mxu0 0.0
    %254 = vmatpush2.msra.mxu0 0.0
    %255 = vmatprep.mubr.f32.mxu0 0.0
    %256 = vmatmul.mubr.f32.gmra.mxu0 %v166
    %v257 = vpop.f32.mrf.mxu0
    %v258 = vadd.f32 %v189, %v257
    %v259 = vpop.f32.mrf.mxu0
    %260 = vmatprep.mubr.f32.mxu0 0.0
    %261 = vmatmul.mubr.f32.gmra.mxu0 %v167
    %v262 = vpop.f32.mrf.mxu0
    %v263 = vadd.f32 %v189, %v262
    %v264 = vpop.f32.mrf.mxu0
    %265 = vdwg.mxu0
    %s266 = scalar_lea.vmem %s5, 128
    %v267 = vld [vmem:[%s266] sm:$0xff]
    %v268 = vld [vmem:[%s266 + $0x8] sm:$0xff]
    %v269 = vld [vmem:[%s266 + $0x10] sm:$0xff]
    %v270 = vld [vmem:[%s266 + $0x18] sm:$0xff]
    %v271 = vld [vmem:[%s266 + $0x20] sm:$0xff]
    %v272 = vld [vmem:[%s266 + $0x28] sm:$0xff]
    %v273 = vld [vmem:[%s266 + $0x30] sm:$0xff]
    %v274 = vld [vmem:[%s266 + $0x38] sm:$0xff]
    %v275 = vld [vmem:[%s266 + $0x40] sm:$0xff]
    %v276 = vld [vmem:[%s266 + $0x48] sm:$0xff]
    %v277 = vld [vmem:[%s266 + $0x50] sm:$0xff]
    %v278 = vld [vmem:[%s266 + $0x58] sm:$0xff]
    %v279 = vld [vmem:[%s266 + $0x60] sm:$0xff]
    %v280 = vld [vmem:[%s266 + $0x68] sm:$0xff]
    %v281 = vld [vmem:[%s266 + $0x70] sm:$0xff]
    %v282 = vld [vmem:[%s266 + $0x78] sm:$0xff]
    %s283 = scalar_lea.vmem %s6, 1
    %v284 = vld [vmem:[%s283] sm:$0x1]
    %v286 = vlaneseq
    %v287 = vshrl.u32 %v286, 7
    %v288 = vsub.s32 0, %v287
    %v289 = vrot.slane %v284, %v288
    %291 = vmatprep.subr.mxu0 0.0
    %292 = vmatpush1.msra.mxu0 %v282
    %293 = vmatprep.subr.mxu0 0.0
    %294 = vmatpush1.msra.mxu0 %v281
    %295 = vmatprep.subr.mxu0 0.0
    %296 = vmatpush1.msra.mxu0 %v280
    %297 = vmatprep.subr.mxu0 0.0
    %298 = vmatpush1.msra.mxu0 %v279
    %299 = vmatprep.subr.mxu0 0.0
    %300 = vmatpush1.msra.mxu0 %v278
    %301 = vmatprep.subr.mxu0 0.0
    %302 = vmatpush1.msra.mxu0 %v277
    %303 = vmatprep.subr.mxu0 0.0
    %304 = vmatpush1.msra.mxu0 %v276
    %305 = vmatprep.subr.mxu0 0.0
    %306 = vmatpush1.msra.mxu0 %v275
    %307 = vmatprep.subr.mxu0 0.0
    %308 = vmatpush1.msra.mxu0 %v274
    %309 = vmatprep.subr.mxu0 0.0
    %310 = vmatpush1.msra.mxu0 %v273
    %311 = vmatprep.subr.mxu0 0.0
    %312 = vmatpush1.msra.mxu0 %v272
    %313 = vmatprep.subr.mxu0 0.0
    %314 = vmatpush1.msra.mxu0 %v271
    %315 = vmatprep.subr.mxu0 0.0
    %316 = vmatpush1.msra.mxu0 %v270
    %317 = vmatprep.subr.mxu0 0.0
    %318 = vmatpush1.msra.mxu0 %v269
    %319 = vmatprep.subr.mxu0 0.0
    %320 = vmatpush1.msra.mxu0 %v268
    %321 = vmatprep.subr.mxu0 0.0
    %322 = vmatpush1.msra.mxu0 %v267
    %323 = vmatprep.subr.mxu0 0.0
    %324 = vmatpush2.msra.mxu0 0.0
    %325 = vmatprep.subr.mxu0 0.0
    %326 = vmatpush2.msra.mxu0 0.0
    %327 = vmatprep.subr.mxu0 0.0
    %328 = vmatpush2.msra.mxu0 0.0
    %329 = vmatprep.subr.mxu0 0.0
    %330 = vmatpush2.msra.mxu0 0.0
    %331 = vmatprep.subr.mxu0 0.0
    %332 = vmatpush2.msra.mxu0 0.0
    %333 = vmatprep.subr.mxu0 0.0
    %334 = vmatpush2.msra.mxu0 0.0
    %335 = vmatprep.subr.mxu0 0.0
    %336 = vmatpush2.msra.mxu0 0.0
    %337 = vmatprep.subr.mxu0 0.0
    %338 = vmatpush2.msra.mxu0 0.0
    %339 = vmatprep.subr.mxu0 0.0
    %340 = vmatpush2.msra.mxu0 0.0
    %341 = vmatprep.subr.mxu0 0.0
    %342 = vmatpush2.msra.mxu0 0.0
    %343 = vmatprep.subr.mxu0 0.0
    %344 = vmatpush2.msra.mxu0 0.0
    %345 = vmatprep.subr.mxu0 0.0
    %346 = vmatpush2.msra.mxu0 0.0
    %347 = vmatprep.subr.mxu0 0.0
    %348 = vmatpush2.msra.mxu0 0.0
    %349 = vmatprep.subr.mxu0 0.0
    %350 = vmatpush2.msra.mxu0 0.0
    %351 = vmatprep.subr.mxu0 0.0
    %352 = vmatpush2.msra.mxu0 0.0
    %353 = vmatprep.subr.mxu0 0.0
    %354 = vmatpush2.msra.mxu0 0.0
    %355 = vmatprep.mubr.f32.mxu0 0.0
    %356 = vmatmul.mubr.f32.gmra.mxu0 %v44
    %v357 = vpop.f32.mrf.mxu0
    %v358 = vadd.f32 %v289, %v357
    %v359 = vpop.f32.mrf.mxu0
    %360 = vmatprep.mubr.f32.mxu0 0.0
    %361 = vmatmul.mubr.f32.gmra.mxu0 %v45
    %v362 = vpop.f32.mrf.mxu0
    %v363 = vadd.f32 %v289, %v362
    %v364 = vpop.f32.mrf.mxu0
    %365 = vdwg.mxu0
    %v366 = vmul.f32 %v358, 0.5
    %v367 = vmul.f32 %v363, 0.5
    %v368 = vmul.f32 %v358, 0.044715
    %v369 = vmul.f32 %v363, 0.044715
    %v370 = vmul.f32 %v368, %v358
    %v371 = vmul.f32 %v369, %v363
    %v372 = vmul.f32 %v370, %v358
    %v373 = vmul.f32 %v371, %v363
    %v374 = vadd.f32 %v358, %v372
    %v375 = vadd.f32 %v363, %v373
    %v376 = vmul.f32 %v374, 0.7978846
    %v377 = vmul.f32 %v375, 0.7978846
    %v378 = vtanh.pop %v376
    %v379 = vtanh.pop %v377
    %v380 = vadd.f32 %v378, 1.0
    %v381 = vadd.f32 %v379, 1.0
    %v382 = vmul.f32 %v366, %v380
    %v383 = vmul.f32 %v367, %v381
    %s384 = scalar_lea.vmem %s7, 128
    %v385 = vld [vmem:[%s384] sm:$0xff]
    %v386 = vld [vmem:[%s384 + $0x8] sm:$0xff]
    %v387 = vld [vmem:[%s384 + $0x10] sm:$0xff]
    %v388 = vld [vmem:[%s384 + $0x18] sm:$0xff]
    %v389 = vld [vmem:[%s384 + $0x20] sm:$0xff]
    %v390 = vld [vmem:[%s384 + $0x28] sm:$0xff]
    %v391 = vld [vmem:[%s384 + $0x30] sm:$0xff]
    %v392 = vld [vmem:[%s384 + $0x38] sm:$0xff]
    %v393 = vld [vmem:[%s384 + $0x40] sm:$0xff]
    %v394 = vld [vmem:[%s384 + $0x48] sm:$0xff]
    %v395 = vld [vmem:[%s384 + $0x50] sm:$0xff]
    %v396 = vld [vmem:[%s384 + $0x58] sm:$0xff]
    %v397 = vld [vmem:[%s384 + $0x60] sm:$0xff]
    %v398 = vld [vmem:[%s384 + $0x68] sm:$0xff]
    %v399 = vld [vmem:[%s384 + $0x70] sm:$0xff]
    %v400 = vld [vmem:[%s384 + $0x78] sm:$0xff]
    %s401 = scalar_lea.vmem %s8, 1
    %v402 = vld [vmem:[%s401] sm:$0x1]
    %v404 = vlaneseq
    %v405 = vshrl.u32 %v404, 7
    %v406 = vsub.s32 0, %v405
    %v407 = vrot.slane %v402, %v406
    %409 = vmatprep.subr.mxu0 0.0
    %410 = vmatpush1.msra.mxu0 %v400
    %411 = vmatprep.subr.mxu0 0.0
    %412 = vmatpush1.msra.mxu0 %v399
    %413 = vmatprep.subr.mxu0 0.0
    %414 = vmatpush1.msra.mxu0 %v398
    %415 = vmatprep.subr.mxu0 0.0
    %416 = vmatpush1.msra.mxu0 %v397
    %417 = vmatprep.subr.mxu0 0.0
    %418 = vmatpush1.msra.mxu0 %v396
    %419 = vmatprep.subr.mxu0 0.0
    %420 = vmatpush1.msra.mxu0 %v395
    %421 = vmatprep.subr.mxu0 0.0
    %422 = vmatpush1.msra.mxu0 %v394
    %423 = vmatprep.subr.mxu0 0.0
    %424 = vmatpush1.msra.mxu0 %v393
    %425 = vmatprep.subr.mxu0 0.0
    %426 = vmatpush1.msra.mxu0 %v392
    %427 = vmatprep.subr.mxu0 0.0
    %428 = vmatpush1.msra.mxu0 %v391
    %429 = vmatprep.subr.mxu0 0.0
    %430 = vmatpush1.msra.mxu0 %v390
    %431 = vmatprep.subr.mxu0 0.0
    %432 = vmatpush1.msra.mxu0 %v389
    %433 = vmatprep.subr.mxu0 0.0
    %434 = vmatpush1.msra.mxu0 %v388
    %435 = vmatprep.subr.mxu0 0.0
    %436 = vmatpush1.msra.mxu0 %v387
    %437 = vmatprep.subr.mxu0 0.0
    %438 = vmatpush1.msra.mxu0 %v386
    %439 = vmatprep.subr.mxu0 0.0
    %440 = vmatpush1.msra.mxu0 %v385
    %441 = vmatprep.subr.mxu0 0.0
    %442 = vmatpush2.msra.mxu0 0.0
    %443 = vmatprep.subr.mxu0 0.0
    %444 = vmatpush2.msra.mxu0 0.0
    %445 = vmatprep.subr.mxu0 0.0
    %446 = vmatpush2.msra.mxu0 0.0
    %447 = vmatprep.subr.mxu0 0.0
    %448 = vmatpush2.msra.mxu0 0.0
    %449 = vmatprep.subr.mxu0 0.0
    %450 = vmatpush2.msra.mxu0 0.0
    %451 = vmatprep.subr.mxu0 0.0
    %452 = vmatpush2.msra.mxu0 0.0
    %453 = vmatprep.subr.mxu0 0.0
    %454 = vmatpush2.msra.mxu0 0.0
    %455 = vmatprep.subr.mxu0 0.0
    %456 = vmatpush2.msra.mxu0 0.0
    %457 = vmatprep.subr.mxu0 0.0
    %458 = vmatpush2.msra.mxu0 0.0
    %459 = vmatprep.subr.mxu0 0.0
    %460 = vmatpush2.msra.mxu0 0.0
    %461 = vmatprep.subr.mxu0 0.0
    %462 = vmatpush2.msra.mxu0 0.0
    %463 = vmatprep.subr.mxu0 0.0
    %464 = vmatpush2.msra.mxu0 0.0
    %465 = vmatprep.subr.mxu0 0.0
    %466 = vmatpush2.msra.mxu0 0.0
    %467 = vmatprep.subr.mxu0 0.0
    %468 = vmatpush2.msra.mxu0 0.0
    %469 = vmatprep.subr.mxu0 0.0
    %470 = vmatpush2.msra.mxu0 0.0
    %471 = vmatprep.subr.mxu0 0.0
    %472 = vmatpush2.msra.mxu0 0.0
    %473 = vmatprep.mubr.f32.mxu0 0.0
    %474 = vmatmul.mubr.f32.gmra.mxu0 %v382
    %v475 = vpop.f32.mrf.mxu0
    %v476 = vadd.f32 %v407, %v475
    %v477 = vpop.f32.mrf.mxu0
    %478 = vmatprep.mubr.f32.mxu0 0.0
    %479 = vmatmul.mubr.f32.gmra.mxu0 %v383
    %v480 = vpop.f32.mrf.mxu0
    %v481 = vadd.f32 %v407, %v480
    %v482 = vpop.f32.mrf.mxu0
    %483 = vdwg.mxu0
    %s484 = scalar_lea.vmem %s5, 256
    %v485 = vld [vmem:[%s484] sm:$0xff]
    %v486 = vld [vmem:[%s484 + $0x8] sm:$0xff]
    %v487 = vld [vmem:[%s484 + $0x10] sm:$0xff]
    %v488 = vld [vmem:[%s484 + $0x18] sm:$0xff]
    %v489 = vld [vmem:[%s484 + $0x20] sm:$0xff]
    %v490 = vld [vmem:[%s484 + $0x28] sm:$0xff]
    %v491 = vld [vmem:[%s484 + $0x30] sm:$0xff]
    %v492 = vld [vmem:[%s484 + $0x38] sm:$0xff]
    %v493 = vld [vmem:[%s484 + $0x40] sm:$0xff]
    %v494 = vld [vmem:[%s484 + $0x48] sm:$0xff]
    %v495 = vld [vmem:[%s484 + $0x50] sm:$0xff]
    %v496 = vld [vmem:[%s484 + $0x58] sm:$0xff]
    %v497 = vld [vmem:[%s484 + $0x60] sm:$0xff]
    %v498 = vld [vmem:[%s484 + $0x68] sm:$0xff]
    %v499 = vld [vmem:[%s484 + $0x70] sm:$0xff]
    %v500 = vld [vmem:[%s484 + $0x78] sm:$0xff]
    %s501 = scalar_lea.vmem %s6, 2
    %v502 = vld [vmem:[%s501] sm:$0x1]
    %v504 = vlaneseq
    %v505 = vshrl.u32 %v504, 7
    %v506 = vsub.s32 0, %v505
    %v507 = vrot.slane %v502, %v506
    %509 = vmatprep.subr.mxu0 0.0
    %510 = vmatpush1.msra.mxu0 %v500
    %511 = vmatprep.subr.mxu0 0.0
    %512 = vmatpush1.msra.mxu0 %v499
    %513 = vmatprep.subr.mxu0 0.0
    %514 = vmatpush1.msra.mxu0 %v498
    %515 = vmatprep.subr.mxu0 0.0
    %516 = vmatpush1.msra.mxu0 %v497
    %517 = vmatprep.subr.mxu0 0.0
    %518 = vmatpush1.msra.mxu0 %v496
    %519 = vmatprep.subr.mxu0 0.0
    %520 = vmatpush1.msra.mxu0 %v495
    %521 = vmatprep.subr.mxu0 0.0
    %522 = vmatpush1.msra.mxu0 %v494
    %523 = vmatprep.subr.mxu0 0.0
    %524 = vmatpush1.msra.mxu0 %v493
    %525 = vmatprep.subr.mxu0 0.0
    %526 = vmatpush1.msra.mxu0 %v492
    %527 = vmatprep.subr.mxu0 0.0
    %528 = vmatpush1.msra.mxu0 %v491
    %529 = vmatprep.subr.mxu0 0.0
    %530 = vmatpush1.msra.mxu0 %v490
    %531 = vmatprep.subr.mxu0 0.0
    %532 = vmatpush1.msra.mxu0 %v489
    %533 = vmatprep.subr.mxu0 0.0
    %534 = vmatpush1.msra.mxu0 %v488
    %535 = vmatprep.subr.mxu0 0.0
    %536 = vmatpush1.msra.mxu0 %v487
    %537 = vmatprep.subr.mxu0 0.0
    %538 = vmatpush1.msra.mxu0 %v486
    %539 = vmatprep.subr.mxu0 0.0
    %540 = vmatpush1.msra.mxu0 %v485
    %541 = vmatprep.subr.mxu0 0.0
    %542 = vmatpush2.msra.mxu0 0.0
    %543 = vmatprep.subr.mxu0 0.0
    %544 = vmatpush2.msra.mxu0 0.0
    %545 = vmatprep.subr.mxu0 0.0
    %546 = vmatpush2.msra.mxu0 0.0
    %547 = vmatprep.subr.mxu0 0.0
    %548 = vmatpush2.msra.mxu0 0.0
    %549 = vmatprep.subr.mxu0 0.0
    %550 = vmatpush2.msra.mxu0 0.0
    %551 = vmatprep.subr.mxu0 0.0
    %552 = vmatpush2.msra.mxu0 0.0
    %553 = vmatprep.subr.mxu0 0.0
    %554 = vmatpush2.msra.mxu0 0.0
    %555 = vmatprep.subr.mxu0 0.0
    %556 = vmatpush2.msra.mxu0 0.0
    %557 = vmatprep.subr.mxu0 0.0
    %558 = vmatpush2.msra.mxu0 0.0
    %559 = vmatprep.subr.mxu0 0.0
    %560 = vmatpush2.msra.mxu0 0.0
    %561 = vmatprep.subr.mxu0 0.0
    %562 = vmatpush2.msra.mxu0 0.0
    %563 = vmatprep.subr.mxu0 0.0
    %564 = vmatpush2.msra.mxu0 0.0
    %565 = vmatprep.subr.mxu0 0.0
    %566 = vmatpush2.msra.mxu0 0.0
    %567 = vmatprep.subr.mxu0 0.0
    %568 = vmatpush2.msra.mxu0 0.0
    %569 = vmatprep.subr.mxu0 0.0
    %570 = vmatpush2.msra.mxu0 0.0
    %571 = vmatprep.subr.mxu0 0.0
    %572 = vmatpush2.msra.mxu0 0.0
    %573 = vmatprep.mubr.f32.mxu0 0.0
    %574 = vmatmul.mubr.f32.gmra.mxu0 %v46
    %v575 = vpop.f32.mrf.mxu0
    %v576 = vadd.f32 %v507, %v575
    %v577 = vpop.f32.mrf.mxu0
    %578 = vmatprep.mubr.f32.mxu0 0.0
    %579 = vmatmul.mubr.f32.gmra.mxu0 %v47
    %v580 = vpop.f32.mrf.mxu0
    %v581 = vadd.f32 %v507, %v580
    %v582 = vpop.f32.mrf.mxu0
    %583 = vdwg.mxu0
    %v584 = vmul.f32 %v576, 0.5
    %v585 = vmul.f32 %v581, 0.5
    %v586 = vmul.f32 %v576, 0.044715
    %v587 = vmul.f32 %v581, 0.044715
    %v588 = vmul.f32 %v586, %v576
    %v589 = vmul.f32 %v587, %v581
    %v590 = vmul.f32 %v588, %v576
    %v591 = vmul.f32 %v589, %v581
    %v592 = vadd.f32 %v576, %v590
    %v593 = vadd.f32 %v581, %v591
    %v594 = vmul.f32 %v592, 0.7978846
    %v595 = vmul.f32 %v593, 0.7978846
    %v596 = vtanh.pop %v594
    %v597 = vtanh.pop %v595
    %v598 = vadd.f32 %v596, 1.0
    %v599 = vadd.f32 %v597, 1.0
    %v600 = vmul.f32 %v584, %v598
    %v601 = vmul.f32 %v585, %v599
    %s602 = scalar_lea.vmem %s7, 256
    %v603 = vld [vmem:[%s602] sm:$0xff]
    %v604 = vld [vmem:[%s602 + $0x8] sm:$0xff]
    %v605 = vld [vmem:[%s602 + $0x10] sm:$0xff]
    %v606 = vld [vmem:[%s602 + $0x18] sm:$0xff]
    %v607 = vld [vmem:[%s602 + $0x20] sm:$0xff]
    %v608 = vld [vmem:[%s602 + $0x28] sm:$0xff]
    %v609 = vld [vmem:[%s602 + $0x30] sm:$0xff]
    %v610 = vld [vmem:[%s602 + $0x38] sm:$0xff]
    %v611 = vld [vmem:[%s602 + $0x40] sm:$0xff]
    %v612 = vld [vmem:[%s602 + $0x48] sm:$0xff]
    %v613 = vld [vmem:[%s602 + $0x50] sm:$0xff]
    %v614 = vld [vmem:[%s602 + $0x58] sm:$0xff]
    %v615 = vld [vmem:[%s602 + $0x60] sm:$0xff]
    %v616 = vld [vmem:[%s602 + $0x68] sm:$0xff]
    %v617 = vld [vmem:[%s602 + $0x70] sm:$0xff]
    %v618 = vld [vmem:[%s602 + $0x78] sm:$0xff]
    %s619 = scalar_lea.vmem %s8, 2
    %v620 = vld [vmem:[%s619] sm:$0x1]
    %v622 = vlaneseq
    %v623 = vshrl.u32 %v622, 7
    %v624 = vsub.s32 0, %v623
    %v625 = vrot.slane %v620, %v624
    %627 = vmatprep.subr.mxu0 0.0
    %628 = vmatpush1.msra.mxu0 %v618
    %629 = vmatprep.subr.mxu0 0.0
    %630 = vmatpush1.msra.mxu0 %v617
    %631 = vmatprep.subr.mxu0 0.0
    %632 = vmatpush1.msra.mxu0 %v616
    %633 = vmatprep.subr.mxu0 0.0
    %634 = vmatpush1.msra.mxu0 %v615
    %635 = vmatprep.subr.mxu0 0.0
    %636 = vmatpush1.msra.mxu0 %v614
    %637 = vmatprep.subr.mxu0 0.0
    %638 = vmatpush1.msra.mxu0 %v613
    %639 = vmatprep.subr.mxu0 0.0
    %640 = vmatpush1.msra.mxu0 %v612
    %641 = vmatprep.subr.mxu0 0.0
    %642 = vmatpush1.msra.mxu0 %v611
    %643 = vmatprep.subr.mxu0 0.0
    %644 = vmatpush1.msra.mxu0 %v610
    %645 = vmatprep.subr.mxu0 0.0
    %646 = vmatpush1.msra.mxu0 %v609
    %647 = vmatprep.subr.mxu0 0.0
    %648 = vmatpush1.msra.mxu0 %v608
    %649 = vmatprep.subr.mxu0 0.0
    %650 = vmatpush1.msra.mxu0 %v607
    %651 = vmatprep.subr.mxu0 0.0
    %652 = vmatpush1.msra.mxu0 %v606
    %653 = vmatprep.subr.mxu0 0.0
    %654 = vmatpush1.msra.mxu0 %v605
    %655 = vmatprep.subr.mxu0 0.0
    %656 = vmatpush1.msra.mxu0 %v604
    %657 = vmatprep.subr.mxu0 0.0
    %658 = vmatpush1.msra.mxu0 %v603
    %659 = vmatprep.subr.mxu0 0.0
    %660 = vmatpush2.msra.mxu0 0.0
    %661 = vmatprep.subr.mxu0 0.0
    %662 = vmatpush2.msra.mxu0 0.0
    %663 = vmatprep.subr.mxu0 0.0
    %664 = vmatpush2.msra.mxu0 0.0
    %665 = vmatprep.subr.mxu0 0.0
    %666 = vmatpush2.msra.mxu0 0.0
    %667 = vmatprep.subr.mxu0 0.0
    %668 = vmatpush2.msra.mxu0 0.0
    %669 = vmatprep.subr.mxu0 0.0
    %670 = vmatpush2.msra.mxu0 0.0
    %671 = vmatprep.subr.mxu0 0.0
    %672 = vmatpush2.msra.mxu0 0.0
    %673 = vmatprep.subr.mxu0 0.0
    %674 = vmatpush2.msra.mxu0 0.0
    %675 = vmatprep.subr.mxu0 0.0
    %676 = vmatpush2.msra.mxu0 0.0
    %677 = vmatprep.subr.mxu0 0.0
    %678 = vmatpush2.msra.mxu0 0.0
    %679 = vmatprep.subr.mxu0 0.0
    %680 = vmatpush2.msra.mxu0 0.0
    %681 = vmatprep.subr.mxu0 0.0
    %682 = vmatpush2.msra.mxu0 0.0
    %683 = vmatprep.subr.mxu0 0.0
    %684 = vmatpush2.msra.mxu0 0.0
    %685 = vmatprep.subr.mxu0 0.0
    %686 = vmatpush2.msra.mxu0 0.0
    %687 = vmatprep.subr.mxu0 0.0
    %688 = vmatpush2.msra.mxu0 0.0
    %689 = vmatprep.subr.mxu0 0.0
    %690 = vmatpush2.msra.mxu0 0.0
    %691 = vmatprep.mubr.f32.mxu0 0.0
    %692 = vmatmul.mubr.f32.gmra.mxu0 %v600
    %v693 = vpop.f32.mrf.mxu0
    %v694 = vadd.f32 %v625, %v693
    %v695 = vpop.f32.mrf.mxu0
    %696 = vmatprep.mubr.f32.mxu0 0.0
    %697 = vmatmul.mubr.f32.gmra.mxu0 %v601
    %v698 = vpop.f32.mrf.mxu0
    %v699 = vadd.f32 %v625, %v698
    %v700 = vpop.f32.mrf.mxu0
    %701 = vdwg.mxu0
    %v702 = vld [vmem:[%s9] sm:$0xff]
    %v703 = vld [vmem:[%s9 + $0x8] sm:$0xff]
    %v704 = vld [vmem:[%s9 + $0x10] sm:$0xff]
    %v705 = vld [vmem:[%s9 + $0x18] sm:$0xff]
    %v706 = vld [vmem:[%s9 + $0x20] sm:$0xff]
    %v707 = vld [vmem:[%s9 + $0x28] sm:$0xff]
    %v708 = vld [vmem:[%s9 + $0x30] sm:$0xff]
    %v709 = vld [vmem:[%s9 + $0x38] sm:$0xff]
    %v710 = vld [vmem:[%s9 + $0x40] sm:$0xff]
    %v711 = vld [vmem:[%s9 + $0x48] sm:$0xff]
    %v712 = vld [vmem:[%s9 + $0x50] sm:$0xff]
    %v713 = vld [vmem:[%s9 + $0x58] sm:$0xff]
    %v714 = vld [vmem:[%s9 + $0x60] sm:$0xff]
    %v715 = vld [vmem:[%s9 + $0x68] sm:$0xff]
    %v716 = vld [vmem:[%s9 + $0x70] sm:$0xff]
    %v717 = vld [vmem:[%s9 + $0x78] sm:$0xff]
    %718 = vmatprep.subr.mxu0 0.0
    %719 = vmatpush1.msra.mxu0 %v717
    %720 = vmatprep.subr.mxu0 0.0
    %721 = vmatpush1.msra.mxu0 %v716
    %722 = vmatprep.subr.mxu0 0.0
    %723 = vmatpush1.msra.mxu0 %v715
    %724 = vmatprep.subr.mxu0 0.0
    %725 = vmatpush1.msra.mxu0 %v714
    %726 = vmatprep.subr.mxu0 0.0
    %727 = vmatpush1.msra.mxu0 %v713
    %728 = vmatprep.subr.mxu0 0.0
    %729 = vmatpush1.msra.mxu0 %v712
    %730 = vmatprep.subr.mxu0 0.0
    %731 = vmatpush1.msra.mxu0 %v711
    %732 = vmatprep.subr.mxu0 0.0
    %733 = vmatpush1.msra.mxu0 %v710
    %734 = vmatprep.subr.mxu0 0.0
    %735 = vmatpush1.msra.mxu0 %v709
    %736 = vmatprep.subr.mxu0 0.0
    %737 = vmatpush1.msra.mxu0 %v708
    %738 = vmatprep.subr.mxu0 0.0
    %739 = vmatpush1.msra.mxu0 %v707
    %740 = vmatprep.subr.mxu0 0.0
    %741 = vmatpush1.msra.mxu0 %v706
    %742 = vmatprep.subr.mxu0 0.0
    %743 = vmatpush1.msra.mxu0 %v705
    %744 = vmatprep.subr.mxu0 0.0
    %745 = vmatpush1.msra.mxu0 %v704
    %746 = vmatprep.subr.mxu0 0.0
    %747 = vmatpush1.msra.mxu0 %v703
    %748 = vmatprep.subr.mxu0 0.0
    %749 = vmatpush1.msra.mxu0 %v702
    %750 = vmatprep.subr.mxu0 0.0
    %751 = vmatpush2.msra.mxu0 0.0
    %752 = vmatprep.subr.mxu0 0.0
    %753 = vmatpush2.msra.mxu0 0.0
    %754 = vmatprep.subr.mxu0 0.0
    %755 = vmatpush2.msra.mxu0 0.0
    %756 = vmatprep.subr.mxu0 0.0
    %757 = vmatpush2.msra.mxu0 0.0
    %758 = vmatprep.subr.mxu0 0.0
    %759 = vmatpush2.msra.mxu0 0.0
    %760 = vmatprep.subr.mxu0 0.0
    %761 = vmatpush2.msra.mxu0 0.0
    %762 = vmatprep.subr.mxu0 0.0
    %763 = vmatpush2.msra.mxu0 0.0
    %764 = vmatprep.subr.mxu0 0.0
    %765 = vmatpush2.msra.mxu0 0.0
    %766 = vmatprep.subr.mxu0 0.0
    %767 = vmatpush2.msra.mxu0 0.0
    %768 = vmatprep.subr.mxu0 0.0
    %769 = vmatpush2.msra.mxu0 0.0
    %770 = vmatprep.subr.mxu0 0.0
    %771 = vmatpush2.msra.mxu0 0.0
    %772 = vmatprep.subr.mxu0 0.0
    %773 = vmatpush2.msra.mxu0 0.0
    %774 = vmatprep.subr.mxu0 0.0
    %775 = vmatpush2.msra.mxu0 0.0
    %776 = vmatprep.subr.mxu0 0.0
    %777 = vmatpush2.msra.mxu0 0.0
    %778 = vmatprep.subr.mxu0 0.0
    %779 = vmatpush2.msra.mxu0 0.0
    %780 = vmatprep.subr.mxu0 0.0
    %781 = vmatpush2.msra.mxu0 0.0
    %782 = vmatprep.mubr.f32.mxu0 0.0
    %783 = vmatmul.mubr.f32.gmra.mxu0 %v42
    %v784 = vpop.f32.mrf.mxu0
    %v785 = vadd.f32 0.0, %v784
    %v786 = vpop.f32.mrf.mxu0
    %787 = vmatprep.mubr.f32.mxu0 0.0
    %788 = vmatmul.mubr.f32.gmra.mxu0 %v43
    %v789 = vpop.f32.mrf.mxu0
    %v790 = vadd.f32 0.0, %v789
    %v791 = vpop.f32.mrf.mxu0
    %792 = vdwg.mxu0
    %s793 = scalar_lea.vmem %s9, 128
    %v794 = vld [vmem:[%s793] sm:$0xff]
    %v795 = vld [vmem:[%s793 + $0x8] sm:$0xff]
    %v796 = vld [vmem:[%s793 + $0x10] sm:$0xff]
    %v797 = vld [vmem:[%s793 + $0x18] sm:$0xff]
    %v798 = vld [vmem:[%s793 + $0x20] sm:$0xff]
    %v799 = vld [vmem:[%s793 + $0x28] sm:$0xff]
    %v800 = vld [vmem:[%s793 + $0x30] sm:$0xff]
    %v801 = vld [vmem:[%s793 + $0x38] sm:$0xff]
    %v802 = vld [vmem:[%s793 + $0x40] sm:$0xff]
    %v803 = vld [vmem:[%s793 + $0x48] sm:$0xff]
    %v804 = vld [vmem:[%s793 + $0x50] sm:$0xff]
    %v805 = vld [vmem:[%s793 + $0x58] sm:$0xff]
    %v806 = vld [vmem:[%s793 + $0x60] sm:$0xff]
    %v807 = vld [vmem:[%s793 + $0x68] sm:$0xff]
    %v808 = vld [vmem:[%s793 + $0x70] sm:$0xff]
    %v809 = vld [vmem:[%s793 + $0x78] sm:$0xff]
    %810 = vmatprep.subr.mxu0 0.0
    %811 = vmatpush1.msra.mxu0 %v809
    %812 = vmatprep.subr.mxu0 0.0
    %813 = vmatpush1.msra.mxu0 %v808
    %814 = vmatprep.subr.mxu0 0.0
    %815 = vmatpush1.msra.mxu0 %v807
    %816 = vmatprep.subr.mxu0 0.0
    %817 = vmatpush1.msra.mxu0 %v806
    %818 = vmatprep.subr.mxu0 0.0
    %819 = vmatpush1.msra.mxu0 %v805
    %820 = vmatprep.subr.mxu0 0.0
    %821 = vmatpush1.msra.mxu0 %v804
    %822 = vmatprep.subr.mxu0 0.0
    %823 = vmatpush1.msra.mxu0 %v803
    %824 = vmatprep.subr.mxu0 0.0
    %825 = vmatpush1.msra.mxu0 %v802
    %826 = vmatprep.subr.mxu0 0.0
    %827 = vmatpush1.msra.mxu0 %v801
    %828 = vmatprep.subr.mxu0 0.0
    %829 = vmatpush1.msra.mxu0 %v800
    %830 = vmatprep.subr.mxu0 0.0
    %831 = vmatpush1.msra.mxu0 %v799
    %832 = vmatprep.subr.mxu0 0.0
    %833 = vmatpush1.msra.mxu0 %v798
    %834 = vmatprep.subr.mxu0 0.0
    %835 = vmatpush1.msra.mxu0 %v797
    %836 = vmatprep.subr.mxu0 0.0
    %837 = vmatpush1.msra.mxu0 %v796
    %838 = vmatprep.subr.mxu0 0.0
    %839 = vmatpush1.msra.mxu0 %v795
    %840 = vmatprep.subr.mxu0 0.0
    %841 = vmatpush1.msra.mxu0 %v794
    %842 = vmatprep.subr.mxu0 0.0
    %843 = vmatpush2.msra.mxu0 0.0
    %844 = vmatprep.subr.mxu0 0.0
    %845 = vmatpush2.msra.mxu0 0.0
    %846 = vmatprep.subr.mxu0 0.0
    %847 = vmatpush2.msra.mxu0 0.0
    %848 = vmatprep.subr.mxu0 0.0
    %849 = vmatpush2.msra.mxu0 0.0
    %850 = vmatprep.subr.mxu0 0.0
    %851 = vmatpush2.msra.mxu0 0.0
    %852 = vmatprep.subr.mxu0 0.0
    %853 = vmatpush2.msra.mxu0 0.0
    %854 = vmatprep.subr.mxu0 0.0
    %855 = vmatpush2.msra.mxu0 0.0
    %856 = vmatprep.subr.mxu0 0.0
    %857 = vmatpush2.msra.mxu0 0.0
    %858 = vmatprep.subr.mxu0 0.0
    %859 = vmatpush2.msra.mxu0 0.0
    %860 = vmatprep.subr.mxu0 0.0
    %861 = vmatpush2.msra.mxu0 0.0
    %862 = vmatprep.subr.mxu0 0.0
    %863 = vmatpush2.msra.mxu0 0.0
    %864 = vmatprep.subr.mxu0 0.0
    %865 = vmatpush2.msra.mxu0 0.0
    %866 = vmatprep.subr.mxu0 0.0
    %867 = vmatpush2.msra.mxu0 0.0
    %868 = vmatprep.subr.mxu0 0.0
    %869 = vmatpush2.msra.mxu0 0.0
    %870 = vmatprep.subr.mxu0 0.0
    %871 = vmatpush2.msra.mxu0 0.0
    %872 = vmatprep.subr.mxu0 0.0
    %873 = vmatpush2.msra.mxu0 0.0
    %874 = vmatprep.mubr.f32.mxu0 0.0
    %875 = vmatmul.mubr.f32.gmra.mxu0 %v42
    %v876 = vpop.f32.mrf.mxu0
    %v877 = vadd.f32 0.0, %v876
    %v878 = vpop.f32.mrf.mxu0
    %879 = vmatprep.mubr.f32.mxu0 0.0
    %880 = vmatmul.mubr.f32.gmra.mxu0 %v43
    %v881 = vpop.f32.mrf.mxu0
    %v882 = vadd.f32 0.0, %v881
    %v883 = vpop.f32.mrf.mxu0
    %884 = vdwg.mxu0
    %v885 = vadd.f32 %v42, %v258
    %v886 = vadd.f32 %v43, %v263
    %v887 = vadd.f32 %v885, %v785
    %v888 = vadd.f32 %v886, %v790
    %890 = vset.pattern.permute.xlu0 0
    %891 = vperm.xlu0 %890, %v48
    %v892 = vpop.permute.xlu0 %891
    %895 = vset.pattern.permute.xlu0 0
    %896 = vperm.xlu0 %895, %v49
    %v897 = vpop.permute.xlu0 %896
    %v899 = vmul.f32 %v887, %v892
    %v900 = vmul.f32 %v888, %v897
    %v901 = vld [vmem:[%s10] sm:$0x1]
    %v902 = vld [vmem:[%s11] sm:$0x1]
    %903 = vadd.xlane.f32.xlu0 %v899
    %v904 = vpop.xlane.xlu0 %903
    %905 = vadd.xlane.f32.xlu0 %v900
    %v906 = vpop.xlane.xlu0 %905
    %v907 = vrcp.pop 128.0
    %v908 = vmul.f32 %v904, %v907
    %v909 = vmul.f32 %v906, %v907
    %v910 = vsub.f32 %v899, %v908
    %v911 = vsub.f32 %v900, %v909
    %v912 = vmul.f32 %v910, %v910
    %v913 = vmul.f32 %v911, %v911
    %914 = vadd.xlane.f32.xlu0 %v912
    %v915 = vpop.xlane.xlu0 %914
    %916 = vadd.xlane.f32.xlu0 %v913
    %v917 = vpop.xlane.xlu0 %916
    %v918 = vmul.f32 %v915, %v907
    %v919 = vmul.f32 %v917, %v907
    %v920 = vadd.f32 %v918, 1e-05
    %v921 = vadd.f32 %v919, 1e-05
    %v922 = vrsqrt.pop %v920
    %v923 = vrsqrt.pop %v921
    %v924 = vmul.f32 %v910, %v922
    %v925 = vmul.f32 %v911, %v923
    %v927 = vlaneseq
    %v928 = vshrl.u32 %v927, 7
    %v929 = vsub.s32 0, %v928
    %v930 = vrot.slane %v901, %v929
    %v932 = vmul.f32 %v924, %v930
    %v933 = vmul.f32 %v925, %v930
    %v935 = vlaneseq
    %v936 = vshrl.u32 %v935, 7
    %v937 = vsub.s32 0, %v936
    %v938 = vrot.slane %v902, %v937
    %v940 = vadd.f32 %v932, %v938
    %v941 = vadd.f32 %v933, %v938
    %v942 = vadd.f32 %v44, %v476
    %v943 = vadd.f32 %v45, %v481
    %v944 = vmul.f32 %v942, %v892
    %v945 = vmul.f32 %v943, %v897
    %s946 = scalar_lea.vmem %s10, 1
    %v947 = vld [vmem:[%s946] sm:$0x1]
    %s948 = scalar_lea.vmem %s11, 1
    %v949 = vld [vmem:[%s948] sm:$0x1]
    %950 = vadd.xlane.f32.xlu0 %v944
    %v951 = vpop.xlane.xlu0 %950
    %952 = vadd.xlane.f32.xlu0 %v945
    %v953 = vpop.xlane.xlu0 %952
    %v954 = vmul.f32 %v951, %v907
    %v955 = vmul.f32 %v953, %v907
    %v956 = vsub.f32 %v944, %v954
    %v957 = vsub.f32 %v945, %v955
    %v958 = vmul.f32 %v956, %v956
    %v959 = vmul.f32 %v957, %v957
    %960 = vadd.xlane.f32.xlu0 %v958
    %v961 = vpop.xlane.xlu0 %960
    %962 = vadd.xlane.f32.xlu0 %v959
    %v963 = vpop.xlane.xlu0 %962
    %v964 = vmul.f32 %v961, %v907
    %v965 = vmul.f32 %v963, %v907
    %v966 = vadd.f32 %v964, 1e-05
    %v967 = vadd.f32 %v965, 1e-05
    %v968 = vrsqrt.pop %v966
    %v969 = vrsqrt.pop %v967
    %v970 = vmul.f32 %v956, %v968
    %v971 = vmul.f32 %v957, %v969
    %v973 = vlaneseq
    %v974 = vshrl.u32 %v973, 7
    %v975 = vsub.s32 0, %v974
    %v976 = vrot.slane %v947, %v975
    %v978 = vmul.f32 %v970, %v976
    %v979 = vmul.f32 %v971, %v976
    %v981 = vlaneseq
    %v982 = vshrl.u32 %v981, 7
    %v983 = vsub.s32 0, %v982
    %v984 = vrot.slane %v949, %v983
    %v986 = vadd.f32 %v978, %v984
    %v987 = vadd.f32 %v979, %v984
    %v988 = vadd.f32 %v885, %v877
    %v989 = vadd.f32 %v886, %v882
    %991 = vset.pattern.permute.xlu0 0
    %992 = vperm.xlu0 %991, %v50
    %v993 = vpop.permute.xlu0 %992
    %996 = vset.pattern.permute.xlu0 0
    %997 = vperm.xlu0 %996, %v51
    %v998 = vpop.permute.xlu0 %997
    %v1000 = vmul.f32 %v988, %v993
    %v1001 = vmul.f32 %v989, %v998
    %s1002 = scalar_lea.vmem %s10, 2
    %v1003 = vld [vmem:[%s1002] sm:$0x1]
    %s1004 = scalar_lea.vmem %s11, 2
    %v1005 = vld [vmem:[%s1004] sm:$0x1]
    %1006 = vadd.xlane.f32.xlu0 %v1000
    %v1007 = vpop.xlane.xlu0 %1006
    %1008 = vadd.xlane.f32.xlu0 %v1001
    %v1009 = vpop.xlane.xlu0 %1008
    %v1010 = vmul.f32 %v1007, %v907
    %v1011 = vmul.f32 %v1009, %v907
    %v1012 = vsub.f32 %v1000, %v1010
    %v1013 = vsub.f32 %v1001, %v1011
    %v1014 = vmul.f32 %v1012, %v1012
    %v1015 = vmul.f32 %v1013, %v1013
    %1016 = vadd.xlane.f32.xlu0 %v1014
    %v1017 = vpop.xlane.xlu0 %1016
    %1018 = vadd.xlane.f32.xlu0 %v1015
    %v1019 = vpop.xlane.xlu0 %1018
    %v1020 = vmul.f32 %v1017, %v907
    %v1021 = vmul.f32 %v1019, %v907
    %v1022 = vadd.f32 %v1020, 1e-05
    %v1023 = vadd.f32 %v1021, 1e-05
    %v1024 = vrsqrt.pop %v1022
    %v1025 = vrsqrt.pop %v1023
    %v1026 = vmul.f32 %v1012, %v1024
    %v1027 = vmul.f32 %v1013, %v1025
    %v1029 = vlaneseq
    %v1030 = vshrl.u32 %v1029, 7
    %v1031 = vsub.s32 0, %v1030
    %v1032 = vrot.slane %v1003, %v1031
    %v1034 = vmul.f32 %v1026, %v1032
    %v1035 = vmul.f32 %v1027, %v1032
    %v1037 = vlaneseq
    %v1038 = vshrl.u32 %v1037, 7
    %v1039 = vsub.s32 0, %v1038
    %v1040 = vrot.slane %v1005, %v1039
    %v1042 = vadd.f32 %v1034, %v1040
    %v1043 = vadd.f32 %v1035, %v1040
    %v1044 = vadd.f32 %v46, %v694
    %v1045 = vadd.f32 %v47, %v699
    %v1046 = vmul.f32 %v1044, %v993
    %v1047 = vmul.f32 %v1045, %v998
    %s1048 = scalar_lea.vmem %s10, 3
    %v1049 = vld [vmem:[%s1048] sm:$0x1]
    %s1050 = scalar_lea.vmem %s11, 3
    %v1051 = vld [vmem:[%s1050] sm:$0x1]
    %1052 = vadd.xlane.f32.xlu0 %v1046
    %v1053 = vpop.xlane.xlu0 %1052
    %1054 = vadd.xlane.f32.xlu0 %v1047
    %v1055 = vpop.xlane.xlu0 %1054
    %v1056 = vmul.f32 %v1053, %v907
    %v1057 = vmul.f32 %v1055, %v907
    %v1058 = vsub.f32 %v1046, %v1056
    %v1059 = vsub.f32 %v1047, %v1057
    %v1060 = vmul.f32 %v1058, %v1058
    %v1061 = vmul.f32 %v1059, %v1059
    %1062 = vadd.xlane.f32.xlu0 %v1060
    %v1063 = vpop.xlane.xlu0 %1062
    %1064 = vadd.xlane.f32.xlu0 %v1061
    %v1065 = vpop.xlane.xlu0 %1064
    %v1066 = vmul.f32 %v1063, %v907
    %v1067 = vmul.f32 %v1065, %v907
    %v1068 = vadd.f32 %v1066, 1e-05
    %v1069 = vadd.f32 %v1067, 1e-05
    %v1070 = vrsqrt.pop %v1068
    %v1071 = vrsqrt.pop %v1069
    %v1072 = vmul.f32 %v1058, %v1070
    %v1073 = vmul.f32 %v1059, %v1071
    %v1075 = vlaneseq
    %v1076 = vshrl.u32 %v1075, 7
    %v1077 = vsub.s32 0, %v1076
    %v1078 = vrot.slane %v1049, %v1077
    %v1080 = vmul.f32 %v1072, %v1078
    %v1081 = vmul.f32 %v1073, %v1078
    %v1083 = vlaneseq
    %v1084 = vshrl.u32 %v1083, 7
    %v1085 = vsub.s32 0, %v1084
    %v1086 = vrot.slane %v1051, %v1085
    %v1088 = vadd.f32 %v1080, %v1086
    %v1089 = vadd.f32 %v1081, %v1086
    %v1090 = vadd.f32 %v940, %v986
    %v1091 = vadd.f32 %v941, %v987
    %v1092 = vmul.f32 %v1090, %v892
    %v1093 = vmul.f32 %v1091, %v897
    %v1094 = vadd.f32 %v1042, %v1088
    %v1095 = vadd.f32 %v1043, %v1089
    %v1096 = vmul.f32 %v1094, %v993
    %v1097 = vmul.f32 %v1095, %v998
    %v1098 = vadd.f32 %v1092, %v1096
    %v1099 = vadd.f32 %v1093, %v1097
    %1100 = vst [vmem:[#allocation2] sm:$0xff] %v1098
    %1101 = vst [vmem:[#allocation2 + $0x8] sm:$0xff] %v1099
    // Predicated region
    $region50: #{abxi_forward.5} parent=1 // pred_check
      _
    $region51: #{abxi_forward.5} parent=1 // pred_check_branch
      %1103 = sbr.rel (0) target = $region53
    $region52: #{abxi_forward.5} parent=1 // pred_region
      %s1105 = ssub.s32 256, 256
      %1106 = vsyncadd [#allocation3], %s1105
      %s1107 = sshll.u32 [#allocation2], 4
      %s1108 = int_to_ptr.vmem [resolvable:$true] %s1107
      %1113 = dma.vmem_to_hbm [thread:$0]  %s1108, 256, %s12, [#allocation3], 128, 128, 8
    $region53: #{abxi_forward.5} parent=1 // pred_fallthru
      _
    // Predicated region
    $region54: #{abxi_forward.5} parent=1 // pred_check
      _
    $region55: #{abxi_forward.5} parent=1 // pred_check_branch
      %1115 = sbr.rel (0) target = $region57
    $region56: #{abxi_forward.5} parent=1 // pred_region
      %1116 = dma.done [#allocation3], 256
    $region57: #{abxi_forward.5} parent=1 // pred_fallthru
      _
    %1117 = vsyncpa [#allocation3], 1

</llo_original>
